<compile_context>
chip_gen: v6e
topology: v6e:2x2x1
jax: 0.10.0
libtpu: 0.0.40
codegen_flags: <defaults>
</compile_context>

<pallas_src>
import functools

import jax
import jax.numpy as jnp
import numpy as np
from jax.experimental import pallas as pl
from jax.experimental.pallas import tpu as pltpu


def _round_up(n, m):
    return ((n + m - 1) // m) * m


def _lstm_kernel(*refs, num_layers, hidden_pad, seq_len, batch):
    # refs = (x2d, [w_ih, w_hh, b] * L, w_out, b_out, y)
    x_ref = refs[0]                                  # (T*B, DP)   bf16
    layer_refs = refs[1:1 + 3 * num_layers]
    w_out_ref = refs[1 + 3 * num_layers]             # (HP, OP)    bf16
    b_out_ref = refs[2 + 3 * num_layers]             # (1, OP)     f32
    y_ref = refs[3 + 3 * num_layers]                 # (B, OP)     f32

    T, B, H = seq_len, batch, hidden_pad

    xs = x_ref[...]                                  # current layer input (T*B, D_in) bf16
    h = None

    # Layers unrolled in Python (static, small); each layer does ONE large
    # batched MXU matmul for the full sequence, then a short latency-bound
    # recurrence carrying (h, c) as values.
    for layer in range(num_layers):
        w_ih = layer_refs[3 * layer][...]            # (D_in, 4H) bf16, cols [i|f|o|g]
        w_hh = layer_refs[3 * layer + 1][...]        # (H, 4H)    bf16, cols [i|f|o|g]
        b = layer_refs[3 * layer + 2][...]           # (1, 4H)    f32, fused b_ih+b_hh

        # Hoisted input projection for the whole sequence (one MXU matmul),
        # kept as a value -> no VMEM store/load on the recurrence's chain.
        pre = jnp.dot(xs, w_ih, preferred_element_type=jnp.float32) + b   # (T*B, 4H) f32

        h = jnp.zeros((B, H), jnp.float32)
        c = jnp.zeros((B, H), jnp.float32)
        last_layer = layer == num_layers - 1
        hs = []

        # Static unroll: T is a small compile-time constant here.
        # TODO(synk): for production T/B/H, switch to a time-chunk grid axis
        # (stream x / layer outputs HBM<->VMEM with BlockSpecs, carry (h, c)
        # in VMEM scratch, bounded unroll=4..8 fori_loop) and add a "parallel"
        # batch grid axis for v7x's 2 TensorCores, sizing chunks against its
        # 64 MiB VMEM.
        for t in range(T):
            gates = pre[t * B:(t + 1) * B, :] + jnp.dot(
                h.astype(jnp.bfloat16), w_hh, preferred_element_type=jnp.float32)
            # gate order [i, f, o, g]: one sigmoid pass, one tanh pass.
            # Every slice is 128-lane aligned (H padded to 128) -> no XLU
            # rotates on the serial chain.
            sig = jax.nn.sigmoid(gates[:, :3 * H])
            i_g = sig[:, 0 * H:1 * H]
            f_g = sig[:, 1 * H:2 * H]
            o_g = sig[:, 2 * H:3 * H]
            g_g = jnp.tanh(gates[:, 3 * H:])
            c = f_g * c + i_g * g_g
            h = o_g * jnp.tanh(c)
            if not last_layer:
                hs.append(h)                         # only needed to feed next layer
        if not last_layer:
            xs = jnp.concatenate(hs, axis=0).astype(jnp.bfloat16)   # (T*B, H)

    # final Linear on the last time-step hidden state (lane-dense padded width)
    y = jnp.dot(h.astype(jnp.bfloat16), w_out_ref[...],
                preferred_element_type=jnp.float32) + b_out_ref[...]
    y_ref[...] = y.astype(y_ref.dtype)


def _pack_gate_matrix(w, H, HP, d_in_pad, dtype):
    """PyTorch gate-stacked (4H, D_in) weight -> (d_in_pad, 4*HP) kernel layout.

    Transposed, gate blocks reordered [i,f,g,o] -> [i,f,o,g], each block and the
    input (row) dim zero-padded.  Zero padding keeps the recurrence exact.
    """
    wt = jnp.transpose(w).astype(jnp.float32)        # (D_in, 4H), blocks [i|f|g|o]
    d_in = wt.shape[0]
    blocks = (wt[:, 0:H], wt[:, H:2 * H],            # i, f
              wt[:, 3 * H:4 * H], wt[:, 2 * H:3 * H])  # o, g
    out = jnp.zeros((d_in_pad, 4 * HP), jnp.float32)
    for k, blk in enumerate(blocks):
        out = out.at[:d_in, k * HP:k * HP + H].set(blk)
    return out.astype(dtype)


def _pack_gate_bias(b_ih, b_hh, H, HP):
    b = (b_ih + b_hh).astype(jnp.float32)            # (4H,), blocks [i|f|g|o]
    blocks = (b[0:H], b[H:2 * H], b[3 * H:4 * H], b[2 * H:3 * H])  # [i,f,o,g]
    out = jnp.zeros((1, 4 * HP), jnp.float32)
    for k, blk in enumerate(blocks):
        out = out.at[0, k * HP:k * HP + H].set(blk)
    return out


def lstm_forward(x, params):
    """x: (B, T, input_size) float32, batch_first like the PyTorch module."""
    B, T, D = x.shape
    num_layers = len(params["w_ih"])
    H = params["w_hh"][0].shape[1]                   # w_hh: (4H, H)
    O = params["w_out"].shape[0]                     # w_out: (O, H)
    HP = _round_up(H, 128)                           # lane-dense hidden/gate width
    OP = _round_up(O, 128)                           # lane-dense output store
    DP = _round_up(D, 128)                           # lane-dense layer-0 features

    # time-major rows (row = t*B + b), zero-padded features, bf16 MXU operand
    x_tbd = jnp.transpose(x, (1, 0, 2)).astype(jnp.float32).reshape(T * B, D)
    x2d = jnp.zeros((T * B, DP), jnp.float32).at[:, :D].set(x_tbd).astype(jnp.bfloat16)

    inputs = [x2d]
    for l in range(num_layers):
        d_in_pad = DP if l == 0 else HP
        inputs.append(_pack_gate_matrix(params["w_ih"][l], H, HP, d_in_pad, jnp.bfloat16))
        inputs.append(_pack_gate_matrix(params["w_hh"][l], H, HP, HP, jnp.bfloat16))
        inputs.append(_pack_gate_bias(params["b_ih"][l], params["b_hh"][l], H, HP))
    w_out = jnp.zeros((HP, OP), jnp.float32).at[:H, :O].set(
        jnp.transpose(params["w_out"]).astype(jnp.float32)).astype(jnp.bfloat16)
    b_out = jnp.zeros((1, OP), jnp.float32).at[0, :O].set(
        params["b_out"].astype(jnp.float32))
    inputs.append(w_out)
    inputs.append(b_out)

    kernel = functools.partial(_lstm_kernel, num_layers=num_layers,
                               hidden_pad=HP, seq_len=T, batch=B)

    y_pad = pl.pallas_call(
        kernel,
        out_shape=jax.ShapeDtypeStruct((B, OP), jnp.float32),
        in_specs=[pl.BlockSpec(memory_space=pltpu.MemorySpace.VMEM)] * len(inputs),
        out_specs=pl.BlockSpec(memory_space=pltpu.MemorySpace.VMEM),
        compiler_params=pltpu.CompilerParams(
            # explicit headroom for scaled sizes; above v5e's 16 MiB default
            # scoped limit, within v7x's 64 MiB physical VMEM.
            vmem_limit_bytes=32 * 1024 * 1024),
    )(*inputs)
    return y_pad[:, :O]


def _reference_forward(x, params):
    """Pure-JAX reference replicating torch.nn.LSTM(batch_first) + Linear (f32)."""
    B, T, _ = x.shape
    num_layers = len(params["w_ih"])
    H = params["w_hh"][0].shape[1]
    seq = x
    for l in range(num_layers):
        w_ih, w_hh = params["w_ih"][l], params["w_hh"][l]
        b = params["b_ih"][l] + params["b_hh"][l]
        h = jnp.zeros((B, H), jnp.float32)
        c = jnp.zeros((B, H), jnp.float32)
        outs = []
        for t in range(T):
            gates = seq[:, t, :] @ w_ih.T + h @ w_hh.T + b
            i_g = jax.nn.sigmoid(gates[:, 0 * H:1 * H])
            f_g = jax.nn.sigmoid(gates[:, 1 * H:2 * H])
            g_g = jnp.tanh(gates[:, 2 * H:3 * H])
            o_g = jax.nn.sigmoid(gates[:, 3 * H:4 * H])
            c = f_g * c + i_g * g_g
            h = o_g * jnp.tanh(c)
            outs.append(h)
        seq = jnp.stack(outs, axis=1)
    return seq[:, -1, :] @ params["w_out"].T + params["b_out"]


def _init_params(key, input_size, lstm_size, lstm_layers, output_size):
    """Deterministic init matching PyTorch shapes: U(-1/sqrt(H), 1/sqrt(H))."""
    H = lstm_size
    k = 1.0 / np.sqrt(H)
    params = {"w_ih": [], "w_hh": [], "b_ih": [], "b_hh": []}
    for l in range(lstm_layers):
        d_in = input_size if l == 0 else H
        key, k1, k2, k3, k4 = jax.random.split(key, 5)
        params["w_ih"].append(jax.random.uniform(k1, (4 * H, d_in), jnp.float32, -k, k))
        params["w_hh"].append(jax.random.uniform(k2, (4 * H, H), jnp.float32, -k, k))
        params["b_ih"].append(jax.random.uniform(k3, (4 * H,), jnp.float32, -k, k))
        params["b_hh"].append(jax.random.uniform(k4, (4 * H,), jnp.float32, -k, k))
    key, k1, k2 = jax.random.split(key, 3)
    kl = 1.0 / np.sqrt(H)
    params["w_out"] = jax.random.uniform(k1, (output_size, H), jnp.float32, -kl, kl)
    params["b_out"] = jax.random.uniform(k2, (output_size,), jnp.float32, -kl, kl)
    return params


if __name__ == "__main__":
    input_size, lstm_size, lstm_layers, output_size = 32, 32, 2, 16
    B, T = 8, 8

    key = jax.random.PRNGKey(0)
    key, kp, kx = jax.random.split(key, 3)
    params = _init_params(kp, input_size, lstm_size, lstm_layers, output_size)
    x = jax.random.normal(kx, (B, T, input_size), jnp.float32)

    y = lstm_forward(x, params)
    y = jax.block_until_ready(y)

    y_ref = _reference_forward(x, params)
    # bf16 MXU operands (f32 accumulation) -> looser tolerance vs the f32 reference.
    np.testing.assert_allclose(np.asarray(y), np.asarray(y_ref), rtol=5e-2, atol=5e-2)

    print("KERNEL_OK")
</pallas_src>

<mosaic_0001>
module attributes {stable_mosaic.version = 11 : i64} {
  func.func @_lstm_kernel(%arg0: memref<64x128xbf16, #tpu.memory_space<vmem>>, %arg1: memref<128x512xbf16, #tpu.memory_space<vmem>>, %arg2: memref<128x512xbf16, #tpu.memory_space<vmem>>, %arg3: memref<1x512xf32, #tpu.memory_space<vmem>>, %arg4: memref<128x512xbf16, #tpu.memory_space<vmem>>, %arg5: memref<128x512xbf16, #tpu.memory_space<vmem>>, %arg6: memref<1x512xf32, #tpu.memory_space<vmem>>, %arg7: memref<128x128xbf16, #tpu.memory_space<vmem>>, %arg8: memref<1x128xf32, #tpu.memory_space<vmem>>, %arg9: memref<8x128xf32, #tpu.memory_space<vmem>>) attributes {dimension_semantics = [], scalar_prefetch = 0 : i64, scratch_operands = 0 : i64, tpu.core_type = #tpu.core_type<tc>} {
    %c0 = arith.constant 0 : index
    %c0_0 = arith.constant 0 : index
    %0 = vector.load %arg0[%c0, %c0_0] : memref<64x128xbf16, #tpu.memory_space<vmem>>, vector<64x128xbf16>
    %c0_1 = arith.constant 0 : index
    %c0_2 = arith.constant 0 : index
    %1 = vector.load %arg1[%c0_1, %c0_2] : memref<128x512xbf16, #tpu.memory_space<vmem>>, vector<128x512xbf16>
    %c0_3 = arith.constant 0 : index
    %c0_4 = arith.constant 0 : index
    %2 = vector.load %arg2[%c0_3, %c0_4] : memref<128x512xbf16, #tpu.memory_space<vmem>>, vector<128x512xbf16>
    %c0_5 = arith.constant 0 : index
    %c0_6 = arith.constant 0 : index
    %3 = vector.load %arg3[%c0_5, %c0_6] : memref<1x512xf32, #tpu.memory_space<vmem>>, vector<1x512xf32>
    %cst = arith.constant dense<0.000000e+00> : vector<64x512xf32>
    %4 = tpu.matmul %0, %1, %cst {dimension_numbers = #tpu.dot_dimension_numbers<[1], [0], [0], [1], [0, 0, 1, 1], [], []>} : vector<64x128xbf16>, vector<128x512xbf16>, vector<64x512xf32> -> vector<64x512xf32>
    %5 = vector.broadcast %3 : vector<1x512xf32> to vector<64x512xf32>
    %6 = arith.addf %4, %5 : vector<64x512xf32>
    %cst_7 = arith.constant 0.000000e+00 : f32
    %7 = vector.broadcast %cst_7 : f32 to vector<8x128xf32>
    %cst_8 = arith.constant 0.000000e+00 : f32
    %8 = vector.broadcast %cst_8 : f32 to vector<8x128xf32>
    %9 = vector.extract_strided_slice %6 {offsets = [0, 0], sizes = [8, 512], strides = [1, 1]} : vector<64x512xf32> to vector<8x512xf32>
    %10 = arith.truncf %7 : vector<8x128xf32> to vector<8x128xbf16>
    %cst_9 = arith.constant dense<0.000000e+00> : vector<8x512xf32>
    %11 = tpu.matmul %10, %2, %cst_9 {dimension_numbers = #tpu.dot_dimension_numbers<[1], [0], [0], [1], [0, 0, 1, 1], [], []>} : vector<8x128xbf16>, vector<128x512xbf16>, vector<8x512xf32> -> vector<8x512xf32>
    %12 = arith.addf %9, %11 : vector<8x512xf32>
    %13 = vector.extract_strided_slice %12 {offsets = [0, 0], sizes = [8, 384], strides = [1, 1]} : vector<8x512xf32> to vector<8x384xf32>
    %14 = arith.negf %13 : vector<8x384xf32>
    %15 = math.exp %14 : vector<8x384xf32>
    %cst_10 = arith.constant 1.000000e+00 : f32
    %16 = vector.broadcast %cst_10 : f32 to vector<8x384xf32>
    %17 = arith.addf %16, %15 : vector<8x384xf32>
    %18 = arith.divf %16, %17 : vector<8x384xf32>
    %19 = vector.extract_strided_slice %18 {offsets = [0, 0], sizes = [8, 128], strides = [1, 1]} : vector<8x384xf32> to vector<8x128xf32>
    %20 = vector.extract_strided_slice %18 {offsets = [0, 128], sizes = [8, 128], strides = [1, 1]} : vector<8x384xf32> to vector<8x128xf32>
    %21 = vector.extract_strided_slice %18 {offsets = [0, 256], sizes = [8, 128], strides = [1, 1]} : vector<8x384xf32> to vector<8x128xf32>
    %22 = vector.extract_strided_slice %12 {offsets = [0, 384], sizes = [8, 128], strides = [1, 1]} : vector<8x512xf32> to vector<8x128xf32>
    %23 = math.tanh %22 : vector<8x128xf32>
    %24 = arith.mulf %20, %8 : vector<8x128xf32>
    %25 = arith.mulf %19, %23 : vector<8x128xf32>
    %26 = arith.addf %24, %25 : vector<8x128xf32>
    %27 = math.tanh %26 : vector<8x128xf32>
    %28 = arith.mulf %21, %27 : vector<8x128xf32>
    %29 = vector.extract_strided_slice %6 {offsets = [8, 0], sizes = [8, 512], strides = [1, 1]} : vector<64x512xf32> to vector<8x512xf32>
    %30 = arith.truncf %28 : vector<8x128xf32> to vector<8x128xbf16>
    %cst_11 = arith.constant dense<0.000000e+00> : vector<8x512xf32>
    %31 = tpu.matmul %30, %2, %cst_11 {dimension_numbers = #tpu.dot_dimension_numbers<[1], [0], [0], [1], [0, 0, 1, 1], [], []>} : vector<8x128xbf16>, vector<128x512xbf16>, vector<8x512xf32> -> vector<8x512xf32>
    %32 = arith.addf %29, %31 : vector<8x512xf32>
    %33 = vector.extract_strided_slice %32 {offsets = [0, 0], sizes = [8, 384], strides = [1, 1]} : vector<8x512xf32> to vector<8x384xf32>
    %34 = arith.negf %33 : vector<8x384xf32>
    %35 = math.exp %34 : vector<8x384xf32>
    %cst_12 = arith.constant 1.000000e+00 : f32
    %36 = vector.broadcast %cst_12 : f32 to vector<8x384xf32>
    %37 = arith.addf %36, %35 : vector<8x384xf32>
    %38 = arith.divf %36, %37 : vector<8x384xf32>
    %39 = vector.extract_strided_slice %38 {offsets = [0, 0], sizes = [8, 128], strides = [1, 1]} : vector<8x384xf32> to vector<8x128xf32>
    %40 = vector.extract_strided_slice %38 {offsets = [0, 128], sizes = [8, 128], strides = [1, 1]} : vector<8x384xf32> to vector<8x128xf32>
    %41 = vector.extract_strided_slice %38 {offsets = [0, 256], sizes = [8, 128], strides = [1, 1]} : vector<8x384xf32> to vector<8x128xf32>
    %42 = vector.extract_strided_slice %32 {offsets = [0, 384], sizes = [8, 128], strides = [1, 1]} : vector<8x512xf32> to vector<8x128xf32>
    %43 = math.tanh %42 : vector<8x128xf32>
    %44 = arith.mulf %40, %26 : vector<8x128xf32>
    %45 = arith.mulf %39, %43 : vector<8x128xf32>
    %46 = arith.addf %44, %45 : vector<8x128xf32>
    %47 = math.tanh %46 : vector<8x128xf32>
    %48 = arith.mulf %41, %47 : vector<8x128xf32>
    %49 = vector.extract_strided_slice %6 {offsets = [16, 0], sizes = [8, 512], strides = [1, 1]} : vector<64x512xf32> to vector<8x512xf32>
    %50 = arith.truncf %48 : vector<8x128xf32> to vector<8x128xbf16>
    %cst_13 = arith.constant dense<0.000000e+00> : vector<8x512xf32>
    %51 = tpu.matmul %50, %2, %cst_13 {dimension_numbers = #tpu.dot_dimension_numbers<[1], [0], [0], [1], [0, 0, 1, 1], [], []>} : vector<8x128xbf16>, vector<128x512xbf16>, vector<8x512xf32> -> vector<8x512xf32>
    %52 = arith.addf %49, %51 : vector<8x512xf32>
    %53 = vector.extract_strided_slice %52 {offsets = [0, 0], sizes = [8, 384], strides = [1, 1]} : vector<8x512xf32> to vector<8x384xf32>
    %54 = arith.negf %53 : vector<8x384xf32>
    %55 = math.exp %54 : vector<8x384xf32>
    %cst_14 = arith.constant 1.000000e+00 : f32
    %56 = vector.broadcast %cst_14 : f32 to vector<8x384xf32>
    %57 = arith.addf %56, %55 : vector<8x384xf32>
    %58 = arith.divf %56, %57 : vector<8x384xf32>
    %59 = vector.extract_strided_slice %58 {offsets = [0, 0], sizes = [8, 128], strides = [1, 1]} : vector<8x384xf32> to vector<8x128xf32>
    %60 = vector.extract_strided_slice %58 {offsets = [0, 128], sizes = [8, 128], strides = [1, 1]} : vector<8x384xf32> to vector<8x128xf32>
    %61 = vector.extract_strided_slice %58 {offsets = [0, 256], sizes = [8, 128], strides = [1, 1]} : vector<8x384xf32> to vector<8x128xf32>
    %62 = vector.extract_strided_slice %52 {offsets = [0, 384], sizes = [8, 128], strides = [1, 1]} : vector<8x512xf32> to vector<8x128xf32>
    %63 = math.tanh %62 : vector<8x128xf32>
    %64 = arith.mulf %60, %46 : vector<8x128xf32>
    %65 = arith.mulf %59, %63 : vector<8x128xf32>
    %66 = arith.addf %64, %65 : vector<8x128xf32>
    %67 = math.tanh %66 : vector<8x128xf32>
    %68 = arith.mulf %61, %67 : vector<8x128xf32>
    %69 = vector.extract_strided_slice %6 {offsets = [24, 0], sizes = [8, 512], strides = [1, 1]} : vector<64x512xf32> to vector<8x512xf32>
    %70 = arith.truncf %68 : vector<8x128xf32> to vector<8x128xbf16>
    %cst_15 = arith.constant dense<0.000000e+00> : vector<8x512xf32>
    %71 = tpu.matmul %70, %2, %cst_15 {dimension_numbers = #tpu.dot_dimension_numbers<[1], [0], [0], [1], [0, 0, 1, 1], [], []>} : vector<8x128xbf16>, vector<128x512xbf16>, vector<8x512xf32> -> vector<8x512xf32>
    %72 = arith.addf %69, %71 : vector<8x512xf32>
    %73 = vector.extract_strided_slice %72 {offsets = [0, 0], sizes = [8, 384], strides = [1, 1]} : vector<8x512xf32> to vector<8x384xf32>
    %74 = arith.negf %73 : vector<8x384xf32>
    %75 = math.exp %74 : vector<8x384xf32>
    %cst_16 = arith.constant 1.000000e+00 : f32
    %76 = vector.broadcast %cst_16 : f32 to vector<8x384xf32>
    %77 = arith.addf %76, %75 : vector<8x384xf32>
    %78 = arith.divf %76, %77 : vector<8x384xf32>
    %79 = vector.extract_strided_slice %78 {offsets = [0, 0], sizes = [8, 128], strides = [1, 1]} : vector<8x384xf32> to vector<8x128xf32>
    %80 = vector.extract_strided_slice %78 {offsets = [0, 128], sizes = [8, 128], strides = [1, 1]} : vector<8x384xf32> to vector<8x128xf32>
    %81 = vector.extract_strided_slice %78 {offsets = [0, 256], sizes = [8, 128], strides = [1, 1]} : vector<8x384xf32> to vector<8x128xf32>
    %82 = vector.extract_strided_slice %72 {offsets = [0, 384], sizes = [8, 128], strides = [1, 1]} : vector<8x512xf32> to vector<8x128xf32>
    %83 = math.tanh %82 : vector<8x128xf32>
    %84 = arith.mulf %80, %66 : vector<8x128xf32>
    %85 = arith.mulf %79, %83 : vector<8x128xf32>
    %86 = arith.addf %84, %85 : vector<8x128xf32>
    %87 = math.tanh %86 : vector<8x128xf32>
    %88 = arith.mulf %81, %87 : vector<8x128xf32>
    %89 = vector.extract_strided_slice %6 {offsets = [32, 0], sizes = [8, 512], strides = [1, 1]} : vector<64x512xf32> to vector<8x512xf32>
    %90 = arith.truncf %88 : vector<8x128xf32> to vector<8x128xbf16>
    %cst_17 = arith.constant dense<0.000000e+00> : vector<8x512xf32>
    %91 = tpu.matmul %90, %2, %cst_17 {dimension_numbers = #tpu.dot_dimension_numbers<[1], [0], [0], [1], [0, 0, 1, 1], [], []>} : vector<8x128xbf16>, vector<128x512xbf16>, vector<8x512xf32> -> vector<8x512xf32>
    %92 = arith.addf %89, %91 : vector<8x512xf32>
    %93 = vector.extract_strided_slice %92 {offsets = [0, 0], sizes = [8, 384], strides = [1, 1]} : vector<8x512xf32> to vector<8x384xf32>
    %94 = arith.negf %93 : vector<8x384xf32>
    %95 = math.exp %94 : vector<8x384xf32>
    %cst_18 = arith.constant 1.000000e+00 : f32
    %96 = vector.broadcast %cst_18 : f32 to vector<8x384xf32>
    %97 = arith.addf %96, %95 : vector<8x384xf32>
    %98 = arith.divf %96, %97 : vector<8x384xf32>
    %99 = vector.extract_strided_slice %98 {offsets = [0, 0], sizes = [8, 128], strides = [1, 1]} : vector<8x384xf32> to vector<8x128xf32>
    %100 = vector.extract_strided_slice %98 {offsets = [0, 128], sizes = [8, 128], strides = [1, 1]} : vector<8x384xf32> to vector<8x128xf32>
    %101 = vector.extract_strided_slice %98 {offsets = [0, 256], sizes = [8, 128], strides = [1, 1]} : vector<8x384xf32> to vector<8x128xf32>
    %102 = vector.extract_strided_slice %92 {offsets = [0, 384], sizes = [8, 128], strides = [1, 1]} : vector<8x512xf32> to vector<8x128xf32>
    %103 = math.tanh %102 : vector<8x128xf32>
    %104 = arith.mulf %100, %86 : vector<8x128xf32>
    %105 = arith.mulf %99, %103 : vector<8x128xf32>
    %106 = arith.addf %104, %105 : vector<8x128xf32>
    %107 = math.tanh %106 : vector<8x128xf32>
    %108 = arith.mulf %101, %107 : vector<8x128xf32>
    %109 = vector.extract_strided_slice %6 {offsets = [40, 0], sizes = [8, 512], strides = [1, 1]} : vector<64x512xf32> to vector<8x512xf32>
    %110 = arith.truncf %108 : vector<8x128xf32> to vector<8x128xbf16>
    %cst_19 = arith.constant dense<0.000000e+00> : vector<8x512xf32>
    %111 = tpu.matmul %110, %2, %cst_19 {dimension_numbers = #tpu.dot_dimension_numbers<[1], [0], [0], [1], [0, 0, 1, 1], [], []>} : vector<8x128xbf16>, vector<128x512xbf16>, vector<8x512xf32> -> vector<8x512xf32>
    %112 = arith.addf %109, %111 : vector<8x512xf32>
    %113 = vector.extract_strided_slice %112 {offsets = [0, 0], sizes = [8, 384], strides = [1, 1]} : vector<8x512xf32> to vector<8x384xf32>
    %114 = arith.negf %113 : vector<8x384xf32>
    %115 = math.exp %114 : vector<8x384xf32>
    %cst_20 = arith.constant 1.000000e+00 : f32
    %116 = vector.broadcast %cst_20 : f32 to vector<8x384xf32>
    %117 = arith.addf %116, %115 : vector<8x384xf32>
    %118 = arith.divf %116, %117 : vector<8x384xf32>
    %119 = vector.extract_strided_slice %118 {offsets = [0, 0], sizes = [8, 128], strides = [1, 1]} : vector<8x384xf32> to vector<8x128xf32>
    %120 = vector.extract_strided_slice %118 {offsets = [0, 128], sizes = [8, 128], strides = [1, 1]} : vector<8x384xf32> to vector<8x128xf32>
    %121 = vector.extract_strided_slice %118 {offsets = [0, 256], sizes = [8, 128], strides = [1, 1]} : vector<8x384xf32> to vector<8x128xf32>
    %122 = vector.extract_strided_slice %112 {offsets = [0, 384], sizes = [8, 128], strides = [1, 1]} : vector<8x512xf32> to vector<8x128xf32>
    %123 = math.tanh %122 : vector<8x128xf32>
    %124 = arith.mulf %120, %106 : vector<8x128xf32>
    %125 = arith.mulf %119, %123 : vector<8x128xf32>
    %126 = arith.addf %124, %125 : vector<8x128xf32>
    %127 = math.tanh %126 : vector<8x128xf32>
    %128 = arith.mulf %121, %127 : vector<8x128xf32>
    %129 = vector.extract_strided_slice %6 {offsets = [48, 0], sizes = [8, 512], strides = [1, 1]} : vector<64x512xf32> to vector<8x512xf32>
    %130 = arith.truncf %128 : vector<8x128xf32> to vector<8x128xbf16>
    %cst_21 = arith.constant dense<0.000000e+00> : vector<8x512xf32>
    %131 = tpu.matmul %130, %2, %cst_21 {dimension_numbers = #tpu.dot_dimension_numbers<[1], [0], [0], [1], [0, 0, 1, 1], [], []>} : vector<8x128xbf16>, vector<128x512xbf16>, vector<8x512xf32> -> vector<8x512xf32>
    %132 = arith.addf %129, %131 : vector<8x512xf32>
    %133 = vector.extract_strided_slice %132 {offsets = [0, 0], sizes = [8, 384], strides = [1, 1]} : vector<8x512xf32> to vector<8x384xf32>
    %134 = arith.negf %133 : vector<8x384xf32>
    %135 = math.exp %134 : vector<8x384xf32>
    %cst_22 = arith.constant 1.000000e+00 : f32
    %136 = vector.broadcast %cst_22 : f32 to vector<8x384xf32>
    %137 = arith.addf %136, %135 : vector<8x384xf32>
    %138 = arith.divf %136, %137 : vector<8x384xf32>
    %139 = vector.extract_strided_slice %138 {offsets = [0, 0], sizes = [8, 128], strides = [1, 1]} : vector<8x384xf32> to vector<8x128xf32>
    %140 = vector.extract_strided_slice %138 {offsets = [0, 128], sizes = [8, 128], strides = [1, 1]} : vector<8x384xf32> to vector<8x128xf32>
    %141 = vector.extract_strided_slice %138 {offsets = [0, 256], sizes = [8, 128], strides = [1, 1]} : vector<8x384xf32> to vector<8x128xf32>
    %142 = vector.extract_strided_slice %132 {offsets = [0, 384], sizes = [8, 128], strides = [1, 1]} : vector<8x512xf32> to vector<8x128xf32>
    %143 = math.tanh %142 : vector<8x128xf32>
    %144 = arith.mulf %140, %126 : vector<8x128xf32>
    %145 = arith.mulf %139, %143 : vector<8x128xf32>
    %146 = arith.addf %144, %145 : vector<8x128xf32>
    %147 = math.tanh %146 : vector<8x128xf32>
    %148 = arith.mulf %141, %147 : vector<8x128xf32>
    %149 = vector.extract_strided_slice %6 {offsets = [56, 0], sizes = [8, 512], strides = [1, 1]} : vector<64x512xf32> to vector<8x512xf32>
    %150 = arith.truncf %148 : vector<8x128xf32> to vector<8x128xbf16>
    %cst_23 = arith.constant dense<0.000000e+00> : vector<8x512xf32>
    %151 = tpu.matmul %150, %2, %cst_23 {dimension_numbers = #tpu.dot_dimension_numbers<[1], [0], [0], [1], [0, 0, 1, 1], [], []>} : vector<8x128xbf16>, vector<128x512xbf16>, vector<8x512xf32> -> vector<8x512xf32>
    %152 = arith.addf %149, %151 : vector<8x512xf32>
    %153 = vector.extract_strided_slice %152 {offsets = [0, 0], sizes = [8, 384], strides = [1, 1]} : vector<8x512xf32> to vector<8x384xf32>
    %154 = arith.negf %153 : vector<8x384xf32>
    %155 = math.exp %154 : vector<8x384xf32>
    %cst_24 = arith.constant 1.000000e+00 : f32
    %156 = vector.broadcast %cst_24 : f32 to vector<8x384xf32>
    %157 = arith.addf %156, %155 : vector<8x384xf32>
    %158 = arith.divf %156, %157 : vector<8x384xf32>
    %159 = vector.extract_strided_slice %158 {offsets = [0, 0], sizes = [8, 128], strides = [1, 1]} : vector<8x384xf32> to vector<8x128xf32>
    %160 = vector.extract_strided_slice %158 {offsets = [0, 128], sizes = [8, 128], strides = [1, 1]} : vector<8x384xf32> to vector<8x128xf32>
    %161 = vector.extract_strided_slice %158 {offsets = [0, 256], sizes = [8, 128], strides = [1, 1]} : vector<8x384xf32> to vector<8x128xf32>
    %162 = vector.extract_strided_slice %152 {offsets = [0, 384], sizes = [8, 128], strides = [1, 1]} : vector<8x512xf32> to vector<8x128xf32>
    %163 = math.tanh %162 : vector<8x128xf32>
    %164 = arith.mulf %160, %146 : vector<8x128xf32>
    %165 = arith.mulf %159, %163 : vector<8x128xf32>
    %166 = arith.addf %164, %165 : vector<8x128xf32>
    %167 = math.tanh %166 : vector<8x128xf32>
    %168 = arith.mulf %161, %167 : vector<8x128xf32>
    %169 = tpu.concatenate %28, %48, %68, %88, %108, %128, %148, %168 in 0 : vector<8x128xf32>, vector<8x128xf32>, vector<8x128xf32>, vector<8x128xf32>, vector<8x128xf32>, vector<8x128xf32>, vector<8x128xf32>, vector<8x128xf32> -> vector<64x128xf32>
    %170 = arith.truncf %169 : vector<64x128xf32> to vector<64x128xbf16>
    %c0_25 = arith.constant 0 : index
    %c0_26 = arith.constant 0 : index
    %171 = vector.load %arg4[%c0_25, %c0_26] : memref<128x512xbf16, #tpu.memory_space<vmem>>, vector<128x512xbf16>
    %c0_27 = arith.constant 0 : index
    %c0_28 = arith.constant 0 : index
    %172 = vector.load %arg5[%c0_27, %c0_28] : memref<128x512xbf16, #tpu.memory_space<vmem>>, vector<128x512xbf16>
    %c0_29 = arith.constant 0 : index
    %c0_30 = arith.constant 0 : index
    %173 = vector.load %arg6[%c0_29, %c0_30] : memref<1x512xf32, #tpu.memory_space<vmem>>, vector<1x512xf32>
    %cst_31 = arith.constant dense<0.000000e+00> : vector<64x512xf32>
    %174 = tpu.matmul %170, %171, %cst_31 {dimension_numbers = #tpu.dot_dimension_numbers<[1], [0], [0], [1], [0, 0, 1, 1], [], []>} : vector<64x128xbf16>, vector<128x512xbf16>, vector<64x512xf32> -> vector<64x512xf32>
    %175 = vector.broadcast %173 : vector<1x512xf32> to vector<64x512xf32>
    %176 = arith.addf %174, %175 : vector<64x512xf32>
    %cst_32 = arith.constant 0.000000e+00 : f32
    %177 = vector.broadcast %cst_32 : f32 to vector<8x128xf32>
    %cst_33 = arith.constant 0.000000e+00 : f32
    %178 = vector.broadcast %cst_33 : f32 to vector<8x128xf32>
    %179 = vector.extract_strided_slice %176 {offsets = [0, 0], sizes = [8, 512], strides = [1, 1]} : vector<64x512xf32> to vector<8x512xf32>
    %180 = arith.truncf %177 : vector<8x128xf32> to vector<8x128xbf16>
    %cst_34 = arith.constant dense<0.000000e+00> : vector<8x512xf32>
    %181 = tpu.matmul %180, %172, %cst_34 {dimension_numbers = #tpu.dot_dimension_numbers<[1], [0], [0], [1], [0, 0, 1, 1], [], []>} : vector<8x128xbf16>, vector<128x512xbf16>, vector<8x512xf32> -> vector<8x512xf32>
    %182 = arith.addf %179, %181 : vector<8x512xf32>
    %183 = vector.extract_strided_slice %182 {offsets = [0, 0], sizes = [8, 384], strides = [1, 1]} : vector<8x512xf32> to vector<8x384xf32>
    %184 = arith.negf %183 : vector<8x384xf32>
    %185 = math.exp %184 : vector<8x384xf32>
    %cst_35 = arith.constant 1.000000e+00 : f32
    %186 = vector.broadcast %cst_35 : f32 to vector<8x384xf32>
    %187 = arith.addf %186, %185 : vector<8x384xf32>
    %188 = arith.divf %186, %187 : vector<8x384xf32>
    %189 = vector.extract_strided_slice %188 {offsets = [0, 0], sizes = [8, 128], strides = [1, 1]} : vector<8x384xf32> to vector<8x128xf32>
    %190 = vector.extract_strided_slice %188 {offsets = [0, 128], sizes = [8, 128], strides = [1, 1]} : vector<8x384xf32> to vector<8x128xf32>
    %191 = vector.extract_strided_slice %188 {offsets = [0, 256], sizes = [8, 128], strides = [1, 1]} : vector<8x384xf32> to vector<8x128xf32>
    %192 = vector.extract_strided_slice %182 {offsets = [0, 384], sizes = [8, 128], strides = [1, 1]} : vector<8x512xf32> to vector<8x128xf32>
    %193 = math.tanh %192 : vector<8x128xf32>
    %194 = arith.mulf %190, %178 : vector<8x128xf32>
    %195 = arith.mulf %189, %193 : vector<8x128xf32>
    %196 = arith.addf %194, %195 : vector<8x128xf32>
    %197 = math.tanh %196 : vector<8x128xf32>
    %198 = arith.mulf %191, %197 : vector<8x128xf32>
    %199 = vector.extract_strided_slice %176 {offsets = [8, 0], sizes = [8, 512], strides = [1, 1]} : vector<64x512xf32> to vector<8x512xf32>
    %200 = arith.truncf %198 : vector<8x128xf32> to vector<8x128xbf16>
    %cst_36 = arith.constant dense<0.000000e+00> : vector<8x512xf32>
    %201 = tpu.matmul %200, %172, %cst_36 {dimension_numbers = #tpu.dot_dimension_numbers<[1], [0], [0], [1], [0, 0, 1, 1], [], []>} : vector<8x128xbf16>, vector<128x512xbf16>, vector<8x512xf32> -> vector<8x512xf32>
    %202 = arith.addf %199, %201 : vector<8x512xf32>
    %203 = vector.extract_strided_slice %202 {offsets = [0, 0], sizes = [8, 384], strides = [1, 1]} : vector<8x512xf32> to vector<8x384xf32>
    %204 = arith.negf %203 : vector<8x384xf32>
    %205 = math.exp %204 : vector<8x384xf32>
    %cst_37 = arith.constant 1.000000e+00 : f32
    %206 = vector.broadcast %cst_37 : f32 to vector<8x384xf32>
    %207 = arith.addf %206, %205 : vector<8x384xf32>
    %208 = arith.divf %206, %207 : vector<8x384xf32>
    %209 = vector.extract_strided_slice %208 {offsets = [0, 0], sizes = [8, 128], strides = [1, 1]} : vector<8x384xf32> to vector<8x128xf32>
    %210 = vector.extract_strided_slice %208 {offsets = [0, 128], sizes = [8, 128], strides = [1, 1]} : vector<8x384xf32> to vector<8x128xf32>
    %211 = vector.extract_strided_slice %208 {offsets = [0, 256], sizes = [8, 128], strides = [1, 1]} : vector<8x384xf32> to vector<8x128xf32>
    %212 = vector.extract_strided_slice %202 {offsets = [0, 384], sizes = [8, 128], strides = [1, 1]} : vector<8x512xf32> to vector<8x128xf32>
    %213 = math.tanh %212 : vector<8x128xf32>
    %214 = arith.mulf %210, %196 : vector<8x128xf32>
    %215 = arith.mulf %209, %213 : vector<8x128xf32>
    %216 = arith.addf %214, %215 : vector<8x128xf32>
    %217 = math.tanh %216 : vector<8x128xf32>
    %218 = arith.mulf %211, %217 : vector<8x128xf32>
    %219 = vector.extract_strided_slice %176 {offsets = [16, 0], sizes = [8, 512], strides = [1, 1]} : vector<64x512xf32> to vector<8x512xf32>
    %220 = arith.truncf %218 : vector<8x128xf32> to vector<8x128xbf16>
    %cst_38 = arith.constant dense<0.000000e+00> : vector<8x512xf32>
    %221 = tpu.matmul %220, %172, %cst_38 {dimension_numbers = #tpu.dot_dimension_numbers<[1], [0], [0], [1], [0, 0, 1, 1], [], []>} : vector<8x128xbf16>, vector<128x512xbf16>, vector<8x512xf32> -> vector<8x512xf32>
    %222 = arith.addf %219, %221 : vector<8x512xf32>
    %223 = vector.extract_strided_slice %222 {offsets = [0, 0], sizes = [8, 384], strides = [1, 1]} : vector<8x512xf32> to vector<8x384xf32>
    %224 = arith.negf %223 : vector<8x384xf32>
    %225 = math.exp %224 : vector<8x384xf32>
    %cst_39 = arith.constant 1.000000e+00 : f32
    %226 = vector.broadcast %cst_39 : f32 to vector<8x384xf32>
    %227 = arith.addf %226, %225 : vector<8x384xf32>
    %228 = arith.divf %226, %227 : vector<8x384xf32>
    %229 = vector.extract_strided_slice %228 {offsets = [0, 0], sizes = [8, 128], strides = [1, 1]} : vector<8x384xf32> to vector<8x128xf32>
    %230 = vector.extract_strided_slice %228 {offsets = [0, 128], sizes = [8, 128], strides = [1, 1]} : vector<8x384xf32> to vector<8x128xf32>
    %231 = vector.extract_strided_slice %228 {offsets = [0, 256], sizes = [8, 128], strides = [1, 1]} : vector<8x384xf32> to vector<8x128xf32>
    %232 = vector.extract_strided_slice %222 {offsets = [0, 384], sizes = [8, 128], strides = [1, 1]} : vector<8x512xf32> to vector<8x128xf32>
    %233 = math.tanh %232 : vector<8x128xf32>
    %234 = arith.mulf %230, %216 : vector<8x128xf32>
    %235 = arith.mulf %229, %233 : vector<8x128xf32>
    %236 = arith.addf %234, %235 : vector<8x128xf32>
    %237 = math.tanh %236 : vector<8x128xf32>
    %238 = arith.mulf %231, %237 : vector<8x128xf32>
    %239 = vector.extract_strided_slice %176 {offsets = [24, 0], sizes = [8, 512], strides = [1, 1]} : vector<64x512xf32> to vector<8x512xf32>
    %240 = arith.truncf %238 : vector<8x128xf32> to vector<8x128xbf16>
    %cst_40 = arith.constant dense<0.000000e+00> : vector<8x512xf32>
    %241 = tpu.matmul %240, %172, %cst_40 {dimension_numbers = #tpu.dot_dimension_numbers<[1], [0], [0], [1], [0, 0, 1, 1], [], []>} : vector<8x128xbf16>, vector<128x512xbf16>, vector<8x512xf32> -> vector<8x512xf32>
    %242 = arith.addf %239, %241 : vector<8x512xf32>
    %243 = vector.extract_strided_slice %242 {offsets = [0, 0], sizes = [8, 384], strides = [1, 1]} : vector<8x512xf32> to vector<8x384xf32>
    %244 = arith.negf %243 : vector<8x384xf32>
    %245 = math.exp %244 : vector<8x384xf32>
    %cst_41 = arith.constant 1.000000e+00 : f32
    %246 = vector.broadcast %cst_41 : f32 to vector<8x384xf32>
    %247 = arith.addf %246, %245 : vector<8x384xf32>
    %248 = arith.divf %246, %247 : vector<8x384xf32>
    %249 = vector.extract_strided_slice %248 {offsets = [0, 0], sizes = [8, 128], strides = [1, 1]} : vector<8x384xf32> to vector<8x128xf32>
    %250 = vector.extract_strided_slice %248 {offsets = [0, 128], sizes = [8, 128], strides = [1, 1]} : vector<8x384xf32> to vector<8x128xf32>
    %251 = vector.extract_strided_slice %248 {offsets = [0, 256], sizes = [8, 128], strides = [1, 1]} : vector<8x384xf32> to vector<8x128xf32>
    %252 = vector.extract_strided_slice %242 {offsets = [0, 384], sizes = [8, 128], strides = [1, 1]} : vector<8x512xf32> to vector<8x128xf32>
    %253 = math.tanh %252 : vector<8x128xf32>
    %254 = arith.mulf %250, %236 : vector<8x128xf32>
    %255 = arith.mulf %249, %253 : vector<8x128xf32>
    %256 = arith.addf %254, %255 : vector<8x128xf32>
    %257 = math.tanh %256 : vector<8x128xf32>
    %258 = arith.mulf %251, %257 : vector<8x128xf32>
    %259 = vector.extract_strided_slice %176 {offsets = [32, 0], sizes = [8, 512], strides = [1, 1]} : vector<64x512xf32> to vector<8x512xf32>
    %260 = arith.truncf %258 : vector<8x128xf32> to vector<8x128xbf16>
    %cst_42 = arith.constant dense<0.000000e+00> : vector<8x512xf32>
    %261 = tpu.matmul %260, %172, %cst_42 {dimension_numbers = #tpu.dot_dimension_numbers<[1], [0], [0], [1], [0, 0, 1, 1], [], []>} : vector<8x128xbf16>, vector<128x512xbf16>, vector<8x512xf32> -> vector<8x512xf32>
    %262 = arith.addf %259, %261 : vector<8x512xf32>
    %263 = vector.extract_strided_slice %262 {offsets = [0, 0], sizes = [8, 384], strides = [1, 1]} : vector<8x512xf32> to vector<8x384xf32>
    %264 = arith.negf %263 : vector<8x384xf32>
    %265 = math.exp %264 : vector<8x384xf32>
    %cst_43 = arith.constant 1.000000e+00 : f32
    %266 = vector.broadcast %cst_43 : f32 to vector<8x384xf32>
    %267 = arith.addf %266, %265 : vector<8x384xf32>
    %268 = arith.divf %266, %267 : vector<8x384xf32>
    %269 = vector.extract_strided_slice %268 {offsets = [0, 0], sizes = [8, 128], strides = [1, 1]} : vector<8x384xf32> to vector<8x128xf32>
    %270 = vector.extract_strided_slice %268 {offsets = [0, 128], sizes = [8, 128], strides = [1, 1]} : vector<8x384xf32> to vector<8x128xf32>
    %271 = vector.extract_strided_slice %268 {offsets = [0, 256], sizes = [8, 128], strides = [1, 1]} : vector<8x384xf32> to vector<8x128xf32>
    %272 = vector.extract_strided_slice %262 {offsets = [0, 384], sizes = [8, 128], strides = [1, 1]} : vector<8x512xf32> to vector<8x128xf32>
    %273 = math.tanh %272 : vector<8x128xf32>
    %274 = arith.mulf %270, %256 : vector<8x128xf32>
    %275 = arith.mulf %269, %273 : vector<8x128xf32>
    %276 = arith.addf %274, %275 : vector<8x128xf32>
    %277 = math.tanh %276 : vector<8x128xf32>
    %278 = arith.mulf %271, %277 : vector<8x128xf32>
    %279 = vector.extract_strided_slice %176 {offsets = [40, 0], sizes = [8, 512], strides = [1, 1]} : vector<64x512xf32> to vector<8x512xf32>
    %280 = arith.truncf %278 : vector<8x128xf32> to vector<8x128xbf16>
    %cst_44 = arith.constant dense<0.000000e+00> : vector<8x512xf32>
    %281 = tpu.matmul %280, %172, %cst_44 {dimension_numbers = #tpu.dot_dimension_numbers<[1], [0], [0], [1], [0, 0, 1, 1], [], []>} : vector<8x128xbf16>, vector<128x512xbf16>, vector<8x512xf32> -> vector<8x512xf32>
    %282 = arith.addf %279, %281 : vector<8x512xf32>
    %283 = vector.extract_strided_slice %282 {offsets = [0, 0], sizes = [8, 384], strides = [1, 1]} : vector<8x512xf32> to vector<8x384xf32>
    %284 = arith.negf %283 : vector<8x384xf32>
    %285 = math.exp %284 : vector<8x384xf32>
    %cst_45 = arith.constant 1.000000e+00 : f32
    %286 = vector.broadcast %cst_45 : f32 to vector<8x384xf32>
    %287 = arith.addf %286, %285 : vector<8x384xf32>
    %288 = arith.divf %286, %287 : vector<8x384xf32>
    %289 = vector.extract_strided_slice %288 {offsets = [0, 0], sizes = [8, 128], strides = [1, 1]} : vector<8x384xf32> to vector<8x128xf32>
    %290 = vector.extract_strided_slice %288 {offsets = [0, 128], sizes = [8, 128], strides = [1, 1]} : vector<8x384xf32> to vector<8x128xf32>
    %291 = vector.extract_strided_slice %288 {offsets = [0, 256], sizes = [8, 128], strides = [1, 1]} : vector<8x384xf32> to vector<8x128xf32>
    %292 = vector.extract_strided_slice %282 {offsets = [0, 384], sizes = [8, 128], strides = [1, 1]} : vector<8x512xf32> to vector<8x128xf32>
    %293 = math.tanh %292 : vector<8x128xf32>
    %294 = arith.mulf %290, %276 : vector<8x128xf32>
    %295 = arith.mulf %289, %293 : vector<8x128xf32>
    %296 = arith.addf %294, %295 : vector<8x128xf32>
    %297 = math.tanh %296 : vector<8x128xf32>
    %298 = arith.mulf %291, %297 : vector<8x128xf32>
    %299 = vector.extract_strided_slice %176 {offsets = [48, 0], sizes = [8, 512], strides = [1, 1]} : vector<64x512xf32> to vector<8x512xf32>
    %300 = arith.truncf %298 : vector<8x128xf32> to vector<8x128xbf16>
    %cst_46 = arith.constant dense<0.000000e+00> : vector<8x512xf32>
    %301 = tpu.matmul %300, %172, %cst_46 {dimension_numbers = #tpu.dot_dimension_numbers<[1], [0], [0], [1], [0, 0, 1, 1], [], []>} : vector<8x128xbf16>, vector<128x512xbf16>, vector<8x512xf32> -> vector<8x512xf32>
    %302 = arith.addf %299, %301 : vector<8x512xf32>
    %303 = vector.extract_strided_slice %302 {offsets = [0, 0], sizes = [8, 384], strides = [1, 1]} : vector<8x512xf32> to vector<8x384xf32>
    %304 = arith.negf %303 : vector<8x384xf32>
    %305 = math.exp %304 : vector<8x384xf32>
    %cst_47 = arith.constant 1.000000e+00 : f32
    %306 = vector.broadcast %cst_47 : f32 to vector<8x384xf32>
    %307 = arith.addf %306, %305 : vector<8x384xf32>
    %308 = arith.divf %306, %307 : vector<8x384xf32>
    %309 = vector.extract_strided_slice %308 {offsets = [0, 0], sizes = [8, 128], strides = [1, 1]} : vector<8x384xf32> to vector<8x128xf32>
    %310 = vector.extract_strided_slice %308 {offsets = [0, 128], sizes = [8, 128], strides = [1, 1]} : vector<8x384xf32> to vector<8x128xf32>
    %311 = vector.extract_strided_slice %308 {offsets = [0, 256], sizes = [8, 128], strides = [1, 1]} : vector<8x384xf32> to vector<8x128xf32>
    %312 = vector.extract_strided_slice %302 {offsets = [0, 384], sizes = [8, 128], strides = [1, 1]} : vector<8x512xf32> to vector<8x128xf32>
    %313 = math.tanh %312 : vector<8x128xf32>
    %314 = arith.mulf %310, %296 : vector<8x128xf32>
    %315 = arith.mulf %309, %313 : vector<8x128xf32>
    %316 = arith.addf %314, %315 : vector<8x128xf32>
    %317 = math.tanh %316 : vector<8x128xf32>
    %318 = arith.mulf %311, %317 : vector<8x128xf32>
    %319 = vector.extract_strided_slice %176 {offsets = [56, 0], sizes = [8, 512], strides = [1, 1]} : vector<64x512xf32> to vector<8x512xf32>
    %320 = arith.truncf %318 : vector<8x128xf32> to vector<8x128xbf16>
    %cst_48 = arith.constant dense<0.000000e+00> : vector<8x512xf32>
    %321 = tpu.matmul %320, %172, %cst_48 {dimension_numbers = #tpu.dot_dimension_numbers<[1], [0], [0], [1], [0, 0, 1, 1], [], []>} : vector<8x128xbf16>, vector<128x512xbf16>, vector<8x512xf32> -> vector<8x512xf32>
    %322 = arith.addf %319, %321 : vector<8x512xf32>
    %323 = vector.extract_strided_slice %322 {offsets = [0, 0], sizes = [8, 384], strides = [1, 1]} : vector<8x512xf32> to vector<8x384xf32>
    %324 = arith.negf %323 : vector<8x384xf32>
    %325 = math.exp %324 : vector<8x384xf32>
    %cst_49 = arith.constant 1.000000e+00 : f32
    %326 = vector.broadcast %cst_49 : f32 to vector<8x384xf32>
    %327 = arith.addf %326, %325 : vector<8x384xf32>
    %328 = arith.divf %326, %327 : vector<8x384xf32>
    %329 = vector.extract_strided_slice %328 {offsets = [0, 0], sizes = [8, 128], strides = [1, 1]} : vector<8x384xf32> to vector<8x128xf32>
    %330 = vector.extract_strided_slice %328 {offsets = [0, 128], sizes = [8, 128], strides = [1, 1]} : vector<8x384xf32> to vector<8x128xf32>
    %331 = vector.extract_strided_slice %328 {offsets = [0, 256], sizes = [8, 128], strides = [1, 1]} : vector<8x384xf32> to vector<8x128xf32>
    %332 = vector.extract_strided_slice %322 {offsets = [0, 384], sizes = [8, 128], strides = [1, 1]} : vector<8x512xf32> to vector<8x128xf32>
    %333 = math.tanh %332 : vector<8x128xf32>
    %334 = arith.mulf %330, %316 : vector<8x128xf32>
    %335 = arith.mulf %329, %333 : vector<8x128xf32>
    %336 = arith.addf %334, %335 : vector<8x128xf32>
    %337 = math.tanh %336 : vector<8x128xf32>
    %338 = arith.mulf %331, %337 : vector<8x128xf32>
    %339 = arith.truncf %338 : vector<8x128xf32> to vector<8x128xbf16>
    %c0_50 = arith.constant 0 : index
    %c0_51 = arith.constant 0 : index
    %340 = vector.load %arg7[%c0_50, %c0_51] : memref<128x128xbf16, #tpu.memory_space<vmem>>, vector<128x128xbf16>
    %cst_52 = arith.constant dense<0.000000e+00> : vector<8x128xf32>
    %341 = tpu.matmul %339, %340, %cst_52 {dimension_numbers = #tpu.dot_dimension_numbers<[1], [0], [0], [1], [0, 0, 1, 1], [], []>} : vector<8x128xbf16>, vector<128x128xbf16>, vector<8x128xf32> -> vector<8x128xf32>
    %c0_53 = arith.constant 0 : index
    %c0_54 = arith.constant 0 : index
    %342 = vector.load %arg8[%c0_53, %c0_54] : memref<1x128xf32, #tpu.memory_space<vmem>>, vector<1x128xf32>
    %343 = vector.broadcast %342 : vector<1x128xf32> to vector<8x128xf32>
    %344 = arith.addf %341, %343 : vector<8x128xf32>
    %c0_55 = arith.constant 0 : index
    %c0_56 = arith.constant 0 : index
    %345 = vector.load %arg9[%c0_55, %c0_56] : memref<8x128xf32, #tpu.memory_space<vmem>>, vector<8x128xf32>
    tpu.vector_store %arg9[%c0_55, %c0_56], %344 {strides = array<i32>} : memref<8x128xf32, #tpu.memory_space<vmem>>, vector<8x128xf32>,
    return
  }
}

</mosaic_0001>

<llo_original>
// kernel: tpu_custom_call.1
$region0: #{tpu_custom_call.1}
  #allocation0 [shape = 'u32[]', space=smem, size = 0x4, offset = 0x4, fixed_abs, tag = 'smem constant byte address 0x4 - core index']
  #allocation1 [shape = 'u32[144,128]{1,0:T(1,128)}', space=vmem, size = 0x12000, scoped, tag = 'internal scratch']
  %s0 = inlined_call_operand.hbm [shape: bf16[64,128], index: 0, kind: input, shape index: {}]
  %s1 = inlined_call_operand.hbm [shape: bf16[128,512], index: 1, kind: input, shape index: {}]
  %s2 = inlined_call_operand.hbm [shape: bf16[128,512], index: 2, kind: input, shape index: {}]
  %s3 = inlined_call_operand.vmem [shape: f32[1,512], index: 3, kind: input, shape index: {}]
  %s4 = inlined_call_operand.hbm [shape: bf16[128,512], index: 4, kind: input, shape index: {}]
  %s5 = inlined_call_operand.hbm [shape: bf16[128,512], index: 5, kind: input, shape index: {}]
  %s6 = inlined_call_operand.vmem [shape: f32[1,512], index: 6, kind: input, shape index: {}]
  %s7 = inlined_call_operand.hbm [shape: bf16[128,128], index: 7, kind: input, shape index: {}]
  %s8 = inlined_call_operand.vmem [shape: f32[1,128], index: 8, kind: input, shape index: {}]
  %s9 = inlined_call_operand.hbm [shape: f32[8,128], index: 9, kind: output, shape index: {}]
  %s10 = sld [smem:[#allocation0]]
  $region70: #{tpu_custom_call.1} parent=0
    _
  %s12 = ssub.s32 1, %s10
  %s13 = scalar_select 0, %s12, %s10
  $region1: #{tpu_custom_call.1} parent=0
    #allocation2 [shape = 'u8[16384]{0}', space=vmem, size = 0x4000, scoped, tag = 'input window, operand 0, single buffered']
    #allocation3 [shape = 's32[1]{0}', space=sflag, size = 0x4, scoped, tag = 'scoped memory for tpu_custom_call.1']
    #allocation4 [shape = 's32[1]{0}', space=sflag, size = 0x4, scoped, tag = 'scoped memory for tpu_custom_call.1']
    #allocation5 [shape = 'u8[131072]{0}', space=vmem, size = 0x20000, scoped, tag = 'input window, operand 1, single buffered']
    #allocation6 [shape = 's32[1]{0}', space=sflag, size = 0x4, scoped, tag = 'scoped memory for tpu_custom_call.1']
    #allocation7 [shape = 'u8[131072]{0}', space=vmem, size = 0x20000, scoped, tag = 'input window, operand 2, single buffered']
    #allocation8 [shape = 'u8[131072]{0}', space=vmem, size = 0x20000, scoped, tag = 'input window, operand 4, single buffered']
    #allocation9 [shape = 's32[1]{0}', space=sflag, size = 0x4, scoped, tag = 'scoped memory for tpu_custom_call.1']
    #allocation10 [shape = 'u8[131072]{0}', space=vmem, size = 0x20000, scoped, tag = 'input window, operand 5, single buffered']
    #allocation11 [shape = 'u8[32768]{0}', space=vmem, size = 0x8000, scoped, tag = 'input window, operand 7, single buffered']
    #allocation12 [shape = 's32[1]{0}', space=sflag, size = 0x4, scoped, tag = 'scoped memory for tpu_custom_call.1']
    #allocation13 [shape = 'u8[4096]{0}', space=vmem, size = 0x1000, scoped, tag = 'output window, operand 0, single buffered']
    %14 = vsyncpa [#allocation3], 0
    %15 = vsyncpa [#allocation6], 0
    %16 = vsyncpa [#allocation9], 0
    %17 = vsyncpa [#allocation12], 0
    %18 = vsyncpa [#allocation4], 0
    // Predicated region
    $region2: #{tpu_custom_call.1} parent=1 // pred_check
      _
    $region3: #{tpu_custom_call.1} parent=1 // pred_check_branch
      %20 = sbr.rel (0) target = $region5
    $region4: #{tpu_custom_call.1} parent=1 // pred_region
      %s22 = ssub.s32 512, 512
      %23 = vsyncadd [#allocation3], %s22
      %s24 = sshll.u32 [#allocation2], 4
      %s25 = int_to_ptr.vmem [resolvable:$true] %s24
      %30 = dma.hbm_to_vmem [thread:$0]  %s0, 512, %s25, [#allocation3], 64, 64, 4
    $region5: #{tpu_custom_call.1} parent=1 // pred_fallthru
      _
    // Predicated region
    $region6: #{tpu_custom_call.1} parent=1 // pred_check
      _
    $region7: #{tpu_custom_call.1} parent=1 // pred_check_branch
      %32 = sbr.rel (0) target = $region9
    $region8: #{tpu_custom_call.1} parent=1 // pred_region
      %s34 = ssub.s32 4096, 4096
      %35 = vsyncadd [#allocation6], %s34
      %s36 = sshll.u32 [#allocation5], 4
      %s37 = int_to_ptr.vmem [resolvable:$true] %s36
      %42 = dma.hbm_to_vmem [thread:$0]  %s1, 4096, %s37, [#allocation6], 256, 256, 16
    $region9: #{tpu_custom_call.1} parent=1 // pred_fallthru
      _
    // Predicated region
    $region10: #{tpu_custom_call.1} parent=1 // pred_check
      _
    $region11: #{tpu_custom_call.1} parent=1 // pred_check_branch
      %44 = sbr.rel (0) target = $region13
    $region12: #{tpu_custom_call.1} parent=1 // pred_region
      %s46 = ssub.s32 4096, 4096
      %47 = vsyncadd [#allocation6], %s46
      %s48 = sshll.u32 [#allocation7], 4
      %s49 = int_to_ptr.vmem [resolvable:$true] %s48
      %54 = dma.hbm_to_vmem [thread:$0]  %s2, 4096, %s49, [#allocation6], 256, 256, 16
    $region13: #{tpu_custom_call.1} parent=1 // pred_fallthru
      _
    // Predicated region
    $region14: #{tpu_custom_call.1} parent=1 // pred_check
      _
    $region15: #{tpu_custom_call.1} parent=1 // pred_check_branch
      %56 = sbr.rel (0) target = $region17
    $region16: #{tpu_custom_call.1} parent=1 // pred_region
      _
    $region17: #{tpu_custom_call.1} parent=1 // pred_fallthru
      _
    // Predicated region
    $region18: #{tpu_custom_call.1} parent=1 // pred_check
      _
    $region19: #{tpu_custom_call.1} parent=1 // pred_check_branch
      %58 = sbr.rel (0) target = $region21
    $region20: #{tpu_custom_call.1} parent=1 // pred_region
      %s60 = ssub.s32 4096, 4096
      %61 = vsyncadd [#allocation9], %s60
      %s62 = sshll.u32 [#allocation8], 4
      %s63 = int_to_ptr.vmem [resolvable:$true] %s62
      %68 = dma.hbm_to_vmem [thread:$0]  %s4, 4096, %s63, [#allocation9], 256, 256, 16
    $region21: #{tpu_custom_call.1} parent=1 // pred_fallthru
      _
    // Predicated region
    $region22: #{tpu_custom_call.1} parent=1 // pred_check
      _
    $region23: #{tpu_custom_call.1} parent=1 // pred_check_branch
      %70 = sbr.rel (0) target = $region25
    $region24: #{tpu_custom_call.1} parent=1 // pred_region
      %s72 = ssub.s32 4096, 4096
      %73 = vsyncadd [#allocation9], %s72
      %s74 = sshll.u32 [#allocation10], 4
      %s75 = int_to_ptr.vmem [resolvable:$true] %s74
      %80 = dma.hbm_to_vmem [thread:$0]  %s5, 4096, %s75, [#allocation9], 256, 256, 16
    $region25: #{tpu_custom_call.1} parent=1 // pred_fallthru
      _
    // Predicated region
    $region26: #{tpu_custom_call.1} parent=1 // pred_check
      _
    $region27: #{tpu_custom_call.1} parent=1 // pred_check_branch
      %82 = sbr.rel (0) target = $region29
    $region28: #{tpu_custom_call.1} parent=1 // pred_region
      _
    $region29: #{tpu_custom_call.1} parent=1 // pred_fallthru
      _
    // Predicated region
    $region30: #{tpu_custom_call.1} parent=1 // pred_check
      _
    $region31: #{tpu_custom_call.1} parent=1 // pred_check_branch
      %84 = sbr.rel (0) target = $region33
    $region32: #{tpu_custom_call.1} parent=1 // pred_region
      %s86 = ssub.s32 1024, 1024
      %87 = vsyncadd [#allocation12], %s86
      %s88 = sshll.u32 [#allocation11], 4
      %s89 = int_to_ptr.vmem [resolvable:$true] %s88
      %94 = dma.hbm_to_vmem [thread:$0]  %s7, 1024, %s89, [#allocation12], 64, 64, 4
    $region33: #{tpu_custom_call.1} parent=1 // pred_fallthru
      _
    // Predicated region
    $region34: #{tpu_custom_call.1} parent=1 // pred_check
      _
    $region35: #{tpu_custom_call.1} parent=1 // pred_check_branch
      %96 = sbr.rel (0) target = $region37
    $region36: #{tpu_custom_call.1} parent=1 // pred_region
      _
    $region37: #{tpu_custom_call.1} parent=1 // pred_fallthru
      _
    // Predicated region
    $region38: #{tpu_custom_call.1} parent=1 // pred_check
      _
    $region39: #{tpu_custom_call.1} parent=1 // pred_check_branch
      %98 = sbr.rel (0) target = $region41
    $region40: #{tpu_custom_call.1} parent=1 // pred_region
      %99 = dma.done [#allocation3], 512
    $region41: #{tpu_custom_call.1} parent=1 // pred_fallthru
      _
    // Predicated region
    $region42: #{tpu_custom_call.1} parent=1 // pred_check
      _
    $region43: #{tpu_custom_call.1} parent=1 // pred_check_branch
      %101 = sbr.rel (0) target = $region45
    $region44: #{tpu_custom_call.1} parent=1 // pred_region
      %102 = dma.done [#allocation6], 4096
    $region45: #{tpu_custom_call.1} parent=1 // pred_fallthru
      _
    // Predicated region
    $region46: #{tpu_custom_call.1} parent=1 // pred_check
      _
    $region47: #{tpu_custom_call.1} parent=1 // pred_check_branch
      %104 = sbr.rel (0) target = $region49
    $region48: #{tpu_custom_call.1} parent=1 // pred_region
      %105 = dma.done [#allocation6], 4096
    $region49: #{tpu_custom_call.1} parent=1 // pred_fallthru
      _
    // Predicated region
    $region50: #{tpu_custom_call.1} parent=1 // pred_check
      _
    $region51: #{tpu_custom_call.1} parent=1 // pred_check_branch
      %107 = sbr.rel (0) target = $region53
    $region52: #{tpu_custom_call.1} parent=1 // pred_region
      %108 = dma.done [#allocation9], 4096
    $region53: #{tpu_custom_call.1} parent=1 // pred_fallthru
      _
    // Predicated region
    $region54: #{tpu_custom_call.1} parent=1 // pred_check
      _
    $region55: #{tpu_custom_call.1} parent=1 // pred_check_branch
      %110 = sbr.rel (0) target = $region57
    $region56: #{tpu_custom_call.1} parent=1 // pred_region
      %111 = dma.done [#allocation9], 4096
    $region57: #{tpu_custom_call.1} parent=1 // pred_fallthru
      _
    // Predicated region
    $region58: #{tpu_custom_call.1} parent=1 // pred_check
      _
    $region59: #{tpu_custom_call.1} parent=1 // pred_check_branch
      %113 = sbr.rel (0) target = $region61
    $region60: #{tpu_custom_call.1} parent=1 // pred_region
      %114 = dma.done [#allocation12], 1024
    $region61: #{tpu_custom_call.1} parent=1 // pred_fallthru
      _
    %v116 = vld [vmem:[#allocation2] sm:$0xf]
    %v117 = vld [vmem:[#allocation2 + $0x4] sm:$0xf]
    %v118 = vld [vmem:[#allocation2 + $0x8] sm:$0xf]
    %v119 = vld [vmem:[#allocation2 + $0xc] sm:$0xf]
    %v120 = vld [vmem:[#allocation2 + $0x10] sm:$0xf]
    %v121 = vld [vmem:[#allocation2 + $0x14] sm:$0xf]
    %v122 = vld [vmem:[#allocation2 + $0x18] sm:$0xf]
    %v123 = vld [vmem:[#allocation2 + $0x1c] sm:$0xf]
    %v124 = vld [vmem:[#allocation5] sm:$0xff]
    %v125 = vld [vmem:[#allocation5 + $0x8] sm:$0xff]
    %v126 = vld [vmem:[#allocation5 + $0x10] sm:$0xff]
    %v127 = vld [vmem:[#allocation5 + $0x18] sm:$0xff]
    %v128 = vld [vmem:[#allocation5 + $0x20] sm:$0xff]
    %v129 = vld [vmem:[#allocation5 + $0x28] sm:$0xff]
    %v130 = vld [vmem:[#allocation5 + $0x30] sm:$0xff]
    %v131 = vld [vmem:[#allocation5 + $0x38] sm:$0xff]
    %v132 = vld [vmem:[#allocation5 + $0x40] sm:$0xff]
    %v133 = vld [vmem:[#allocation5 + $0x48] sm:$0xff]
    %v134 = vld [vmem:[#allocation5 + $0x50] sm:$0xff]
    %v135 = vld [vmem:[#allocation5 + $0x58] sm:$0xff]
    %v136 = vld [vmem:[#allocation5 + $0x60] sm:$0xff]
    %v137 = vld [vmem:[#allocation5 + $0x68] sm:$0xff]
    %v138 = vld [vmem:[#allocation5 + $0x70] sm:$0xff]
    %v139 = vld [vmem:[#allocation5 + $0x78] sm:$0xff]
    %v140 = vld [vmem:[#allocation5 + $0x80] sm:$0xff]
    %v141 = vld [vmem:[#allocation5 + $0x88] sm:$0xff]
    %v142 = vld [vmem:[#allocation5 + $0x90] sm:$0xff]
    %v143 = vld [vmem:[#allocation5 + $0x98] sm:$0xff]
    %v144 = vld [vmem:[#allocation5 + $0xa0] sm:$0xff]
    %v145 = vld [vmem:[#allocation5 + $0xa8] sm:$0xff]
    %v146 = vld [vmem:[#allocation5 + $0xb0] sm:$0xff]
    %v147 = vld [vmem:[#allocation5 + $0xb8] sm:$0xff]
    %v148 = vld [vmem:[#allocation5 + $0xc0] sm:$0xff]
    %v149 = vld [vmem:[#allocation5 + $0xc8] sm:$0xff]
    %v150 = vld [vmem:[#allocation5 + $0xd0] sm:$0xff]
    %v151 = vld [vmem:[#allocation5 + $0xd8] sm:$0xff]
    %v152 = vld [vmem:[#allocation5 + $0xe0] sm:$0xff]
    %v153 = vld [vmem:[#allocation5 + $0xe8] sm:$0xff]
    %v154 = vld [vmem:[#allocation5 + $0xf0] sm:$0xff]
    %v155 = vld [vmem:[#allocation5 + $0xf8] sm:$0xff]
    %v156 = vld [vmem:[#allocation7] sm:$0xff]
    %v157 = vld [vmem:[#allocation7 + $0x8] sm:$0xff]
    %v158 = vld [vmem:[#allocation7 + $0x10] sm:$0xff]
    %v159 = vld [vmem:[#allocation7 + $0x18] sm:$0xff]
    %v160 = vld [vmem:[#allocation7 + $0x20] sm:$0xff]
    %v161 = vld [vmem:[#allocation7 + $0x28] sm:$0xff]
    %v162 = vld [vmem:[#allocation7 + $0x30] sm:$0xff]
    %v163 = vld [vmem:[#allocation7 + $0x38] sm:$0xff]
    %v164 = vld [vmem:[#allocation7 + $0x40] sm:$0xff]
    %v165 = vld [vmem:[#allocation7 + $0x48] sm:$0xff]
    %v166 = vld [vmem:[#allocation7 + $0x50] sm:$0xff]
    %v167 = vld [vmem:[#allocation7 + $0x58] sm:$0xff]
    %v168 = vld [vmem:[#allocation7 + $0x60] sm:$0xff]
    %v169 = vld [vmem:[#allocation7 + $0x68] sm:$0xff]
    %v170 = vld [vmem:[#allocation7 + $0x70] sm:$0xff]
    %v171 = vld [vmem:[#allocation7 + $0x78] sm:$0xff]
    %v172 = vld [vmem:[#allocation7 + $0x80] sm:$0xff]
    %v173 = vld [vmem:[#allocation7 + $0x88] sm:$0xff]
    %v174 = vld [vmem:[#allocation7 + $0x90] sm:$0xff]
    %v175 = vld [vmem:[#allocation7 + $0x98] sm:$0xff]
    %v176 = vld [vmem:[#allocation7 + $0xa0] sm:$0xff]
    %v177 = vld [vmem:[#allocation7 + $0xa8] sm:$0xff]
    %v178 = vld [vmem:[#allocation7 + $0xb0] sm:$0xff]
    %v179 = vld [vmem:[#allocation7 + $0xb8] sm:$0xff]
    %v180 = vld [vmem:[#allocation7 + $0xc0] sm:$0xff]
    %v181 = vld [vmem:[#allocation7 + $0xc8] sm:$0xff]
    %v182 = vld [vmem:[#allocation7 + $0xd0] sm:$0xff]
    %v183 = vld [vmem:[#allocation7 + $0xd8] sm:$0xff]
    %v184 = vld [vmem:[#allocation7 + $0xe0] sm:$0xff]
    %v185 = vld [vmem:[#allocation7 + $0xe8] sm:$0xff]
    %v186 = vld [vmem:[#allocation7 + $0xf0] sm:$0xff]
    %v187 = vld [vmem:[#allocation7 + $0xf8] sm:$0xff]
    %v188 = vld [vmem:[%s3] sm:$0xf]
    %v190 = vlaneseq
    %v191 = vshrl.u32 %v190, 7
    %v192 = vsub.s32 0, %v191
    %v193 = vrot.slane %v188, %v192
    %v194 = vlaneseq
    %v195 = vshrl.u32 %v194, 7
    %v196 = vsub.s32 1, %v195
    %v197 = vrot.slane %v188, %v196
    %v198 = vlaneseq
    %v199 = vshrl.u32 %v198, 7
    %v200 = vsub.s32 2, %v199
    %v201 = vrot.slane %v188, %v200
    %v202 = vlaneseq
    %v203 = vshrl.u32 %v202, 7
    %v204 = vsub.s32 3, %v203
    %v205 = vrot.slane %v188, %v204
    %v218 = vunpack.c.l.b16 %v116
    %v219 = vunpack.c.l.b16 %v117
    %v220 = vunpack.c.l.b16 %v118
    %v221 = vunpack.c.l.b16 %v119
    %v222 = vunpack.c.l.b16 %v120
    %v223 = vunpack.c.l.b16 %v121
    %v224 = vunpack.c.l.b16 %v122
    %v225 = vunpack.c.l.b16 %v123
    %v226 = vpack.c.b16 %v219, %v218
    %v227 = vpack.c.b16 %v221, %v220
    %v228 = vpack.c.b16 %v223, %v222
    %v229 = vpack.c.b16 %v225, %v224
    %v266 = vunpack.c.l.b16 %v124
    %v267 = vunpack.c.h.b16 %v124
    %v268 = vunpack.c.l.b16 %v125
    %v269 = vunpack.c.h.b16 %v125
    %v270 = vunpack.c.l.b16 %v126
    %v271 = vunpack.c.h.b16 %v126
    %v272 = vunpack.c.l.b16 %v127
    %v273 = vunpack.c.h.b16 %v127
    %v274 = vunpack.c.l.b16 %v128
    %v275 = vunpack.c.h.b16 %v128
    %v276 = vunpack.c.l.b16 %v129
    %v277 = vunpack.c.h.b16 %v129
    %v278 = vunpack.c.l.b16 %v130
    %v279 = vunpack.c.h.b16 %v130
    %v280 = vunpack.c.l.b16 %v131
    %v281 = vunpack.c.h.b16 %v131
    %v282 = vunpack.c.l.b16 %v132
    %v283 = vunpack.c.h.b16 %v132
    %v284 = vunpack.c.l.b16 %v133
    %v285 = vunpack.c.h.b16 %v133
    %v286 = vunpack.c.l.b16 %v134
    %v287 = vunpack.c.h.b16 %v134
    %v288 = vunpack.c.l.b16 %v135
    %v289 = vunpack.c.h.b16 %v135
    %v290 = vunpack.c.l.b16 %v136
    %v291 = vunpack.c.h.b16 %v136
    %v292 = vunpack.c.l.b16 %v137
    %v293 = vunpack.c.h.b16 %v137
    %v294 = vunpack.c.l.b16 %v138
    %v295 = vunpack.c.h.b16 %v138
    %v296 = vunpack.c.l.b16 %v139
    %v297 = vunpack.c.h.b16 %v139
    %v298 = vunpack.c.l.b16 %v140
    %v299 = vunpack.c.h.b16 %v140
    %v300 = vunpack.c.l.b16 %v141
    %v301 = vunpack.c.h.b16 %v141
    %v302 = vunpack.c.l.b16 %v142
    %v303 = vunpack.c.h.b16 %v142
    %v304 = vunpack.c.l.b16 %v143
    %v305 = vunpack.c.h.b16 %v143
    %v306 = vunpack.c.l.b16 %v144
    %v307 = vunpack.c.h.b16 %v144
    %v308 = vunpack.c.l.b16 %v145
    %v309 = vunpack.c.h.b16 %v145
    %v310 = vunpack.c.l.b16 %v146
    %v311 = vunpack.c.h.b16 %v146
    %v312 = vunpack.c.l.b16 %v147
    %v313 = vunpack.c.h.b16 %v147
    %v314 = vunpack.c.l.b16 %v148
    %v315 = vunpack.c.h.b16 %v148
    %v316 = vunpack.c.l.b16 %v149
    %v317 = vunpack.c.h.b16 %v149
    %v318 = vunpack.c.l.b16 %v150
    %v319 = vunpack.c.h.b16 %v150
    %v320 = vunpack.c.l.b16 %v151
    %v321 = vunpack.c.h.b16 %v151
    %v322 = vunpack.c.l.b16 %v152
    %v323 = vunpack.c.h.b16 %v152
    %v324 = vunpack.c.l.b16 %v153
    %v325 = vunpack.c.h.b16 %v153
    %v326 = vunpack.c.l.b16 %v154
    %v327 = vunpack.c.h.b16 %v154
    %v328 = vunpack.c.l.b16 %v155
    %v329 = vunpack.c.h.b16 %v155
    %v330 = vpack.c.b16 %v270, %v266
    %v331 = vpack.c.b16 %v271, %v267
    %v332 = vpack.c.b16 %v272, %v268
    %v333 = vpack.c.b16 %v273, %v269
    %v334 = vpack.c.b16 %v278, %v274
    %v335 = vpack.c.b16 %v279, %v275
    %v336 = vpack.c.b16 %v280, %v276
    %v337 = vpack.c.b16 %v281, %v277
    %v338 = vpack.c.b16 %v286, %v282
    %v339 = vpack.c.b16 %v287, %v283
    %v340 = vpack.c.b16 %v288, %v284
    %v341 = vpack.c.b16 %v289, %v285
    %v342 = vpack.c.b16 %v294, %v290
    %v343 = vpack.c.b16 %v295, %v291
    %v344 = vpack.c.b16 %v296, %v292
    %v345 = vpack.c.b16 %v297, %v293
    %v346 = vpack.c.b16 %v302, %v298
    %v347 = vpack.c.b16 %v303, %v299
    %v348 = vpack.c.b16 %v304, %v300
    %v349 = vpack.c.b16 %v305, %v301
    %v350 = vpack.c.b16 %v310, %v306
    %v351 = vpack.c.b16 %v311, %v307
    %v352 = vpack.c.b16 %v312, %v308
    %v353 = vpack.c.b16 %v313, %v309
    %v354 = vpack.c.b16 %v318, %v314
    %v355 = vpack.c.b16 %v319, %v315
    %v356 = vpack.c.b16 %v320, %v316
    %v357 = vpack.c.b16 %v321, %v317
    %v358 = vpack.c.b16 %v326, %v322
    %v359 = vpack.c.b16 %v327, %v323
    %v360 = vpack.c.b16 %v328, %v324
    %v361 = vpack.c.b16 %v329, %v325
    %394 = vmatprep.subr.bf16.mxu0 %v359
    %395 = vmatpush1.bf16.msra.mxu0 %v358
    %396 = vmatprep.subr.bf16.mxu0 %v355
    %397 = vmatpush1.bf16.msra.mxu0 %v354
    %398 = vmatprep.subr.bf16.mxu0 %v351
    %399 = vmatpush1.bf16.msra.mxu0 %v350
    %400 = vmatprep.subr.bf16.mxu0 %v347
    %401 = vmatpush1.bf16.msra.mxu0 %v346
    %402 = vmatprep.subr.bf16.mxu0 %v343
    %403 = vmatpush1.bf16.msra.mxu0 %v342
    %404 = vmatprep.subr.bf16.mxu0 %v339
    %405 = vmatpush1.bf16.msra.mxu0 %v338
    %406 = vmatprep.subr.bf16.mxu0 %v335
    %407 = vmatpush1.bf16.msra.mxu0 %v334
    %408 = vmatprep.subr.bf16.mxu0 %v331
    %409 = vmatpush1.bf16.msra.mxu0 %v330
    %410 = vmatprep.subr.bf16.mxu0 0
    %411 = vmatpush2.bf16.msra.mxu0 0
    %412 = vmatprep.subr.bf16.mxu0 0
    %413 = vmatpush2.bf16.msra.mxu0 0
    %414 = vmatprep.subr.bf16.mxu0 0
    %415 = vmatpush2.bf16.msra.mxu0 0
    %416 = vmatprep.subr.bf16.mxu0 0
    %417 = vmatpush2.bf16.msra.mxu0 0
    %418 = vmatprep.subr.bf16.mxu0 0
    %419 = vmatpush2.bf16.msra.mxu0 0
    %420 = vmatprep.subr.bf16.mxu0 0
    %421 = vmatpush2.bf16.msra.mxu0 0
    %422 = vmatprep.subr.bf16.mxu0 0
    %423 = vmatpush2.bf16.msra.mxu0 0
    %424 = vmatprep.subr.bf16.mxu0 0
    %425 = vmatpush2.bf16.msra.mxu0 0
    %426 = vmatprep.mubr.bf16.mxu0 0
    %427 = vmatmul.mubr.bf16.gmra.mxu0 %v226
    %v428 = vpop.f32.mrf.mxu0
    %v429 = vadd.f32 %v193, %v428
    %v430 = vpop.f32.mrf.mxu0
    %v431 = vadd.f32 %v197, %v430
    %v432 = vpop.f32.mrf.mxu0
    %v433 = vadd.f32 %v193, %v432
    %v434 = vpop.f32.mrf.mxu0
    %v435 = vadd.f32 %v197, %v434
    %436 = vmatprep.mubr.bf16.mxu0 0
    %437 = vmatmul.mubr.bf16.gmra.mxu0 %v227
    %v438 = vpop.f32.mrf.mxu0
    %v439 = vadd.f32 %v193, %v438
    %v440 = vpop.f32.mrf.mxu0
    %v441 = vadd.f32 %v197, %v440
    %v442 = vpop.f32.mrf.mxu0
    %v443 = vadd.f32 %v193, %v442
    %v444 = vpop.f32.mrf.mxu0
    %v445 = vadd.f32 %v197, %v444
    %446 = vmatprep.mubr.bf16.mxu0 0
    %447 = vmatmul.mubr.bf16.gmra.mxu0 %v228
    %v448 = vpop.f32.mrf.mxu0
    %v449 = vadd.f32 %v193, %v448
    %v450 = vpop.f32.mrf.mxu0
    %v451 = vadd.f32 %v197, %v450
    %v452 = vpop.f32.mrf.mxu0
    %v453 = vadd.f32 %v193, %v452
    %v454 = vpop.f32.mrf.mxu0
    %v455 = vadd.f32 %v197, %v454
    %456 = vmatprep.mubr.bf16.mxu0 0
    %457 = vmatmul.mubr.bf16.gmra.mxu0 %v229
    %v458 = vpop.f32.mrf.mxu0
    %v459 = vadd.f32 %v193, %v458
    %v460 = vpop.f32.mrf.mxu0
    %v461 = vadd.f32 %v197, %v460
    %v462 = vpop.f32.mrf.mxu0
    %v463 = vadd.f32 %v193, %v462
    %v464 = vpop.f32.mrf.mxu0
    %v465 = vadd.f32 %v197, %v464
    %466 = vdwg.mxu0
    %467 = vmatprep.subr.bf16.mxu0 %v361
    %468 = vmatpush1.bf16.msra.mxu0 %v360
    %469 = vmatprep.subr.bf16.mxu0 %v357
    %470 = vmatpush1.bf16.msra.mxu0 %v356
    %471 = vmatprep.subr.bf16.mxu0 %v353
    %472 = vmatpush1.bf16.msra.mxu0 %v352
    %473 = vmatprep.subr.bf16.mxu0 %v349
    %474 = vmatpush1.bf16.msra.mxu0 %v348
    %475 = vmatprep.subr.bf16.mxu0 %v345
    %476 = vmatpush1.bf16.msra.mxu0 %v344
    %477 = vmatprep.subr.bf16.mxu0 %v341
    %478 = vmatpush1.bf16.msra.mxu0 %v340
    %479 = vmatprep.subr.bf16.mxu0 %v337
    %480 = vmatpush1.bf16.msra.mxu0 %v336
    %481 = vmatprep.subr.bf16.mxu0 %v333
    %482 = vmatpush1.bf16.msra.mxu0 %v332
    %483 = vmatprep.subr.bf16.mxu0 0
    %484 = vmatpush2.bf16.msra.mxu0 0
    %485 = vmatprep.subr.bf16.mxu0 0
    %486 = vmatpush2.bf16.msra.mxu0 0
    %487 = vmatprep.subr.bf16.mxu0 0
    %488 = vmatpush2.bf16.msra.mxu0 0
    %489 = vmatprep.subr.bf16.mxu0 0
    %490 = vmatpush2.bf16.msra.mxu0 0
    %491 = vmatprep.subr.bf16.mxu0 0
    %492 = vmatpush2.bf16.msra.mxu0 0
    %493 = vmatprep.subr.bf16.mxu0 0
    %494 = vmatpush2.bf16.msra.mxu0 0
    %495 = vmatprep.subr.bf16.mxu0 0
    %496 = vmatpush2.bf16.msra.mxu0 0
    %497 = vmatprep.subr.bf16.mxu0 0
    %498 = vmatpush2.bf16.msra.mxu0 0
    %499 = vmatprep.mubr.bf16.mxu0 0
    %500 = vmatmul.mubr.bf16.gmra.mxu0 %v226
    %v501 = vpop.f32.mrf.mxu0
    %v502 = vadd.f32 %v201, %v501
    %v503 = vpop.f32.mrf.mxu0
    %v504 = vadd.f32 %v205, %v503
    %v505 = vpop.f32.mrf.mxu0
    %v506 = vadd.f32 %v201, %v505
    %v507 = vpop.f32.mrf.mxu0
    %v508 = vadd.f32 %v205, %v507
    %509 = vmatprep.mubr.bf16.mxu0 0
    %510 = vmatmul.mubr.bf16.gmra.mxu0 %v227
    %v511 = vpop.f32.mrf.mxu0
    %v512 = vadd.f32 %v201, %v511
    %v513 = vpop.f32.mrf.mxu0
    %v514 = vadd.f32 %v205, %v513
    %v515 = vpop.f32.mrf.mxu0
    %v516 = vadd.f32 %v201, %v515
    %v517 = vpop.f32.mrf.mxu0
    %v518 = vadd.f32 %v205, %v517
    %519 = vmatprep.mubr.bf16.mxu0 0
    %520 = vmatmul.mubr.bf16.gmra.mxu0 %v228
    %v521 = vpop.f32.mrf.mxu0
    %v522 = vadd.f32 %v201, %v521
    %v523 = vpop.f32.mrf.mxu0
    %v524 = vadd.f32 %v205, %v523
    %v525 = vpop.f32.mrf.mxu0
    %v526 = vadd.f32 %v201, %v525
    %v527 = vpop.f32.mrf.mxu0
    %v528 = vadd.f32 %v205, %v527
    %529 = vmatprep.mubr.bf16.mxu0 0
    %530 = vmatmul.mubr.bf16.gmra.mxu0 %v229
    %v531 = vpop.f32.mrf.mxu0
    %v532 = vadd.f32 %v201, %v531
    %v533 = vpop.f32.mrf.mxu0
    %v534 = vadd.f32 %v205, %v533
    %v535 = vpop.f32.mrf.mxu0
    %v536 = vadd.f32 %v201, %v535
    %v537 = vpop.f32.mrf.mxu0
    %v538 = vadd.f32 %v205, %v537
    %539 = vdwg.mxu0
    %v572 = vunpack.c.l.b16 %v156
    %v573 = vunpack.c.h.b16 %v156
    %v574 = vunpack.c.l.b16 %v157
    %v575 = vunpack.c.h.b16 %v157
    %v576 = vunpack.c.l.b16 %v158
    %v577 = vunpack.c.h.b16 %v158
    %v578 = vunpack.c.l.b16 %v159
    %v579 = vunpack.c.h.b16 %v159
    %v580 = vunpack.c.l.b16 %v160
    %v581 = vunpack.c.h.b16 %v160
    %v582 = vunpack.c.l.b16 %v161
    %v583 = vunpack.c.h.b16 %v161
    %v584 = vunpack.c.l.b16 %v162
    %v585 = vunpack.c.h.b16 %v162
    %v586 = vunpack.c.l.b16 %v163
    %v587 = vunpack.c.h.b16 %v163
    %v588 = vunpack.c.l.b16 %v164
    %v589 = vunpack.c.h.b16 %v164
    %v590 = vunpack.c.l.b16 %v165
    %v591 = vunpack.c.h.b16 %v165
    %v592 = vunpack.c.l.b16 %v166
    %v593 = vunpack.c.h.b16 %v166
    %v594 = vunpack.c.l.b16 %v167
    %v595 = vunpack.c.h.b16 %v167
    %v596 = vunpack.c.l.b16 %v168
    %v597 = vunpack.c.h.b16 %v168
    %v598 = vunpack.c.l.b16 %v169
    %v599 = vunpack.c.h.b16 %v169
    %v600 = vunpack.c.l.b16 %v170
    %v601 = vunpack.c.h.b16 %v170
    %v602 = vunpack.c.l.b16 %v171
    %v603 = vunpack.c.h.b16 %v171
    %v604 = vunpack.c.l.b16 %v172
    %v605 = vunpack.c.h.b16 %v172
    %v606 = vunpack.c.l.b16 %v173
    %v607 = vunpack.c.h.b16 %v173
    %v608 = vunpack.c.l.b16 %v174
    %v609 = vunpack.c.h.b16 %v174
    %v610 = vunpack.c.l.b16 %v175
    %v611 = vunpack.c.h.b16 %v175
    %v612 = vunpack.c.l.b16 %v176
    %v613 = vunpack.c.h.b16 %v176
    %v614 = vunpack.c.l.b16 %v177
    %v615 = vunpack.c.h.b16 %v177
    %v616 = vunpack.c.l.b16 %v178
    %v617 = vunpack.c.h.b16 %v178
    %v618 = vunpack.c.l.b16 %v179
    %v619 = vunpack.c.h.b16 %v179
    %v620 = vunpack.c.l.b16 %v180
    %v621 = vunpack.c.h.b16 %v180
    %v622 = vunpack.c.l.b16 %v181
    %v623 = vunpack.c.h.b16 %v181
    %v624 = vunpack.c.l.b16 %v182
    %v625 = vunpack.c.h.b16 %v182
    %v626 = vunpack.c.l.b16 %v183
    %v627 = vunpack.c.h.b16 %v183
    %v628 = vunpack.c.l.b16 %v184
    %v629 = vunpack.c.h.b16 %v184
    %v630 = vunpack.c.l.b16 %v185
    %v631 = vunpack.c.h.b16 %v185
    %v632 = vunpack.c.l.b16 %v186
    %v633 = vunpack.c.h.b16 %v186
    %v634 = vunpack.c.l.b16 %v187
    %v635 = vunpack.c.h.b16 %v187
    %v636 = vpack.c.b16 %v576, %v572
    %v637 = vpack.c.b16 %v577, %v573
    %v638 = vpack.c.b16 %v578, %v574
    %v639 = vpack.c.b16 %v579, %v575
    %v640 = vpack.c.b16 %v584, %v580
    %v641 = vpack.c.b16 %v585, %v581
    %v642 = vpack.c.b16 %v586, %v582
    %v643 = vpack.c.b16 %v587, %v583
    %v644 = vpack.c.b16 %v592, %v588
    %v645 = vpack.c.b16 %v593, %v589
    %v646 = vpack.c.b16 %v594, %v590
    %v647 = vpack.c.b16 %v595, %v591
    %v648 = vpack.c.b16 %v600, %v596
    %v649 = vpack.c.b16 %v601, %v597
    %v650 = vpack.c.b16 %v602, %v598
    %v651 = vpack.c.b16 %v603, %v599
    %v652 = vpack.c.b16 %v608, %v604
    %v653 = vpack.c.b16 %v609, %v605
    %v654 = vpack.c.b16 %v610, %v606
    %v655 = vpack.c.b16 %v611, %v607
    %v656 = vpack.c.b16 %v616, %v612
    %v657 = vpack.c.b16 %v617, %v613
    %v658 = vpack.c.b16 %v618, %v614
    %v659 = vpack.c.b16 %v619, %v615
    %v660 = vpack.c.b16 %v624, %v620
    %v661 = vpack.c.b16 %v625, %v621
    %v662 = vpack.c.b16 %v626, %v622
    %v663 = vpack.c.b16 %v627, %v623
    %v664 = vpack.c.b16 %v632, %v628
    %v665 = vpack.c.b16 %v633, %v629
    %v666 = vpack.c.b16 %v634, %v630
    %v667 = vpack.c.b16 %v635, %v631
    %700 = vmatprep.subr.bf16.mxu0 %v665
    %701 = vmatpush1.bf16.msra.mxu0 %v664
    %702 = vmatprep.subr.bf16.mxu0 %v661
    %703 = vmatpush1.bf16.msra.mxu0 %v660
    %704 = vmatprep.subr.bf16.mxu0 %v657
    %705 = vmatpush1.bf16.msra.mxu0 %v656
    %706 = vmatprep.subr.bf16.mxu0 %v653
    %707 = vmatpush1.bf16.msra.mxu0 %v652
    %708 = vmatprep.subr.bf16.mxu0 %v649
    %709 = vmatpush1.bf16.msra.mxu0 %v648
    %710 = vmatprep.subr.bf16.mxu0 %v645
    %711 = vmatpush1.bf16.msra.mxu0 %v644
    %712 = vmatprep.subr.bf16.mxu0 %v641
    %713 = vmatpush1.bf16.msra.mxu0 %v640
    %714 = vmatprep.subr.bf16.mxu0 %v637
    %715 = vmatpush1.bf16.msra.mxu0 %v636
    %716 = vmatprep.subr.bf16.mxu0 0
    %717 = vmatpush2.bf16.msra.mxu0 0
    %718 = vmatprep.subr.bf16.mxu0 0
    %719 = vmatpush2.bf16.msra.mxu0 0
    %720 = vmatprep.subr.bf16.mxu0 0
    %721 = vmatpush2.bf16.msra.mxu0 0
    %722 = vmatprep.subr.bf16.mxu0 0
    %723 = vmatpush2.bf16.msra.mxu0 0
    %724 = vmatprep.subr.bf16.mxu0 0
    %725 = vmatpush2.bf16.msra.mxu0 0
    %726 = vmatprep.subr.bf16.mxu0 0
    %727 = vmatpush2.bf16.msra.mxu0 0
    %728 = vmatprep.subr.bf16.mxu0 0
    %729 = vmatpush2.bf16.msra.mxu0 0
    %730 = vmatprep.subr.bf16.mxu0 0
    %731 = vmatpush2.bf16.msra.mxu0 0
    %732 = vmatprep.mubr.bf16.mxu0 0
    %733 = vmatmul.mubr.bf16.gmra.mxu0 0
    %v734 = vpop.f32.mrf.mxu0
    %v735 = vadd.f32 0.0, %v734
    %v736 = vpop.f32.mrf.mxu0
    %v737 = vadd.f32 0.0, %v736
    %v738 = vpop.f32.mrf.mxu0
    %v739 = vpop.f32.mrf.mxu0
    %740 = vdwg.mxu0
    %741 = vmatprep.subr.bf16.mxu0 %v667
    %742 = vmatpush1.bf16.msra.mxu0 %v666
    %743 = vmatprep.subr.bf16.mxu0 %v663
    %744 = vmatpush1.bf16.msra.mxu0 %v662
    %745 = vmatprep.subr.bf16.mxu0 %v659
    %746 = vmatpush1.bf16.msra.mxu0 %v658
    %747 = vmatprep.subr.bf16.mxu0 %v655
    %748 = vmatpush1.bf16.msra.mxu0 %v654
    %749 = vmatprep.subr.bf16.mxu0 %v651
    %750 = vmatpush1.bf16.msra.mxu0 %v650
    %751 = vmatprep.subr.bf16.mxu0 %v647
    %752 = vmatpush1.bf16.msra.mxu0 %v646
    %753 = vmatprep.subr.bf16.mxu0 %v643
    %754 = vmatpush1.bf16.msra.mxu0 %v642
    %755 = vmatprep.subr.bf16.mxu0 %v639
    %756 = vmatpush1.bf16.msra.mxu0 %v638
    %757 = vmatprep.subr.bf16.mxu0 0
    %758 = vmatpush2.bf16.msra.mxu0 0
    %759 = vmatprep.subr.bf16.mxu0 0
    %760 = vmatpush2.bf16.msra.mxu0 0
    %761 = vmatprep.subr.bf16.mxu0 0
    %762 = vmatpush2.bf16.msra.mxu0 0
    %763 = vmatprep.subr.bf16.mxu0 0
    %764 = vmatpush2.bf16.msra.mxu0 0
    %765 = vmatprep.subr.bf16.mxu0 0
    %766 = vmatpush2.bf16.msra.mxu0 0
    %767 = vmatprep.subr.bf16.mxu0 0
    %768 = vmatpush2.bf16.msra.mxu0 0
    %769 = vmatprep.subr.bf16.mxu0 0
    %770 = vmatpush2.bf16.msra.mxu0 0
    %771 = vmatprep.subr.bf16.mxu0 0
    %772 = vmatpush2.bf16.msra.mxu0 0
    %773 = vmatprep.mubr.bf16.mxu0 0
    %774 = vmatmul.mubr.bf16.gmra.mxu0 0
    %v775 = vpop.f32.mrf.mxu0
    %v776 = vadd.f32 0.0, %v775
    %v777 = vpop.f32.mrf.mxu0
    %v778 = vadd.f32 0.0, %v777
    %v779 = vpop.f32.mrf.mxu0
    %v780 = vpop.f32.mrf.mxu0
    %781 = vdwg.mxu0
    %v782 = vadd.f32 %v429, %v735
    %v783 = vadd.f32 %v431, %v737
    %v784 = vadd.f32 %v502, %v776
    %v785 = vadd.f32 %v504, %v778
    %v786 = vxor.u32 %v782, 2147483648
    %v787 = vxor.u32 %v783, 2147483648
    %v788 = vxor.u32 %v784, 2147483648
    %v789 = vmul.f32 %v786, 1.442695
    %v790 = vpow.pop %v789
    %v791 = vmul.f32 %v787, 1.442695
    %v792 = vpow.pop %v791
    %v793 = vmul.f32 %v788, 1.442695
    %v794 = vpow.pop %v793
    %v795 = vadd.f32 %v790, 1.0
    %v796 = vadd.f32 %v792, 1.0
    %v797 = vadd.f32 %v794, 1.0
    %v798 = vrcp.pop %v795
    %v799 = vmul.f32 1.0, %v798
    %v800 = vrcp.pop %v796
    %v801 = vmul.f32 1.0, %v800
    %v802 = vrcp.pop %v797
    %v803 = vmul.f32 1.0, %v802
    %v804 = vtanh.pop %v785
    %v805 = vmul.f32 %v801, 0.0
    %v806 = vmul.f32 %v799, %v804
    %v807 = vadd.f32 %v805, %v806
    %v808 = vtanh.pop %v807
    %v809 = vmul.f32 %v803, %v808
    %v810 = vpack.c.bf16 %v809, %v809
    %811 = vmatprep.subr.bf16.mxu0 %v665
    %812 = vmatpush1.bf16.msra.mxu0 %v664
    %813 = vmatprep.subr.bf16.mxu0 %v661
    %814 = vmatpush1.bf16.msra.mxu0 %v660
    %815 = vmatprep.subr.bf16.mxu0 %v657
    %816 = vmatpush1.bf16.msra.mxu0 %v656
    %817 = vmatprep.subr.bf16.mxu0 %v653
    %818 = vmatpush1.bf16.msra.mxu0 %v652
    %819 = vmatprep.subr.bf16.mxu0 %v649
    %820 = vmatpush1.bf16.msra.mxu0 %v648
    %821 = vmatprep.subr.bf16.mxu0 %v645
    %822 = vmatpush1.bf16.msra.mxu0 %v644
    %823 = vmatprep.subr.bf16.mxu0 %v641
    %824 = vmatpush1.bf16.msra.mxu0 %v640
    %825 = vmatprep.subr.bf16.mxu0 %v637
    %826 = vmatpush1.bf16.msra.mxu0 %v636
    %827 = vmatprep.subr.bf16.mxu0 0
    %828 = vmatpush2.bf16.msra.mxu0 0
    %829 = vmatprep.subr.bf16.mxu0 0
    %830 = vmatpush2.bf16.msra.mxu0 0
    %831 = vmatprep.subr.bf16.mxu0 0
    %832 = vmatpush2.bf16.msra.mxu0 0
    %833 = vmatprep.subr.bf16.mxu0 0
    %834 = vmatpush2.bf16.msra.mxu0 0
    %835 = vmatprep.subr.bf16.mxu0 0
    %836 = vmatpush2.bf16.msra.mxu0 0
    %837 = vmatprep.subr.bf16.mxu0 0
    %838 = vmatpush2.bf16.msra.mxu0 0
    %839 = vmatprep.subr.bf16.mxu0 0
    %840 = vmatpush2.bf16.msra.mxu0 0
    %841 = vmatprep.subr.bf16.mxu0 0
    %842 = vmatpush2.bf16.msra.mxu0 0
    %843 = vmatprep.mubr.bf16.mxu0 0
    %844 = vmatmul.mubr.bf16.gmra.mxu0 %v810
    %v845 = vpop.f32.mrf.mxu0
    %v846 = vadd.f32 0.0, %v845
    %v847 = vpop.f32.mrf.mxu0
    %v848 = vadd.f32 0.0, %v847
    %v849 = vpop.f32.mrf.mxu0
    %v850 = vpop.f32.mrf.mxu0
    %851 = vdwg.mxu0
    %852 = vmatprep.subr.bf16.mxu0 %v667
    %853 = vmatpush1.bf16.msra.mxu0 %v666
    %854 = vmatprep.subr.bf16.mxu0 %v663
    %855 = vmatpush1.bf16.msra.mxu0 %v662
    %856 = vmatprep.subr.bf16.mxu0 %v659
    %857 = vmatpush1.bf16.msra.mxu0 %v658
    %858 = vmatprep.subr.bf16.mxu0 %v655
    %859 = vmatpush1.bf16.msra.mxu0 %v654
    %860 = vmatprep.subr.bf16.mxu0 %v651
    %861 = vmatpush1.bf16.msra.mxu0 %v650
    %862 = vmatprep.subr.bf16.mxu0 %v647
    %863 = vmatpush1.bf16.msra.mxu0 %v646
    %864 = vmatprep.subr.bf16.mxu0 %v643
    %865 = vmatpush1.bf16.msra.mxu0 %v642
    %866 = vmatprep.subr.bf16.mxu0 %v639
    %867 = vmatpush1.bf16.msra.mxu0 %v638
    %868 = vmatprep.subr.bf16.mxu0 0
    %869 = vmatpush2.bf16.msra.mxu0 0
    %870 = vmatprep.subr.bf16.mxu0 0
    %871 = vmatpush2.bf16.msra.mxu0 0
    %872 = vmatprep.subr.bf16.mxu0 0
    %873 = vmatpush2.bf16.msra.mxu0 0
    %874 = vmatprep.subr.bf16.mxu0 0
    %875 = vmatpush2.bf16.msra.mxu0 0
    %876 = vmatprep.subr.bf16.mxu0 0
    %877 = vmatpush2.bf16.msra.mxu0 0
    %878 = vmatprep.subr.bf16.mxu0 0
    %879 = vmatpush2.bf16.msra.mxu0 0
    %880 = vmatprep.subr.bf16.mxu0 0
    %881 = vmatpush2.bf16.msra.mxu0 0
    %882 = vmatprep.subr.bf16.mxu0 0
    %883 = vmatpush2.bf16.msra.mxu0 0
    %884 = vmatprep.mubr.bf16.mxu0 0
    %885 = vmatmul.mubr.bf16.gmra.mxu0 %v810
    %v886 = vpop.f32.mrf.mxu0
    %v887 = vadd.f32 0.0, %v886
    %v888 = vpop.f32.mrf.mxu0
    %v889 = vadd.f32 0.0, %v888
    %v890 = vpop.f32.mrf.mxu0
    %v891 = vpop.f32.mrf.mxu0
    %892 = vdwg.mxu0
    %v893 = vadd.f32 %v433, %v846
    %v894 = vadd.f32 %v435, %v848
    %v895 = vadd.f32 %v506, %v887
    %v896 = vadd.f32 %v508, %v889
    %v897 = vxor.u32 %v893, 2147483648
    %v898 = vxor.u32 %v894, 2147483648
    %v899 = vxor.u32 %v895, 2147483648
    %v900 = vmul.f32 %v897, 1.442695
    %v901 = vpow.pop %v900
    %v902 = vmul.f32 %v898, 1.442695
    %v903 = vpow.pop %v902
    %v904 = vmul.f32 %v899, 1.442695
    %v905 = vpow.pop %v904
    %v906 = vadd.f32 %v901, 1.0
    %v907 = vadd.f32 %v903, 1.0
    %v908 = vadd.f32 %v905, 1.0
    %v909 = vrcp.pop %v906
    %v910 = vmul.f32 1.0, %v909
    %v911 = vrcp.pop %v907
    %v912 = vmul.f32 1.0, %v911
    %v913 = vrcp.pop %v908
    %v914 = vmul.f32 1.0, %v913
    %v915 = vtanh.pop %v896
    %v916 = vmul.f32 %v912, %v807
    %v917 = vmul.f32 %v910, %v915
    %v918 = vadd.f32 %v916, %v917
    %v919 = vtanh.pop %v918
    %v920 = vmul.f32 %v914, %v919
    %v921 = vpack.c.bf16 %v920, %v920
    %922 = vmatprep.subr.bf16.mxu0 %v665
    %923 = vmatpush1.bf16.msra.mxu0 %v664
    %924 = vmatprep.subr.bf16.mxu0 %v661
    %925 = vmatpush1.bf16.msra.mxu0 %v660
    %926 = vmatprep.subr.bf16.mxu0 %v657
    %927 = vmatpush1.bf16.msra.mxu0 %v656
    %928 = vmatprep.subr.bf16.mxu0 %v653
    %929 = vmatpush1.bf16.msra.mxu0 %v652
    %930 = vmatprep.subr.bf16.mxu0 %v649
    %931 = vmatpush1.bf16.msra.mxu0 %v648
    %932 = vmatprep.subr.bf16.mxu0 %v645
    %933 = vmatpush1.bf16.msra.mxu0 %v644
    %934 = vmatprep.subr.bf16.mxu0 %v641
    %935 = vmatpush1.bf16.msra.mxu0 %v640
    %936 = vmatprep.subr.bf16.mxu0 %v637
    %937 = vmatpush1.bf16.msra.mxu0 %v636
    %938 = vmatprep.subr.bf16.mxu0 0
    %939 = vmatpush2.bf16.msra.mxu0 0
    %940 = vmatprep.subr.bf16.mxu0 0
    %941 = vmatpush2.bf16.msra.mxu0 0
    %942 = vmatprep.subr.bf16.mxu0 0
    %943 = vmatpush2.bf16.msra.mxu0 0
    %944 = vmatprep.subr.bf16.mxu0 0
    %945 = vmatpush2.bf16.msra.mxu0 0
    %946 = vmatprep.subr.bf16.mxu0 0
    %947 = vmatpush2.bf16.msra.mxu0 0
    %948 = vmatprep.subr.bf16.mxu0 0
    %949 = vmatpush2.bf16.msra.mxu0 0
    %950 = vmatprep.subr.bf16.mxu0 0
    %951 = vmatpush2.bf16.msra.mxu0 0
    %952 = vmatprep.subr.bf16.mxu0 0
    %953 = vmatpush2.bf16.msra.mxu0 0
    %954 = vmatprep.mubr.bf16.mxu0 0
    %955 = vmatmul.mubr.bf16.gmra.mxu0 %v921
    %v956 = vpop.f32.mrf.mxu0
    %v957 = vadd.f32 0.0, %v956
    %v958 = vpop.f32.mrf.mxu0
    %v959 = vadd.f32 0.0, %v958
    %v960 = vpop.f32.mrf.mxu0
    %v961 = vpop.f32.mrf.mxu0
    %962 = vdwg.mxu0
    %963 = vmatprep.subr.bf16.mxu0 %v667
    %964 = vmatpush1.bf16.msra.mxu0 %v666
    %965 = vmatprep.subr.bf16.mxu0 %v663
    %966 = vmatpush1.bf16.msra.mxu0 %v662
    %967 = vmatprep.subr.bf16.mxu0 %v659
    %968 = vmatpush1.bf16.msra.mxu0 %v658
    %969 = vmatprep.subr.bf16.mxu0 %v655
    %970 = vmatpush1.bf16.msra.mxu0 %v654
    %971 = vmatprep.subr.bf16.mxu0 %v651
    %972 = vmatpush1.bf16.msra.mxu0 %v650
    %973 = vmatprep.subr.bf16.mxu0 %v647
    %974 = vmatpush1.bf16.msra.mxu0 %v646
    %975 = vmatprep.subr.bf16.mxu0 %v643
    %976 = vmatpush1.bf16.msra.mxu0 %v642
    %977 = vmatprep.subr.bf16.mxu0 %v639
    %978 = vmatpush1.bf16.msra.mxu0 %v638
    %979 = vmatprep.subr.bf16.mxu0 0
    %980 = vmatpush2.bf16.msra.mxu0 0
    %981 = vmatprep.subr.bf16.mxu0 0
    %982 = vmatpush2.bf16.msra.mxu0 0
    %983 = vmatprep.subr.bf16.mxu0 0
    %984 = vmatpush2.bf16.msra.mxu0 0
    %985 = vmatprep.subr.bf16.mxu0 0
    %986 = vmatpush2.bf16.msra.mxu0 0
    %987 = vmatprep.subr.bf16.mxu0 0
    %988 = vmatpush2.bf16.msra.mxu0 0
    %989 = vmatprep.subr.bf16.mxu0 0
    %990 = vmatpush2.bf16.msra.mxu0 0
    %991 = vmatprep.subr.bf16.mxu0 0
    %992 = vmatpush2.bf16.msra.mxu0 0
    %993 = vmatprep.subr.bf16.mxu0 0
    %994 = vmatpush2.bf16.msra.mxu0 0
    %995 = vmatprep.mubr.bf16.mxu0 0
    %996 = vmatmul.mubr.bf16.gmra.mxu0 %v921
    %v997 = vpop.f32.mrf.mxu0
    %v998 = vadd.f32 0.0, %v997
    %v999 = vpop.f32.mrf.mxu0
    %v1000 = vadd.f32 0.0, %v999
    %v1001 = vpop.f32.mrf.mxu0
    %v1002 = vpop.f32.mrf.mxu0
    %1003 = vdwg.mxu0
    %v1004 = vadd.f32 %v439, %v957
    %v1005 = vadd.f32 %v441, %v959
    %v1006 = vadd.f32 %v512, %v998
    %v1007 = vadd.f32 %v514, %v1000
    %v1008 = vxor.u32 %v1004, 2147483648
    %v1009 = vxor.u32 %v1005, 2147483648
    %v1010 = vxor.u32 %v1006, 2147483648
    %v1011 = vmul.f32 %v1008, 1.442695
    %v1012 = vpow.pop %v1011
    %v1013 = vmul.f32 %v1009, 1.442695
    %v1014 = vpow.pop %v1013
    %v1015 = vmul.f32 %v1010, 1.442695
    %v1016 = vpow.pop %v1015
    %v1017 = vadd.f32 %v1012, 1.0
    %v1018 = vadd.f32 %v1014, 1.0
    %v1019 = vadd.f32 %v1016, 1.0
    %v1020 = vrcp.pop %v1017
    %v1021 = vmul.f32 1.0, %v1020
    %v1022 = vrcp.pop %v1018
    %v1023 = vmul.f32 1.0, %v1022
    %v1024 = vrcp.pop %v1019
    %v1025 = vmul.f32 1.0, %v1024
    %v1026 = vtanh.pop %v1007
    %v1027 = vmul.f32 %v1023, %v918
    %v1028 = vmul.f32 %v1021, %v1026
    %v1029 = vadd.f32 %v1027, %v1028
    %v1030 = vtanh.pop %v1029
    %v1031 = vmul.f32 %v1025, %v1030
    %v1032 = vpack.c.bf16 %v1031, %v1031
    %1033 = vmatprep.subr.bf16.mxu0 %v665
    %1034 = vmatpush1.bf16.msra.mxu0 %v664
    %1035 = vmatprep.subr.bf16.mxu0 %v661
    %1036 = vmatpush1.bf16.msra.mxu0 %v660
    %1037 = vmatprep.subr.bf16.mxu0 %v657
    %1038 = vmatpush1.bf16.msra.mxu0 %v656
    %1039 = vmatprep.subr.bf16.mxu0 %v653
    %1040 = vmatpush1.bf16.msra.mxu0 %v652
    %1041 = vmatprep.subr.bf16.mxu0 %v649
    %1042 = vmatpush1.bf16.msra.mxu0 %v648
    %1043 = vmatprep.subr.bf16.mxu0 %v645
    %1044 = vmatpush1.bf16.msra.mxu0 %v644
    %1045 = vmatprep.subr.bf16.mxu0 %v641
    %1046 = vmatpush1.bf16.msra.mxu0 %v640
    %1047 = vmatprep.subr.bf16.mxu0 %v637
    %1048 = vmatpush1.bf16.msra.mxu0 %v636
    %1049 = vmatprep.subr.bf16.mxu0 0
    %1050 = vmatpush2.bf16.msra.mxu0 0
    %1051 = vmatprep.subr.bf16.mxu0 0
    %1052 = vmatpush2.bf16.msra.mxu0 0
    %1053 = vmatprep.subr.bf16.mxu0 0
    %1054 = vmatpush2.bf16.msra.mxu0 0
    %1055 = vmatprep.subr.bf16.mxu0 0
    %1056 = vmatpush2.bf16.msra.mxu0 0
    %1057 = vmatprep.subr.bf16.mxu0 0
    %1058 = vmatpush2.bf16.msra.mxu0 0
    %1059 = vmatprep.subr.bf16.mxu0 0
    %1060 = vmatpush2.bf16.msra.mxu0 0
    %1061 = vmatprep.subr.bf16.mxu0 0
    %1062 = vmatpush2.bf16.msra.mxu0 0
    %1063 = vmatprep.subr.bf16.mxu0 0
    %1064 = vmatpush2.bf16.msra.mxu0 0
    %1065 = vmatprep.mubr.bf16.mxu0 0
    %1066 = vmatmul.mubr.bf16.gmra.mxu0 %v1032
    %v1067 = vpop.f32.mrf.mxu0
    %v1068 = vadd.f32 0.0, %v1067
    %v1069 = vpop.f32.mrf.mxu0
    %v1070 = vadd.f32 0.0, %v1069
    %v1071 = vpop.f32.mrf.mxu0
    %v1072 = vpop.f32.mrf.mxu0
    %1073 = vdwg.mxu0
    %1074 = vmatprep.subr.bf16.mxu0 %v667
    %1075 = vmatpush1.bf16.msra.mxu0 %v666
    %1076 = vmatprep.subr.bf16.mxu0 %v663
    %1077 = vmatpush1.bf16.msra.mxu0 %v662
    %1078 = vmatprep.subr.bf16.mxu0 %v659
    %1079 = vmatpush1.bf16.msra.mxu0 %v658
    %1080 = vmatprep.subr.bf16.mxu0 %v655
    %1081 = vmatpush1.bf16.msra.mxu0 %v654
    %1082 = vmatprep.subr.bf16.mxu0 %v651
    %1083 = vmatpush1.bf16.msra.mxu0 %v650
    %1084 = vmatprep.subr.bf16.mxu0 %v647
    %1085 = vmatpush1.bf16.msra.mxu0 %v646
    %1086 = vmatprep.subr.bf16.mxu0 %v643
    %1087 = vmatpush1.bf16.msra.mxu0 %v642
    %1088 = vmatprep.subr.bf16.mxu0 %v639
    %1089 = vmatpush1.bf16.msra.mxu0 %v638
    %1090 = vmatprep.subr.bf16.mxu0 0
    %1091 = vmatpush2.bf16.msra.mxu0 0
    %1092 = vmatprep.subr.bf16.mxu0 0
    %1093 = vmatpush2.bf16.msra.mxu0 0
    %1094 = vmatprep.subr.bf16.mxu0 0
    %1095 = vmatpush2.bf16.msra.mxu0 0
    %1096 = vmatprep.subr.bf16.mxu0 0
    %1097 = vmatpush2.bf16.msra.mxu0 0
    %1098 = vmatprep.subr.bf16.mxu0 0
    %1099 = vmatpush2.bf16.msra.mxu0 0
    %1100 = vmatprep.subr.bf16.mxu0 0
    %1101 = vmatpush2.bf16.msra.mxu0 0
    %1102 = vmatprep.subr.bf16.mxu0 0
    %1103 = vmatpush2.bf16.msra.mxu0 0
    %1104 = vmatprep.subr.bf16.mxu0 0
    %1105 = vmatpush2.bf16.msra.mxu0 0
    %1106 = vmatprep.mubr.bf16.mxu0 0
    %1107 = vmatmul.mubr.bf16.gmra.mxu0 %v1032
    %v1108 = vpop.f32.mrf.mxu0
    %v1109 = vadd.f32 0.0, %v1108
    %v1110 = vpop.f32.mrf.mxu0
    %v1111 = vadd.f32 0.0, %v1110
    %v1112 = vpop.f32.mrf.mxu0
    %v1113 = vpop.f32.mrf.mxu0
    %1114 = vdwg.mxu0
    %v1115 = vadd.f32 %v443, %v1068
    %v1116 = vadd.f32 %v445, %v1070
    %v1117 = vadd.f32 %v516, %v1109
    %v1118 = vadd.f32 %v518, %v1111
    %v1119 = vxor.u32 %v1115, 2147483648
    %v1120 = vxor.u32 %v1116, 2147483648
    %v1121 = vxor.u32 %v1117, 2147483648
    %v1122 = vmul.f32 %v1119, 1.442695
    %v1123 = vpow.pop %v1122
    %v1124 = vmul.f32 %v1120, 1.442695
    %v1125 = vpow.pop %v1124
    %v1126 = vmul.f32 %v1121, 1.442695
    %v1127 = vpow.pop %v1126
    %v1128 = vadd.f32 %v1123, 1.0
    %v1129 = vadd.f32 %v1125, 1.0
    %v1130 = vadd.f32 %v1127, 1.0
    %v1131 = vrcp.pop %v1128
    %v1132 = vmul.f32 1.0, %v1131
    %v1133 = vrcp.pop %v1129
    %v1134 = vmul.f32 1.0, %v1133
    %v1135 = vrcp.pop %v1130
    %v1136 = vmul.f32 1.0, %v1135
    %v1137 = vtanh.pop %v1118
    %v1138 = vmul.f32 %v1134, %v1029
    %v1139 = vmul.f32 %v1132, %v1137
    %v1140 = vadd.f32 %v1138, %v1139
    %v1141 = vtanh.pop %v1140
    %v1142 = vmul.f32 %v1136, %v1141
    %v1143 = vpack.c.bf16 %v1142, %v1142
    %1144 = vmatprep.subr.bf16.mxu0 %v665
    %1145 = vmatpush1.bf16.msra.mxu0 %v664
    %1146 = vmatprep.subr.bf16.mxu0 %v661
    %1147 = vmatpush1.bf16.msra.mxu0 %v660
    %1148 = vmatprep.subr.bf16.mxu0 %v657
    %1149 = vmatpush1.bf16.msra.mxu0 %v656
    %1150 = vmatprep.subr.bf16.mxu0 %v653
    %1151 = vmatpush1.bf16.msra.mxu0 %v652
    %1152 = vmatprep.subr.bf16.mxu0 %v649
    %1153 = vmatpush1.bf16.msra.mxu0 %v648
    %1154 = vmatprep.subr.bf16.mxu0 %v645
    %1155 = vmatpush1.bf16.msra.mxu0 %v644
    %1156 = vmatprep.subr.bf16.mxu0 %v641
    %1157 = vmatpush1.bf16.msra.mxu0 %v640
    %1158 = vmatprep.subr.bf16.mxu0 %v637
    %1159 = vmatpush1.bf16.msra.mxu0 %v636
    %1160 = vmatprep.subr.bf16.mxu0 0
    %1161 = vmatpush2.bf16.msra.mxu0 0
    %1162 = vmatprep.subr.bf16.mxu0 0
    %1163 = vmatpush2.bf16.msra.mxu0 0
    %1164 = vmatprep.subr.bf16.mxu0 0
    %1165 = vmatpush2.bf16.msra.mxu0 0
    %1166 = vmatprep.subr.bf16.mxu0 0
    %1167 = vmatpush2.bf16.msra.mxu0 0
    %1168 = vmatprep.subr.bf16.mxu0 0
    %1169 = vmatpush2.bf16.msra.mxu0 0
    %1170 = vmatprep.subr.bf16.mxu0 0
    %1171 = vmatpush2.bf16.msra.mxu0 0
    %1172 = vmatprep.subr.bf16.mxu0 0
    %1173 = vmatpush2.bf16.msra.mxu0 0
    %1174 = vmatprep.subr.bf16.mxu0 0
    %1175 = vmatpush2.bf16.msra.mxu0 0
    %1176 = vmatprep.mubr.bf16.mxu0 0
    %1177 = vmatmul.mubr.bf16.gmra.mxu0 %v1143
    %v1178 = vpop.f32.mrf.mxu0
    %v1179 = vadd.f32 0.0, %v1178
    %v1180 = vpop.f32.mrf.mxu0
    %v1181 = vadd.f32 0.0, %v1180
    %v1182 = vpop.f32.mrf.mxu0
    %v1183 = vpop.f32.mrf.mxu0
    %1184 = vdwg.mxu0
    %1185 = vmatprep.subr.bf16.mxu0 %v667
    %1186 = vmatpush1.bf16.msra.mxu0 %v666
    %1187 = vmatprep.subr.bf16.mxu0 %v663
    %1188 = vmatpush1.bf16.msra.mxu0 %v662
    %1189 = vmatprep.subr.bf16.mxu0 %v659
    %1190 = vmatpush1.bf16.msra.mxu0 %v658
    %1191 = vmatprep.subr.bf16.mxu0 %v655
    %1192 = vmatpush1.bf16.msra.mxu0 %v654
    %1193 = vmatprep.subr.bf16.mxu0 %v651
    %1194 = vmatpush1.bf16.msra.mxu0 %v650
    %1195 = vmatprep.subr.bf16.mxu0 %v647
    %1196 = vmatpush1.bf16.msra.mxu0 %v646
    %1197 = vmatprep.subr.bf16.mxu0 %v643
    %1198 = vmatpush1.bf16.msra.mxu0 %v642
    %1199 = vmatprep.subr.bf16.mxu0 %v639
    %1200 = vmatpush1.bf16.msra.mxu0 %v638
    %1201 = vmatprep.subr.bf16.mxu0 0
    %1202 = vmatpush2.bf16.msra.mxu0 0
    %1203 = vmatprep.subr.bf16.mxu0 0
    %1204 = vmatpush2.bf16.msra.mxu0 0
    %1205 = vmatprep.subr.bf16.mxu0 0
    %1206 = vmatpush2.bf16.msra.mxu0 0
    %1207 = vmatprep.subr.bf16.mxu0 0
    %1208 = vmatpush2.bf16.msra.mxu0 0
    %1209 = vmatprep.subr.bf16.mxu0 0
    %1210 = vmatpush2.bf16.msra.mxu0 0
    %1211 = vmatprep.subr.bf16.mxu0 0
    %1212 = vmatpush2.bf16.msra.mxu0 0
    %1213 = vmatprep.subr.bf16.mxu0 0
    %1214 = vmatpush2.bf16.msra.mxu0 0
    %1215 = vmatprep.subr.bf16.mxu0 0
    %1216 = vmatpush2.bf16.msra.mxu0 0
    %1217 = vmatprep.mubr.bf16.mxu0 0
    %1218 = vmatmul.mubr.bf16.gmra.mxu0 %v1143
    %v1219 = vpop.f32.mrf.mxu0
    %v1220 = vadd.f32 0.0, %v1219
    %v1221 = vpop.f32.mrf.mxu0
    %v1222 = vadd.f32 0.0, %v1221
    %v1223 = vpop.f32.mrf.mxu0
    %v1224 = vpop.f32.mrf.mxu0
    %1225 = vdwg.mxu0
    %v1226 = vadd.f32 %v449, %v1179
    %v1227 = vadd.f32 %v451, %v1181
    %v1228 = vadd.f32 %v522, %v1220
    %v1229 = vadd.f32 %v524, %v1222
    %v1230 = vxor.u32 %v1226, 2147483648
    %v1231 = vxor.u32 %v1227, 2147483648
    %v1232 = vxor.u32 %v1228, 2147483648
    %v1233 = vmul.f32 %v1230, 1.442695
    %v1234 = vpow.pop %v1233
    %v1235 = vmul.f32 %v1231, 1.442695
    %v1236 = vpow.pop %v1235
    %v1237 = vmul.f32 %v1232, 1.442695
    %v1238 = vpow.pop %v1237
    %v1239 = vadd.f32 %v1234, 1.0
    %v1240 = vadd.f32 %v1236, 1.0
    %v1241 = vadd.f32 %v1238, 1.0
    %v1242 = vrcp.pop %v1239
    %v1243 = vmul.f32 1.0, %v1242
    %v1244 = vrcp.pop %v1240
    %v1245 = vmul.f32 1.0, %v1244
    %v1246 = vrcp.pop %v1241
    %v1247 = vmul.f32 1.0, %v1246
    %v1248 = vtanh.pop %v1229
    %v1249 = vmul.f32 %v1245, %v1140
    %v1250 = vmul.f32 %v1243, %v1248
    %v1251 = vadd.f32 %v1249, %v1250
    %v1252 = vtanh.pop %v1251
    %v1253 = vmul.f32 %v1247, %v1252
    %v1254 = vpack.c.bf16 %v1253, %v1253
    %1255 = vmatprep.subr.bf16.mxu0 %v665
    %1256 = vmatpush1.bf16.msra.mxu0 %v664
    %1257 = vmatprep.subr.bf16.mxu0 %v661
    %1258 = vmatpush1.bf16.msra.mxu0 %v660
    %1259 = vmatprep.subr.bf16.mxu0 %v657
    %1260 = vmatpush1.bf16.msra.mxu0 %v656
    %1261 = vmatprep.subr.bf16.mxu0 %v653
    %1262 = vmatpush1.bf16.msra.mxu0 %v652
    %1263 = vmatprep.subr.bf16.mxu0 %v649
    %1264 = vmatpush1.bf16.msra.mxu0 %v648
    %1265 = vmatprep.subr.bf16.mxu0 %v645
    %1266 = vmatpush1.bf16.msra.mxu0 %v644
    %1267 = vmatprep.subr.bf16.mxu0 %v641
    %1268 = vmatpush1.bf16.msra.mxu0 %v640
    %1269 = vmatprep.subr.bf16.mxu0 %v637
    %1270 = vmatpush1.bf16.msra.mxu0 %v636
    %1271 = vmatprep.subr.bf16.mxu0 0
    %1272 = vmatpush2.bf16.msra.mxu0 0
    %1273 = vmatprep.subr.bf16.mxu0 0
    %1274 = vmatpush2.bf16.msra.mxu0 0
    %1275 = vmatprep.subr.bf16.mxu0 0
    %1276 = vmatpush2.bf16.msra.mxu0 0
    %1277 = vmatprep.subr.bf16.mxu0 0
    %1278 = vmatpush2.bf16.msra.mxu0 0
    %1279 = vmatprep.subr.bf16.mxu0 0
    %1280 = vmatpush2.bf16.msra.mxu0 0
    %1281 = vmatprep.subr.bf16.mxu0 0
    %1282 = vmatpush2.bf16.msra.mxu0 0
    %1283 = vmatprep.subr.bf16.mxu0 0
    %1284 = vmatpush2.bf16.msra.mxu0 0
    %1285 = vmatprep.subr.bf16.mxu0 0
    %1286 = vmatpush2.bf16.msra.mxu0 0
    %1287 = vmatprep.mubr.bf16.mxu0 0
    %1288 = vmatmul.mubr.bf16.gmra.mxu0 %v1254
    %v1289 = vpop.f32.mrf.mxu0
    %v1290 = vadd.f32 0.0, %v1289
    %v1291 = vpop.f32.mrf.mxu0
    %v1292 = vadd.f32 0.0, %v1291
    %v1293 = vpop.f32.mrf.mxu0
    %v1294 = vpop.f32.mrf.mxu0
    %1295 = vdwg.mxu0
    %1296 = vmatprep.subr.bf16.mxu0 %v667
    %1297 = vmatpush1.bf16.msra.mxu0 %v666
    %1298 = vmatprep.subr.bf16.mxu0 %v663
    %1299 = vmatpush1.bf16.msra.mxu0 %v662
    %1300 = vmatprep.subr.bf16.mxu0 %v659
    %1301 = vmatpush1.bf16.msra.mxu0 %v658
    %1302 = vmatprep.subr.bf16.mxu0 %v655
    %1303 = vmatpush1.bf16.msra.mxu0 %v654
    %1304 = vmatprep.subr.bf16.mxu0 %v651
    %1305 = vmatpush1.bf16.msra.mxu0 %v650
    %1306 = vmatprep.subr.bf16.mxu0 %v647
    %1307 = vmatpush1.bf16.msra.mxu0 %v646
    %1308 = vmatprep.subr.bf16.mxu0 %v643
    %1309 = vmatpush1.bf16.msra.mxu0 %v642
    %1310 = vmatprep.subr.bf16.mxu0 %v639
    %1311 = vmatpush1.bf16.msra.mxu0 %v638
    %1312 = vmatprep.subr.bf16.mxu0 0
    %1313 = vmatpush2.bf16.msra.mxu0 0
    %1314 = vmatprep.subr.bf16.mxu0 0
    %1315 = vmatpush2.bf16.msra.mxu0 0
    %1316 = vmatprep.subr.bf16.mxu0 0
    %1317 = vmatpush2.bf16.msra.mxu0 0
    %1318 = vmatprep.subr.bf16.mxu0 0
    %1319 = vmatpush2.bf16.msra.mxu0 0
    %1320 = vmatprep.subr.bf16.mxu0 0
    %1321 = vmatpush2.bf16.msra.mxu0 0
    %1322 = vmatprep.subr.bf16.mxu0 0
    %1323 = vmatpush2.bf16.msra.mxu0 0
    %1324 = vmatprep.subr.bf16.mxu0 0
    %1325 = vmatpush2.bf16.msra.mxu0 0
    %1326 = vmatprep.subr.bf16.mxu0 0
    %1327 = vmatpush2.bf16.msra.mxu0 0
    %1328 = vmatprep.mubr.bf16.mxu0 0
    %1329 = vmatmul.mubr.bf16.gmra.mxu0 %v1254
    %v1330 = vpop.f32.mrf.mxu0
    %v1331 = vadd.f32 0.0, %v1330
    %v1332 = vpop.f32.mrf.mxu0
    %v1333 = vadd.f32 0.0, %v1332
    %v1334 = vpop.f32.mrf.mxu0
    %v1335 = vpop.f32.mrf.mxu0
    %1336 = vdwg.mxu0
    %v1337 = vadd.f32 %v453, %v1290
    %v1338 = vadd.f32 %v455, %v1292
    %v1339 = vadd.f32 %v526, %v1331
    %v1340 = vadd.f32 %v528, %v1333
    %v1341 = vxor.u32 %v1337, 2147483648
    %v1342 = vxor.u32 %v1338, 2147483648
    %v1343 = vxor.u32 %v1339, 2147483648
    %v1344 = vmul.f32 %v1341, 1.442695
    %v1345 = vpow.pop %v1344
    %v1346 = vmul.f32 %v1342, 1.442695
    %v1347 = vpow.pop %v1346
    %v1348 = vmul.f32 %v1343, 1.442695
    %v1349 = vpow.pop %v1348
    %v1350 = vadd.f32 %v1345, 1.0
    %v1351 = vadd.f32 %v1347, 1.0
    %v1352 = vadd.f32 %v1349, 1.0
    %v1353 = vrcp.pop %v1350
    %v1354 = vmul.f32 1.0, %v1353
    %v1355 = vrcp.pop %v1351
    %v1356 = vmul.f32 1.0, %v1355
    %v1357 = vrcp.pop %v1352
    %v1358 = vmul.f32 1.0, %v1357
    %v1359 = vtanh.pop %v1340
    %v1360 = vmul.f32 %v1356, %v1251
    %v1361 = vmul.f32 %v1354, %v1359
    %v1362 = vadd.f32 %v1360, %v1361
    %v1363 = vtanh.pop %v1362
    %v1364 = vmul.f32 %v1358, %v1363
    %v1365 = vpack.c.bf16 %v1364, %v1364
    %1366 = vmatprep.subr.bf16.mxu0 %v665
    %1367 = vmatpush1.bf16.msra.mxu0 %v664
    %1368 = vmatprep.subr.bf16.mxu0 %v661
    %1369 = vmatpush1.bf16.msra.mxu0 %v660
    %1370 = vmatprep.subr.bf16.mxu0 %v657
    %1371 = vmatpush1.bf16.msra.mxu0 %v656
    %1372 = vmatprep.subr.bf16.mxu0 %v653
    %1373 = vmatpush1.bf16.msra.mxu0 %v652
    %1374 = vmatprep.subr.bf16.mxu0 %v649
    %1375 = vmatpush1.bf16.msra.mxu0 %v648
    %1376 = vmatprep.subr.bf16.mxu0 %v645
    %1377 = vmatpush1.bf16.msra.mxu0 %v644
    %1378 = vmatprep.subr.bf16.mxu0 %v641
    %1379 = vmatpush1.bf16.msra.mxu0 %v640
    %1380 = vmatprep.subr.bf16.mxu0 %v637
    %1381 = vmatpush1.bf16.msra.mxu0 %v636
    %1382 = vmatprep.subr.bf16.mxu0 0
    %1383 = vmatpush2.bf16.msra.mxu0 0
    %1384 = vmatprep.subr.bf16.mxu0 0
    %1385 = vmatpush2.bf16.msra.mxu0 0
    %1386 = vmatprep.subr.bf16.mxu0 0
    %1387 = vmatpush2.bf16.msra.mxu0 0
    %1388 = vmatprep.subr.bf16.mxu0 0
    %1389 = vmatpush2.bf16.msra.mxu0 0
    %1390 = vmatprep.subr.bf16.mxu0 0
    %1391 = vmatpush2.bf16.msra.mxu0 0
    %1392 = vmatprep.subr.bf16.mxu0 0
    %1393 = vmatpush2.bf16.msra.mxu0 0
    %1394 = vmatprep.subr.bf16.mxu0 0
    %1395 = vmatpush2.bf16.msra.mxu0 0
    %1396 = vmatprep.subr.bf16.mxu0 0
    %1397 = vmatpush2.bf16.msra.mxu0 0
    %1398 = vmatprep.mubr.bf16.mxu0 0
    %1399 = vmatmul.mubr.bf16.gmra.mxu0 %v1365
    %v1400 = vpop.f32.mrf.mxu0
    %v1401 = vadd.f32 0.0, %v1400
    %v1402 = vpop.f32.mrf.mxu0
    %v1403 = vadd.f32 0.0, %v1402
    %v1404 = vpop.f32.mrf.mxu0
    %v1405 = vpop.f32.mrf.mxu0
    %1406 = vdwg.mxu0
    %1407 = vmatprep.subr.bf16.mxu0 %v667
    %1408 = vmatpush1.bf16.msra.mxu0 %v666
    %1409 = vmatprep.subr.bf16.mxu0 %v663
    %1410 = vmatpush1.bf16.msra.mxu0 %v662
    %1411 = vmatprep.subr.bf16.mxu0 %v659
    %1412 = vmatpush1.bf16.msra.mxu0 %v658
    %1413 = vmatprep.subr.bf16.mxu0 %v655
    %1414 = vmatpush1.bf16.msra.mxu0 %v654
    %1415 = vmatprep.subr.bf16.mxu0 %v651
    %1416 = vmatpush1.bf16.msra.mxu0 %v650
    %1417 = vmatprep.subr.bf16.mxu0 %v647
    %1418 = vmatpush1.bf16.msra.mxu0 %v646
    %1419 = vmatprep.subr.bf16.mxu0 %v643
    %1420 = vmatpush1.bf16.msra.mxu0 %v642
    %1421 = vmatprep.subr.bf16.mxu0 %v639
    %1422 = vmatpush1.bf16.msra.mxu0 %v638
    %1423 = vmatprep.subr.bf16.mxu0 0
    %1424 = vmatpush2.bf16.msra.mxu0 0
    %1425 = vmatprep.subr.bf16.mxu0 0
    %1426 = vmatpush2.bf16.msra.mxu0 0
    %1427 = vmatprep.subr.bf16.mxu0 0
    %1428 = vmatpush2.bf16.msra.mxu0 0
    %1429 = vmatprep.subr.bf16.mxu0 0
    %1430 = vmatpush2.bf16.msra.mxu0 0
    %1431 = vmatprep.subr.bf16.mxu0 0
    %1432 = vmatpush2.bf16.msra.mxu0 0
    %1433 = vmatprep.subr.bf16.mxu0 0
    %1434 = vmatpush2.bf16.msra.mxu0 0
    %1435 = vmatprep.subr.bf16.mxu0 0
    %1436 = vmatpush2.bf16.msra.mxu0 0
    %1437 = vmatprep.subr.bf16.mxu0 0
    %1438 = vmatpush2.bf16.msra.mxu0 0
    %1439 = vmatprep.mubr.bf16.mxu0 0
    %1440 = vmatmul.mubr.bf16.gmra.mxu0 %v1365
    %v1441 = vpop.f32.mrf.mxu0
    %v1442 = vadd.f32 0.0, %v1441
    %v1443 = vpop.f32.mrf.mxu0
    %v1444 = vadd.f32 0.0, %v1443
    %v1445 = vpop.f32.mrf.mxu0
    %v1446 = vpop.f32.mrf.mxu0
    %1447 = vdwg.mxu0
    %v1448 = vadd.f32 %v459, %v1401
    %v1449 = vadd.f32 %v461, %v1403
    %v1450 = vadd.f32 %v532, %v1442
    %v1451 = vadd.f32 %v534, %v1444
    %v1452 = vxor.u32 %v1448, 2147483648
    %v1453 = vxor.u32 %v1449, 2147483648
    %v1454 = vxor.u32 %v1450, 2147483648
    %v1455 = vmul.f32 %v1452, 1.442695
    %v1456 = vpow.pop %v1455
    %v1457 = vmul.f32 %v1453, 1.442695
    %v1458 = vpow.pop %v1457
    %v1459 = vmul.f32 %v1454, 1.442695
    %v1460 = vpow.pop %v1459
    %v1461 = vadd.f32 %v1456, 1.0
    %v1462 = vadd.f32 %v1458, 1.0
    %v1463 = vadd.f32 %v1460, 1.0
    %v1464 = vrcp.pop %v1461
    %v1465 = vmul.f32 1.0, %v1464
    %v1466 = vrcp.pop %v1462
    %v1467 = vmul.f32 1.0, %v1466
    %v1468 = vrcp.pop %v1463
    %v1469 = vmul.f32 1.0, %v1468
    %v1470 = vtanh.pop %v1451
    %v1471 = vmul.f32 %v1467, %v1362
    %v1472 = vmul.f32 %v1465, %v1470
    %v1473 = vadd.f32 %v1471, %v1472
    %v1474 = vtanh.pop %v1473
    %v1475 = vmul.f32 %v1469, %v1474
    %v1476 = vpack.c.bf16 %v1475, %v1475
    %1477 = vmatprep.subr.bf16.mxu0 %v665
    %1478 = vmatpush1.bf16.msra.mxu0 %v664
    %1479 = vmatprep.subr.bf16.mxu0 %v661
    %1480 = vmatpush1.bf16.msra.mxu0 %v660
    %1481 = vmatprep.subr.bf16.mxu0 %v657
    %1482 = vmatpush1.bf16.msra.mxu0 %v656
    %1483 = vmatprep.subr.bf16.mxu0 %v653
    %1484 = vmatpush1.bf16.msra.mxu0 %v652
    %1485 = vmatprep.subr.bf16.mxu0 %v649
    %1486 = vmatpush1.bf16.msra.mxu0 %v648
    %1487 = vmatprep.subr.bf16.mxu0 %v645
    %1488 = vmatpush1.bf16.msra.mxu0 %v644
    %1489 = vmatprep.subr.bf16.mxu0 %v641
    %1490 = vmatpush1.bf16.msra.mxu0 %v640
    %1491 = vmatprep.subr.bf16.mxu0 %v637
    %1492 = vmatpush1.bf16.msra.mxu0 %v636
    %1493 = vmatprep.subr.bf16.mxu0 0
    %1494 = vmatpush2.bf16.msra.mxu0 0
    %1495 = vmatprep.subr.bf16.mxu0 0
    %1496 = vmatpush2.bf16.msra.mxu0 0
    %1497 = vmatprep.subr.bf16.mxu0 0
    %1498 = vmatpush2.bf16.msra.mxu0 0
    %1499 = vmatprep.subr.bf16.mxu0 0
    %1500 = vmatpush2.bf16.msra.mxu0 0
    %1501 = vmatprep.subr.bf16.mxu0 0
    %1502 = vmatpush2.bf16.msra.mxu0 0
    %1503 = vmatprep.subr.bf16.mxu0 0
    %1504 = vmatpush2.bf16.msra.mxu0 0
    %1505 = vmatprep.subr.bf16.mxu0 0
    %1506 = vmatpush2.bf16.msra.mxu0 0
    %1507 = vmatprep.subr.bf16.mxu0 0
    %1508 = vmatpush2.bf16.msra.mxu0 0
    %1509 = vmatprep.mubr.bf16.mxu0 0
    %1510 = vmatmul.mubr.bf16.gmra.mxu0 %v1476
    %v1511 = vpop.f32.mrf.mxu0
    %v1512 = vadd.f32 0.0, %v1511
    %v1513 = vpop.f32.mrf.mxu0
    %v1514 = vadd.f32 0.0, %v1513
    %v1515 = vpop.f32.mrf.mxu0
    %v1516 = vpop.f32.mrf.mxu0
    %1517 = vdwg.mxu0
    %1518 = vmatprep.subr.bf16.mxu0 %v667
    %1519 = vmatpush1.bf16.msra.mxu0 %v666
    %1520 = vmatprep.subr.bf16.mxu0 %v663
    %1521 = vmatpush1.bf16.msra.mxu0 %v662
    %1522 = vmatprep.subr.bf16.mxu0 %v659
    %1523 = vmatpush1.bf16.msra.mxu0 %v658
    %1524 = vmatprep.subr.bf16.mxu0 %v655
    %1525 = vmatpush1.bf16.msra.mxu0 %v654
    %1526 = vmatprep.subr.bf16.mxu0 %v651
    %1527 = vmatpush1.bf16.msra.mxu0 %v650
    %1528 = vmatprep.subr.bf16.mxu0 %v647
    %1529 = vmatpush1.bf16.msra.mxu0 %v646
    %1530 = vmatprep.subr.bf16.mxu0 %v643
    %1531 = vmatpush1.bf16.msra.mxu0 %v642
    %1532 = vmatprep.subr.bf16.mxu0 %v639
    %1533 = vmatpush1.bf16.msra.mxu0 %v638
    %1534 = vmatprep.subr.bf16.mxu0 0
    %1535 = vmatpush2.bf16.msra.mxu0 0
    %1536 = vmatprep.subr.bf16.mxu0 0
    %1537 = vmatpush2.bf16.msra.mxu0 0
    %1538 = vmatprep.subr.bf16.mxu0 0
    %1539 = vmatpush2.bf16.msra.mxu0 0
    %1540 = vmatprep.subr.bf16.mxu0 0
    %1541 = vmatpush2.bf16.msra.mxu0 0
    %1542 = vmatprep.subr.bf16.mxu0 0
    %1543 = vmatpush2.bf16.msra.mxu0 0
    %1544 = vmatprep.subr.bf16.mxu0 0
    %1545 = vmatpush2.bf16.msra.mxu0 0
    %1546 = vmatprep.subr.bf16.mxu0 0
    %1547 = vmatpush2.bf16.msra.mxu0 0
    %1548 = vmatprep.subr.bf16.mxu0 0
    %1549 = vmatpush2.bf16.msra.mxu0 0
    %1550 = vmatprep.mubr.bf16.mxu0 0
    %1551 = vmatmul.mubr.bf16.gmra.mxu0 %v1476
    %v1552 = vpop.f32.mrf.mxu0
    %v1553 = vadd.f32 0.0, %v1552
    %v1554 = vpop.f32.mrf.mxu0
    %v1555 = vadd.f32 0.0, %v1554
    %v1556 = vpop.f32.mrf.mxu0
    %v1557 = vpop.f32.mrf.mxu0
    %1558 = vdwg.mxu0
    %v1559 = vadd.f32 %v463, %v1512
    %v1560 = vadd.f32 %v465, %v1514
    %v1561 = vadd.f32 %v536, %v1553
    %v1562 = vadd.f32 %v538, %v1555
    %v1563 = vxor.u32 %v1559, 2147483648
    %v1564 = vxor.u32 %v1560, 2147483648
    %v1565 = vxor.u32 %v1561, 2147483648
    %v1566 = vmul.f32 %v1563, 1.442695
    %v1567 = vpow.pop %v1566
    %v1568 = vmul.f32 %v1564, 1.442695
    %v1569 = vpow.pop %v1568
    %v1570 = vmul.f32 %v1565, 1.442695
    %v1571 = vpow.pop %v1570
    %v1572 = vadd.f32 %v1567, 1.0
    %v1573 = vadd.f32 %v1569, 1.0
    %v1574 = vadd.f32 %v1571, 1.0
    %v1575 = vrcp.pop %v1572
    %v1576 = vmul.f32 1.0, %v1575
    %v1577 = vrcp.pop %v1573
    %v1578 = vmul.f32 1.0, %v1577
    %v1579 = vrcp.pop %v1574
    %v1580 = vmul.f32 1.0, %v1579
    %v1581 = vtanh.pop %v1562
    %v1582 = vmul.f32 %v1578, %v1473
    %v1583 = vmul.f32 %v1576, %v1581
    %v1584 = vadd.f32 %v1582, %v1583
    %v1585 = vtanh.pop %v1584
    %v1586 = vmul.f32 %v1580, %v1585
    %v1587 = vpack.c.bf16 %v920, %v809
    %v1588 = vpack.c.bf16 %v1142, %v1031
    %v1589 = vpack.c.bf16 %v1364, %v1253
    %v1590 = vpack.c.bf16 %v1586, %v1475
    %v1591 = vld [vmem:[#allocation8] sm:$0xff]
    %v1592 = vld [vmem:[#allocation8 + $0x8] sm:$0xff]
    %v1593 = vld [vmem:[#allocation8 + $0x10] sm:$0xff]
    %v1594 = vld [vmem:[#allocation8 + $0x18] sm:$0xff]
    %v1595 = vld [vmem:[#allocation8 + $0x20] sm:$0xff]
    %v1596 = vld [vmem:[#allocation8 + $0x28] sm:$0xff]
    %v1597 = vld [vmem:[#allocation8 + $0x30] sm:$0xff]
    %v1598 = vld [vmem:[#allocation8 + $0x38] sm:$0xff]
    %v1599 = vld [vmem:[#allocation8 + $0x40] sm:$0xff]
    %v1600 = vld [vmem:[#allocation8 + $0x48] sm:$0xff]
    %v1601 = vld [vmem:[#allocation8 + $0x50] sm:$0xff]
    %v1602 = vld [vmem:[#allocation8 + $0x58] sm:$0xff]
    %v1603 = vld [vmem:[#allocation8 + $0x60] sm:$0xff]
    %v1604 = vld [vmem:[#allocation8 + $0x68] sm:$0xff]
    %v1605 = vld [vmem:[#allocation8 + $0x70] sm:$0xff]
    %v1606 = vld [vmem:[#allocation8 + $0x78] sm:$0xff]
    %v1607 = vld [vmem:[#allocation8 + $0x80] sm:$0xff]
    %v1608 = vld [vmem:[#allocation8 + $0x88] sm:$0xff]
    %v1609 = vld [vmem:[#allocation8 + $0x90] sm:$0xff]
    %v1610 = vld [vmem:[#allocation8 + $0x98] sm:$0xff]
    %v1611 = vld [vmem:[#allocation8 + $0xa0] sm:$0xff]
    %v1612 = vld [vmem:[#allocation8 + $0xa8] sm:$0xff]
    %v1613 = vld [vmem:[#allocation8 + $0xb0] sm:$0xff]
    %v1614 = vld [vmem:[#allocation8 + $0xb8] sm:$0xff]
    %v1615 = vld [vmem:[#allocation8 + $0xc0] sm:$0xff]
    %v1616 = vld [vmem:[#allocation8 + $0xc8] sm:$0xff]
    %v1617 = vld [vmem:[#allocation8 + $0xd0] sm:$0xff]
    %v1618 = vld [vmem:[#allocation8 + $0xd8] sm:$0xff]
    %v1619 = vld [vmem:[#allocation8 + $0xe0] sm:$0xff]
    %v1620 = vld [vmem:[#allocation8 + $0xe8] sm:$0xff]
    %v1621 = vld [vmem:[#allocation8 + $0xf0] sm:$0xff]
    %v1622 = vld [vmem:[#allocation8 + $0xf8] sm:$0xff]
    %v1623 = vld [vmem:[#allocation10] sm:$0xff]
    %v1624 = vld [vmem:[#allocation10 + $0x8] sm:$0xff]
    %v1625 = vld [vmem:[#allocation10 + $0x10] sm:$0xff]
    %v1626 = vld [vmem:[#allocation10 + $0x18] sm:$0xff]
    %v1627 = vld [vmem:[#allocation10 + $0x20] sm:$0xff]
    %v1628 = vld [vmem:[#allocation10 + $0x28] sm:$0xff]
    %v1629 = vld [vmem:[#allocation10 + $0x30] sm:$0xff]
    %v1630 = vld [vmem:[#allocation10 + $0x38] sm:$0xff]
    %v1631 = vld [vmem:[#allocation10 + $0x40] sm:$0xff]
    %v1632 = vld [vmem:[#allocation10 + $0x48] sm:$0xff]
    %v1633 = vld [vmem:[#allocation10 + $0x50] sm:$0xff]
    %v1634 = vld [vmem:[#allocation10 + $0x58] sm:$0xff]
    %v1635 = vld [vmem:[#allocation10 + $0x60] sm:$0xff]
    %v1636 = vld [vmem:[#allocation10 + $0x68] sm:$0xff]
    %v1637 = vld [vmem:[#allocation10 + $0x70] sm:$0xff]
    %v1638 = vld [vmem:[#allocation10 + $0x78] sm:$0xff]
    %v1639 = vld [vmem:[#allocation10 + $0x80] sm:$0xff]
    %v1640 = vld [vmem:[#allocation10 + $0x88] sm:$0xff]
    %v1641 = vld [vmem:[#allocation10 + $0x90] sm:$0xff]
    %v1642 = vld [vmem:[#allocation10 + $0x98] sm:$0xff]
    %v1643 = vld [vmem:[#allocation10 + $0xa0] sm:$0xff]
    %v1644 = vld [vmem:[#allocation10 + $0xa8] sm:$0xff]
    %v1645 = vld [vmem:[#allocation10 + $0xb0] sm:$0xff]
    %v1646 = vld [vmem:[#allocation10 + $0xb8] sm:$0xff]
    %v1647 = vld [vmem:[#allocation10 + $0xc0] sm:$0xff]
    %v1648 = vld [vmem:[#allocation10 + $0xc8] sm:$0xff]
    %v1649 = vld [vmem:[#allocation10 + $0xd0] sm:$0xff]
    %v1650 = vld [vmem:[#allocation10 + $0xd8] sm:$0xff]
    %v1651 = vld [vmem:[#allocation10 + $0xe0] sm:$0xff]
    %v1652 = vld [vmem:[#allocation10 + $0xe8] sm:$0xff]
    %v1653 = vld [vmem:[#allocation10 + $0xf0] sm:$0xff]
    %v1654 = vld [vmem:[#allocation10 + $0xf8] sm:$0xff]
    %v1655 = vld [vmem:[%s6] sm:$0xf]
    %v1657 = vlaneseq
    %v1658 = vshrl.u32 %v1657, 7
    %v1659 = vsub.s32 0, %v1658
    %v1660 = vrot.slane %v1655, %v1659
    %v1661 = vlaneseq
    %v1662 = vshrl.u32 %v1661, 7
    %v1663 = vsub.s32 1, %v1662
    %v1664 = vrot.slane %v1655, %v1663
    %v1665 = vlaneseq
    %v1666 = vshrl.u32 %v1665, 7
    %v1667 = vsub.s32 2, %v1666
    %v1668 = vrot.slane %v1655, %v1667
    %v1669 = vlaneseq
    %v1670 = vshrl.u32 %v1669, 7
    %v1671 = vsub.s32 3, %v1670
    %v1672 = vrot.slane %v1655, %v1671
    %v1709 = vunpack.c.l.b16 %v1591
    %v1710 = vunpack.c.h.b16 %v1591
    %v1711 = vunpack.c.l.b16 %v1592
    %v1712 = vunpack.c.h.b16 %v1592
    %v1713 = vunpack.c.l.b16 %v1593
    %v1714 = vunpack.c.h.b16 %v1593
    %v1715 = vunpack.c.l.b16 %v1594
    %v1716 = vunpack.c.h.b16 %v1594
    %v1717 = vunpack.c.l.b16 %v1595
    %v1718 = vunpack.c.h.b16 %v1595
    %v1719 = vunpack.c.l.b16 %v1596
    %v1720 = vunpack.c.h.b16 %v1596
    %v1721 = vunpack.c.l.b16 %v1597
    %v1722 = vunpack.c.h.b16 %v1597
    %v1723 = vunpack.c.l.b16 %v1598
    %v1724 = vunpack.c.h.b16 %v1598
    %v1725 = vunpack.c.l.b16 %v1599
    %v1726 = vunpack.c.h.b16 %v1599
    %v1727 = vunpack.c.l.b16 %v1600
    %v1728 = vunpack.c.h.b16 %v1600
    %v1729 = vunpack.c.l.b16 %v1601
    %v1730 = vunpack.c.h.b16 %v1601
    %v1731 = vunpack.c.l.b16 %v1602
    %v1732 = vunpack.c.h.b16 %v1602
    %v1733 = vunpack.c.l.b16 %v1603
    %v1734 = vunpack.c.h.b16 %v1603
    %v1735 = vunpack.c.l.b16 %v1604
    %v1736 = vunpack.c.h.b16 %v1604
    %v1737 = vunpack.c.l.b16 %v1605
    %v1738 = vunpack.c.h.b16 %v1605
    %v1739 = vunpack.c.l.b16 %v1606
    %v1740 = vunpack.c.h.b16 %v1606
    %v1741 = vunpack.c.l.b16 %v1607
    %v1742 = vunpack.c.h.b16 %v1607
    %v1743 = vunpack.c.l.b16 %v1608
    %v1744 = vunpack.c.h.b16 %v1608
    %v1745 = vunpack.c.l.b16 %v1609
    %v1746 = vunpack.c.h.b16 %v1609
    %v1747 = vunpack.c.l.b16 %v1610
    %v1748 = vunpack.c.h.b16 %v1610
    %v1749 = vunpack.c.l.b16 %v1611
    %v1750 = vunpack.c.h.b16 %v1611
    %v1751 = vunpack.c.l.b16 %v1612
    %v1752 = vunpack.c.h.b16 %v1612
    %v1753 = vunpack.c.l.b16 %v1613
    %v1754 = vunpack.c.h.b16 %v1613
    %v1755 = vunpack.c.l.b16 %v1614
    %v1756 = vunpack.c.h.b16 %v1614
    %v1757 = vunpack.c.l.b16 %v1615
    %v1758 = vunpack.c.h.b16 %v1615
    %v1759 = vunpack.c.l.b16 %v1616
    %v1760 = vunpack.c.h.b16 %v1616
    %v1761 = vunpack.c.l.b16 %v1617
    %v1762 = vunpack.c.h.b16 %v1617
    %v1763 = vunpack.c.l.b16 %v1618
    %v1764 = vunpack.c.h.b16 %v1618
    %v1765 = vunpack.c.l.b16 %v1619
    %v1766 = vunpack.c.h.b16 %v1619
    %v1767 = vunpack.c.l.b16 %v1620
    %v1768 = vunpack.c.h.b16 %v1620
    %v1769 = vunpack.c.l.b16 %v1621
    %v1770 = vunpack.c.h.b16 %v1621
    %v1771 = vunpack.c.l.b16 %v1622
    %v1772 = vunpack.c.h.b16 %v1622
    %v1773 = vpack.c.b16 %v1713, %v1709
    %v1774 = vpack.c.b16 %v1714, %v1710
    %v1775 = vpack.c.b16 %v1715, %v1711
    %v1776 = vpack.c.b16 %v1716, %v1712
    %v1777 = vpack.c.b16 %v1721, %v1717
    %v1778 = vpack.c.b16 %v1722, %v1718
    %v1779 = vpack.c.b16 %v1723, %v1719
    %v1780 = vpack.c.b16 %v1724, %v1720
    %v1781 = vpack.c.b16 %v1729, %v1725
    %v1782 = vpack.c.b16 %v1730, %v1726
    %v1783 = vpack.c.b16 %v1731, %v1727
    %v1784 = vpack.c.b16 %v1732, %v1728
    %v1785 = vpack.c.b16 %v1737, %v1733
    %v1786 = vpack.c.b16 %v1738, %v1734
    %v1787 = vpack.c.b16 %v1739, %v1735
    %v1788 = vpack.c.b16 %v1740, %v1736
    %v1789 = vpack.c.b16 %v1745, %v1741
    %v1790 = vpack.c.b16 %v1746, %v1742
    %v1791 = vpack.c.b16 %v1747, %v1743
    %v1792 = vpack.c.b16 %v1748, %v1744
    %v1793 = vpack.c.b16 %v1753, %v1749
    %v1794 = vpack.c.b16 %v1754, %v1750
    %v1795 = vpack.c.b16 %v1755, %v1751
    %v1796 = vpack.c.b16 %v1756, %v1752
    %v1797 = vpack.c.b16 %v1761, %v1757
    %v1798 = vpack.c.b16 %v1762, %v1758
    %v1799 = vpack.c.b16 %v1763, %v1759
    %v1800 = vpack.c.b16 %v1764, %v1760
    %v1801 = vpack.c.b16 %v1769, %v1765
    %v1802 = vpack.c.b16 %v1770, %v1766
    %v1803 = vpack.c.b16 %v1771, %v1767
    %v1804 = vpack.c.b16 %v1772, %v1768
    %1837 = vmatprep.subr.bf16.mxu0 %v1802
    %1838 = vmatpush1.bf16.msra.mxu0 %v1801
    %1839 = vmatprep.subr.bf16.mxu0 %v1798
    %1840 = vmatpush1.bf16.msra.mxu0 %v1797
    %1841 = vmatprep.subr.bf16.mxu0 %v1794
    %1842 = vmatpush1.bf16.msra.mxu0 %v1793
    %1843 = vmatprep.subr.bf16.mxu0 %v1790
    %1844 = vmatpush1.bf16.msra.mxu0 %v1789
    %1845 = vmatprep.subr.bf16.mxu0 %v1786
    %1846 = vmatpush1.bf16.msra.mxu0 %v1785
    %1847 = vmatprep.subr.bf16.mxu0 %v1782
    %1848 = vmatpush1.bf16.msra.mxu0 %v1781
    %1849 = vmatprep.subr.bf16.mxu0 %v1778
    %1850 = vmatpush1.bf16.msra.mxu0 %v1777
    %1851 = vmatprep.subr.bf16.mxu0 %v1774
    %1852 = vmatpush1.bf16.msra.mxu0 %v1773
    %1853 = vmatprep.subr.bf16.mxu0 0
    %1854 = vmatpush2.bf16.msra.mxu0 0
    %1855 = vmatprep.subr.bf16.mxu0 0
    %1856 = vmatpush2.bf16.msra.mxu0 0
    %1857 = vmatprep.subr.bf16.mxu0 0
    %1858 = vmatpush2.bf16.msra.mxu0 0
    %1859 = vmatprep.subr.bf16.mxu0 0
    %1860 = vmatpush2.bf16.msra.mxu0 0
    %1861 = vmatprep.subr.bf16.mxu0 0
    %1862 = vmatpush2.bf16.msra.mxu0 0
    %1863 = vmatprep.subr.bf16.mxu0 0
    %1864 = vmatpush2.bf16.msra.mxu0 0
    %1865 = vmatprep.subr.bf16.mxu0 0
    %1866 = vmatpush2.bf16.msra.mxu0 0
    %1867 = vmatprep.subr.bf16.mxu0 0
    %1868 = vmatpush2.bf16.msra.mxu0 0
    %1869 = vmatprep.mubr.bf16.mxu0 0
    %1870 = vmatmul.mubr.bf16.gmra.mxu0 %v1587
    %v1871 = vpop.f32.mrf.mxu0
    %v1872 = vadd.f32 %v1660, %v1871
    %v1873 = vpop.f32.mrf.mxu0
    %v1874 = vadd.f32 %v1664, %v1873
    %v1875 = vpop.f32.mrf.mxu0
    %v1876 = vadd.f32 %v1660, %v1875
    %v1877 = vpop.f32.mrf.mxu0
    %v1878 = vadd.f32 %v1664, %v1877
    %1879 = vmatprep.mubr.bf16.mxu0 0
    %1880 = vmatmul.mubr.bf16.gmra.mxu0 %v1588
    %v1881 = vpop.f32.mrf.mxu0
    %v1882 = vadd.f32 %v1660, %v1881
    %v1883 = vpop.f32.mrf.mxu0
    %v1884 = vadd.f32 %v1664, %v1883
    %v1885 = vpop.f32.mrf.mxu0
    %v1886 = vadd.f32 %v1660, %v1885
    %v1887 = vpop.f32.mrf.mxu0
    %v1888 = vadd.f32 %v1664, %v1887
    %1889 = vmatprep.mubr.bf16.mxu0 0
    %1890 = vmatmul.mubr.bf16.gmra.mxu0 %v1589
    %v1891 = vpop.f32.mrf.mxu0
    %v1892 = vadd.f32 %v1660, %v1891
    %v1893 = vpop.f32.mrf.mxu0
    %v1894 = vadd.f32 %v1664, %v1893
    %v1895 = vpop.f32.mrf.mxu0
    %v1896 = vadd.f32 %v1660, %v1895
    %v1897 = vpop.f32.mrf.mxu0
    %v1898 = vadd.f32 %v1664, %v1897
    %1899 = vmatprep.mubr.bf16.mxu0 0
    %1900 = vmatmul.mubr.bf16.gmra.mxu0 %v1590
    %v1901 = vpop.f32.mrf.mxu0
    %v1902 = vadd.f32 %v1660, %v1901
    %v1903 = vpop.f32.mrf.mxu0
    %v1904 = vadd.f32 %v1664, %v1903
    %v1905 = vpop.f32.mrf.mxu0
    %v1906 = vadd.f32 %v1660, %v1905
    %v1907 = vpop.f32.mrf.mxu0
    %v1908 = vadd.f32 %v1664, %v1907
    %1909 = vdwg.mxu0
    %1910 = vmatprep.subr.bf16.mxu0 %v1804
    %1911 = vmatpush1.bf16.msra.mxu0 %v1803
    %1912 = vmatprep.subr.bf16.mxu0 %v1800
    %1913 = vmatpush1.bf16.msra.mxu0 %v1799
    %1914 = vmatprep.subr.bf16.mxu0 %v1796
    %1915 = vmatpush1.bf16.msra.mxu0 %v1795
    %1916 = vmatprep.subr.bf16.mxu0 %v1792
    %1917 = vmatpush1.bf16.msra.mxu0 %v1791
    %1918 = vmatprep.subr.bf16.mxu0 %v1788
    %1919 = vmatpush1.bf16.msra.mxu0 %v1787
    %1920 = vmatprep.subr.bf16.mxu0 %v1784
    %1921 = vmatpush1.bf16.msra.mxu0 %v1783
    %1922 = vmatprep.subr.bf16.mxu0 %v1780
    %1923 = vmatpush1.bf16.msra.mxu0 %v1779
    %1924 = vmatprep.subr.bf16.mxu0 %v1776
    %1925 = vmatpush1.bf16.msra.mxu0 %v1775
    %1926 = vmatprep.subr.bf16.mxu0 0
    %1927 = vmatpush2.bf16.msra.mxu0 0
    %1928 = vmatprep.subr.bf16.mxu0 0
    %1929 = vmatpush2.bf16.msra.mxu0 0
    %1930 = vmatprep.subr.bf16.mxu0 0
    %1931 = vmatpush2.bf16.msra.mxu0 0
    %1932 = vmatprep.subr.bf16.mxu0 0
    %1933 = vmatpush2.bf16.msra.mxu0 0
    %1934 = vmatprep.subr.bf16.mxu0 0
    %1935 = vmatpush2.bf16.msra.mxu0 0
    %1936 = vmatprep.subr.bf16.mxu0 0
    %1937 = vmatpush2.bf16.msra.mxu0 0
    %1938 = vmatprep.subr.bf16.mxu0 0
    %1939 = vmatpush2.bf16.msra.mxu0 0
    %1940 = vmatprep.subr.bf16.mxu0 0
    %1941 = vmatpush2.bf16.msra.mxu0 0
    %1942 = vmatprep.mubr.bf16.mxu0 0
    %1943 = vmatmul.mubr.bf16.gmra.mxu0 %v1587
    %v1944 = vpop.f32.mrf.mxu0
    %v1945 = vadd.f32 %v1668, %v1944
    %v1946 = vpop.f32.mrf.mxu0
    %v1947 = vadd.f32 %v1672, %v1946
    %v1948 = vpop.f32.mrf.mxu0
    %v1949 = vadd.f32 %v1668, %v1948
    %v1950 = vpop.f32.mrf.mxu0
    %v1951 = vadd.f32 %v1672, %v1950
    %1952 = vmatprep.mubr.bf16.mxu0 0
    %1953 = vmatmul.mubr.bf16.gmra.mxu0 %v1588
    %v1954 = vpop.f32.mrf.mxu0
    %v1955 = vadd.f32 %v1668, %v1954
    %v1956 = vpop.f32.mrf.mxu0
    %v1957 = vadd.f32 %v1672, %v1956
    %v1958 = vpop.f32.mrf.mxu0
    %v1959 = vadd.f32 %v1668, %v1958
    %v1960 = vpop.f32.mrf.mxu0
    %v1961 = vadd.f32 %v1672, %v1960
    %1962 = vmatprep.mubr.bf16.mxu0 0
    %1963 = vmatmul.mubr.bf16.gmra.mxu0 %v1589
    %v1964 = vpop.f32.mrf.mxu0
    %v1965 = vadd.f32 %v1668, %v1964
    %v1966 = vpop.f32.mrf.mxu0
    %v1967 = vadd.f32 %v1672, %v1966
    %v1968 = vpop.f32.mrf.mxu0
    %v1969 = vadd.f32 %v1668, %v1968
    %v1970 = vpop.f32.mrf.mxu0
    %v1971 = vadd.f32 %v1672, %v1970
    %1972 = vmatprep.mubr.bf16.mxu0 0
    %1973 = vmatmul.mubr.bf16.gmra.mxu0 %v1590
    %v1974 = vpop.f32.mrf.mxu0
    %v1975 = vadd.f32 %v1668, %v1974
    %v1976 = vpop.f32.mrf.mxu0
    %v1977 = vadd.f32 %v1672, %v1976
    %v1978 = vpop.f32.mrf.mxu0
    %v1979 = vadd.f32 %v1668, %v1978
    %v1980 = vpop.f32.mrf.mxu0
    %v1981 = vadd.f32 %v1672, %v1980
    %1982 = vdwg.mxu0
    %v2015 = vunpack.c.l.b16 %v1623
    %v2016 = vunpack.c.h.b16 %v1623
    %v2017 = vunpack.c.l.b16 %v1624
    %v2018 = vunpack.c.h.b16 %v1624
    %v2019 = vunpack.c.l.b16 %v1625
    %v2020 = vunpack.c.h.b16 %v1625
    %v2021 = vunpack.c.l.b16 %v1626
    %v2022 = vunpack.c.h.b16 %v1626
    %v2023 = vunpack.c.l.b16 %v1627
    %v2024 = vunpack.c.h.b16 %v1627
    %v2025 = vunpack.c.l.b16 %v1628
    %v2026 = vunpack.c.h.b16 %v1628
    %v2027 = vunpack.c.l.b16 %v1629
    %v2028 = vunpack.c.h.b16 %v1629
    %v2029 = vunpack.c.l.b16 %v1630
    %v2030 = vunpack.c.h.b16 %v1630
    %v2031 = vunpack.c.l.b16 %v1631
    %v2032 = vunpack.c.h.b16 %v1631
    %v2033 = vunpack.c.l.b16 %v1632
    %v2034 = vunpack.c.h.b16 %v1632
    %v2035 = vunpack.c.l.b16 %v1633
    %v2036 = vunpack.c.h.b16 %v1633
    %v2037 = vunpack.c.l.b16 %v1634
    %v2038 = vunpack.c.h.b16 %v1634
    %v2039 = vunpack.c.l.b16 %v1635
    %v2040 = vunpack.c.h.b16 %v1635
    %v2041 = vunpack.c.l.b16 %v1636
    %v2042 = vunpack.c.h.b16 %v1636
    %v2043 = vunpack.c.l.b16 %v1637
    %v2044 = vunpack.c.h.b16 %v1637
    %v2045 = vunpack.c.l.b16 %v1638
    %v2046 = vunpack.c.h.b16 %v1638
    %v2047 = vunpack.c.l.b16 %v1639
    %v2048 = vunpack.c.h.b16 %v1639
    %v2049 = vunpack.c.l.b16 %v1640
    %v2050 = vunpack.c.h.b16 %v1640
    %v2051 = vunpack.c.l.b16 %v1641
    %v2052 = vunpack.c.h.b16 %v1641
    %v2053 = vunpack.c.l.b16 %v1642
    %v2054 = vunpack.c.h.b16 %v1642
    %v2055 = vunpack.c.l.b16 %v1643
    %v2056 = vunpack.c.h.b16 %v1643
    %v2057 = vunpack.c.l.b16 %v1644
    %v2058 = vunpack.c.h.b16 %v1644
    %v2059 = vunpack.c.l.b16 %v1645
    %v2060 = vunpack.c.h.b16 %v1645
    %v2061 = vunpack.c.l.b16 %v1646
    %v2062 = vunpack.c.h.b16 %v1646
    %v2063 = vunpack.c.l.b16 %v1647
    %v2064 = vunpack.c.h.b16 %v1647
    %v2065 = vunpack.c.l.b16 %v1648
    %v2066 = vunpack.c.h.b16 %v1648
    %v2067 = vunpack.c.l.b16 %v1649
    %v2068 = vunpack.c.h.b16 %v1649
    %v2069 = vunpack.c.l.b16 %v1650
    %v2070 = vunpack.c.h.b16 %v1650
    %v2071 = vunpack.c.l.b16 %v1651
    %v2072 = vunpack.c.h.b16 %v1651
    %v2073 = vunpack.c.l.b16 %v1652
    %v2074 = vunpack.c.h.b16 %v1652
    %v2075 = vunpack.c.l.b16 %v1653
    %v2076 = vunpack.c.h.b16 %v1653
    %v2077 = vunpack.c.l.b16 %v1654
    %v2078 = vunpack.c.h.b16 %v1654
    %v2079 = vpack.c.b16 %v2019, %v2015
    %v2080 = vpack.c.b16 %v2020, %v2016
    %v2081 = vpack.c.b16 %v2021, %v2017
    %v2082 = vpack.c.b16 %v2022, %v2018
    %v2083 = vpack.c.b16 %v2027, %v2023
    %v2084 = vpack.c.b16 %v2028, %v2024
    %v2085 = vpack.c.b16 %v2029, %v2025
    %v2086 = vpack.c.b16 %v2030, %v2026
    %v2087 = vpack.c.b16 %v2035, %v2031
    %v2088 = vpack.c.b16 %v2036, %v2032
    %v2089 = vpack.c.b16 %v2037, %v2033
    %v2090 = vpack.c.b16 %v2038, %v2034
    %v2091 = vpack.c.b16 %v2043, %v2039
    %v2092 = vpack.c.b16 %v2044, %v2040
    %v2093 = vpack.c.b16 %v2045, %v2041
    %v2094 = vpack.c.b16 %v2046, %v2042
    %v2095 = vpack.c.b16 %v2051, %v2047
    %v2096 = vpack.c.b16 %v2052, %v2048
    %v2097 = vpack.c.b16 %v2053, %v2049
    %v2098 = vpack.c.b16 %v2054, %v2050
    %v2099 = vpack.c.b16 %v2059, %v2055
    %v2100 = vpack.c.b16 %v2060, %v2056
    %v2101 = vpack.c.b16 %v2061, %v2057
    %v2102 = vpack.c.b16 %v2062, %v2058
    %v2103 = vpack.c.b16 %v2067, %v2063
    %v2104 = vpack.c.b16 %v2068, %v2064
    %v2105 = vpack.c.b16 %v2069, %v2065
    %v2106 = vpack.c.b16 %v2070, %v2066
    %v2107 = vpack.c.b16 %v2075, %v2071
    %v2108 = vpack.c.b16 %v2076, %v2072
    %v2109 = vpack.c.b16 %v2077, %v2073
    %v2110 = vpack.c.b16 %v2078, %v2074
    %2143 = vmatprep.subr.bf16.mxu0 %v2108
    %2144 = vmatpush1.bf16.msra.mxu0 %v2107
    %2145 = vmatprep.subr.bf16.mxu0 %v2104
    %2146 = vmatpush1.bf16.msra.mxu0 %v2103
    %2147 = vmatprep.subr.bf16.mxu0 %v2100
    %2148 = vmatpush1.bf16.msra.mxu0 %v2099
    %2149 = vmatprep.subr.bf16.mxu0 %v2096
    %2150 = vmatpush1.bf16.msra.mxu0 %v2095
    %2151 = vmatprep.subr.bf16.mxu0 %v2092
    %2152 = vmatpush1.bf16.msra.mxu0 %v2091
    %2153 = vmatprep.subr.bf16.mxu0 %v2088
    %2154 = vmatpush1.bf16.msra.mxu0 %v2087
    %2155 = vmatprep.subr.bf16.mxu0 %v2084
    %2156 = vmatpush1.bf16.msra.mxu0 %v2083
    %2157 = vmatprep.subr.bf16.mxu0 %v2080
    %2158 = vmatpush1.bf16.msra.mxu0 %v2079
    %2159 = vmatprep.subr.bf16.mxu0 0
    %2160 = vmatpush2.bf16.msra.mxu0 0
    %2161 = vmatprep.subr.bf16.mxu0 0
    %2162 = vmatpush2.bf16.msra.mxu0 0
    %2163 = vmatprep.subr.bf16.mxu0 0
    %2164 = vmatpush2.bf16.msra.mxu0 0
    %2165 = vmatprep.subr.bf16.mxu0 0
    %2166 = vmatpush2.bf16.msra.mxu0 0
    %2167 = vmatprep.subr.bf16.mxu0 0
    %2168 = vmatpush2.bf16.msra.mxu0 0
    %2169 = vmatprep.subr.bf16.mxu0 0
    %2170 = vmatpush2.bf16.msra.mxu0 0
    %2171 = vmatprep.subr.bf16.mxu0 0
    %2172 = vmatpush2.bf16.msra.mxu0 0
    %2173 = vmatprep.subr.bf16.mxu0 0
    %2174 = vmatpush2.bf16.msra.mxu0 0
    %2175 = vmatprep.mubr.bf16.mxu0 0
    %2176 = vmatmul.mubr.bf16.gmra.mxu0 0
    %v2177 = vpop.f32.mrf.mxu0
    %v2178 = vadd.f32 0.0, %v2177
    %v2179 = vpop.f32.mrf.mxu0
    %v2180 = vadd.f32 0.0, %v2179
    %v2181 = vpop.f32.mrf.mxu0
    %v2182 = vpop.f32.mrf.mxu0
    %2183 = vdwg.mxu0
    %2184 = vmatprep.subr.bf16.mxu0 %v2110
    %2185 = vmatpush1.bf16.msra.mxu0 %v2109
    %2186 = vmatprep.subr.bf16.mxu0 %v2106
    %2187 = vmatpush1.bf16.msra.mxu0 %v2105
    %2188 = vmatprep.subr.bf16.mxu0 %v2102
    %2189 = vmatpush1.bf16.msra.mxu0 %v2101
    %2190 = vmatprep.subr.bf16.mxu0 %v2098
    %2191 = vmatpush1.bf16.msra.mxu0 %v2097
    %2192 = vmatprep.subr.bf16.mxu0 %v2094
    %2193 = vmatpush1.bf16.msra.mxu0 %v2093
    %2194 = vmatprep.subr.bf16.mxu0 %v2090
    %2195 = vmatpush1.bf16.msra.mxu0 %v2089
    %2196 = vmatprep.subr.bf16.mxu0 %v2086
    %2197 = vmatpush1.bf16.msra.mxu0 %v2085
    %2198 = vmatprep.subr.bf16.mxu0 %v2082
    %2199 = vmatpush1.bf16.msra.mxu0 %v2081
    %2200 = vmatprep.subr.bf16.mxu0 0
    %2201 = vmatpush2.bf16.msra.mxu0 0
    %2202 = vmatprep.subr.bf16.mxu0 0
    %2203 = vmatpush2.bf16.msra.mxu0 0
    %2204 = vmatprep.subr.bf16.mxu0 0
    %2205 = vmatpush2.bf16.msra.mxu0 0
    %2206 = vmatprep.subr.bf16.mxu0 0
    %2207 = vmatpush2.bf16.msra.mxu0 0
    %2208 = vmatprep.subr.bf16.mxu0 0
    %2209 = vmatpush2.bf16.msra.mxu0 0
    %2210 = vmatprep.subr.bf16.mxu0 0
    %2211 = vmatpush2.bf16.msra.mxu0 0
    %2212 = vmatprep.subr.bf16.mxu0 0
    %2213 = vmatpush2.bf16.msra.mxu0 0
    %2214 = vmatprep.subr.bf16.mxu0 0
    %2215 = vmatpush2.bf16.msra.mxu0 0
    %2216 = vmatprep.mubr.bf16.mxu0 0
    %2217 = vmatmul.mubr.bf16.gmra.mxu0 0
    %v2218 = vpop.f32.mrf.mxu0
    %v2219 = vadd.f32 0.0, %v2218
    %v2220 = vpop.f32.mrf.mxu0
    %v2221 = vadd.f32 0.0, %v2220
    %v2222 = vpop.f32.mrf.mxu0
    %v2223 = vpop.f32.mrf.mxu0
    %2224 = vdwg.mxu0
    %v2225 = vadd.f32 %v1872, %v2178
    %v2226 = vadd.f32 %v1874, %v2180
    %v2227 = vadd.f32 %v1945, %v2219
    %v2228 = vadd.f32 %v1947, %v2221
    %v2229 = vxor.u32 %v2225, 2147483648
    %v2230 = vxor.u32 %v2226, 2147483648
    %v2231 = vxor.u32 %v2227, 2147483648
    %v2232 = vmul.f32 %v2229, 1.442695
    %v2233 = vpow.pop %v2232
    %v2234 = vmul.f32 %v2230, 1.442695
    %v2235 = vpow.pop %v2234
    %v2236 = vmul.f32 %v2231, 1.442695
    %v2237 = vpow.pop %v2236
    %v2238 = vadd.f32 %v2233, 1.0
    %v2239 = vadd.f32 %v2235, 1.0
    %v2240 = vadd.f32 %v2237, 1.0
    %v2241 = vrcp.pop %v2238
    %v2242 = vmul.f32 1.0, %v2241
    %v2243 = vrcp.pop %v2239
    %v2244 = vmul.f32 1.0, %v2243
    %v2245 = vrcp.pop %v2240
    %v2246 = vmul.f32 1.0, %v2245
    %v2247 = vtanh.pop %v2228
    %v2248 = vmul.f32 %v2244, 0.0
    %v2249 = vmul.f32 %v2242, %v2247
    %v2250 = vadd.f32 %v2248, %v2249
    %v2251 = vtanh.pop %v2250
    %v2252 = vmul.f32 %v2246, %v2251
    %v2253 = vpack.c.bf16 %v2252, %v2252
    %2254 = vmatprep.subr.bf16.mxu0 %v2108
    %2255 = vmatpush1.bf16.msra.mxu0 %v2107
    %2256 = vmatprep.subr.bf16.mxu0 %v2104
    %2257 = vmatpush1.bf16.msra.mxu0 %v2103
    %2258 = vmatprep.subr.bf16.mxu0 %v2100
    %2259 = vmatpush1.bf16.msra.mxu0 %v2099
    %2260 = vmatprep.subr.bf16.mxu0 %v2096
    %2261 = vmatpush1.bf16.msra.mxu0 %v2095
    %2262 = vmatprep.subr.bf16.mxu0 %v2092
    %2263 = vmatpush1.bf16.msra.mxu0 %v2091
    %2264 = vmatprep.subr.bf16.mxu0 %v2088
    %2265 = vmatpush1.bf16.msra.mxu0 %v2087
    %2266 = vmatprep.subr.bf16.mxu0 %v2084
    %2267 = vmatpush1.bf16.msra.mxu0 %v2083
    %2268 = vmatprep.subr.bf16.mxu0 %v2080
    %2269 = vmatpush1.bf16.msra.mxu0 %v2079
    %2270 = vmatprep.subr.bf16.mxu0 0
    %2271 = vmatpush2.bf16.msra.mxu0 0
    %2272 = vmatprep.subr.bf16.mxu0 0
    %2273 = vmatpush2.bf16.msra.mxu0 0
    %2274 = vmatprep.subr.bf16.mxu0 0
    %2275 = vmatpush2.bf16.msra.mxu0 0
    %2276 = vmatprep.subr.bf16.mxu0 0
    %2277 = vmatpush2.bf16.msra.mxu0 0
    %2278 = vmatprep.subr.bf16.mxu0 0
    %2279 = vmatpush2.bf16.msra.mxu0 0
    %2280 = vmatprep.subr.bf16.mxu0 0
    %2281 = vmatpush2.bf16.msra.mxu0 0
    %2282 = vmatprep.subr.bf16.mxu0 0
    %2283 = vmatpush2.bf16.msra.mxu0 0
    %2284 = vmatprep.subr.bf16.mxu0 0
    %2285 = vmatpush2.bf16.msra.mxu0 0
    %2286 = vmatprep.mubr.bf16.mxu0 0
    %2287 = vmatmul.mubr.bf16.gmra.mxu0 %v2253
    %v2288 = vpop.f32.mrf.mxu0
    %v2289 = vadd.f32 0.0, %v2288
    %v2290 = vpop.f32.mrf.mxu0
    %v2291 = vadd.f32 0.0, %v2290
    %v2292 = vpop.f32.mrf.mxu0
    %v2293 = vpop.f32.mrf.mxu0
    %2294 = vdwg.mxu0
    %2295 = vmatprep.subr.bf16.mxu0 %v2110
    %2296 = vmatpush1.bf16.msra.mxu0 %v2109
    %2297 = vmatprep.subr.bf16.mxu0 %v2106
    %2298 = vmatpush1.bf16.msra.mxu0 %v2105
    %2299 = vmatprep.subr.bf16.mxu0 %v2102
    %2300 = vmatpush1.bf16.msra.mxu0 %v2101
    %2301 = vmatprep.subr.bf16.mxu0 %v2098
    %2302 = vmatpush1.bf16.msra.mxu0 %v2097
    %2303 = vmatprep.subr.bf16.mxu0 %v2094
    %2304 = vmatpush1.bf16.msra.mxu0 %v2093
    %2305 = vmatprep.subr.bf16.mxu0 %v2090
    %2306 = vmatpush1.bf16.msra.mxu0 %v2089
    %2307 = vmatprep.subr.bf16.mxu0 %v2086
    %2308 = vmatpush1.bf16.msra.mxu0 %v2085
    %2309 = vmatprep.subr.bf16.mxu0 %v2082
    %2310 = vmatpush1.bf16.msra.mxu0 %v2081
    %2311 = vmatprep.subr.bf16.mxu0 0
    %2312 = vmatpush2.bf16.msra.mxu0 0
    %2313 = vmatprep.subr.bf16.mxu0 0
    %2314 = vmatpush2.bf16.msra.mxu0 0
    %2315 = vmatprep.subr.bf16.mxu0 0
    %2316 = vmatpush2.bf16.msra.mxu0 0
    %2317 = vmatprep.subr.bf16.mxu0 0
    %2318 = vmatpush2.bf16.msra.mxu0 0
    %2319 = vmatprep.subr.bf16.mxu0 0
    %2320 = vmatpush2.bf16.msra.mxu0 0
    %2321 = vmatprep.subr.bf16.mxu0 0
    %2322 = vmatpush2.bf16.msra.mxu0 0
    %2323 = vmatprep.subr.bf16.mxu0 0
    %2324 = vmatpush2.bf16.msra.mxu0 0
    %2325 = vmatprep.subr.bf16.mxu0 0
    %2326 = vmatpush2.bf16.msra.mxu0 0
    %2327 = vmatprep.mubr.bf16.mxu0 0
    %2328 = vmatmul.mubr.bf16.gmra.mxu0 %v2253
    %v2329 = vpop.f32.mrf.mxu0
    %v2330 = vadd.f32 0.0, %v2329
    %v2331 = vpop.f32.mrf.mxu0
    %v2332 = vadd.f32 0.0, %v2331
    %v2333 = vpop.f32.mrf.mxu0
    %v2334 = vpop.f32.mrf.mxu0
    %2335 = vdwg.mxu0
    %v2336 = vadd.f32 %v1876, %v2289
    %v2337 = vadd.f32 %v1878, %v2291
    %v2338 = vadd.f32 %v1949, %v2330
    %v2339 = vadd.f32 %v1951, %v2332
    %v2340 = vxor.u32 %v2336, 2147483648
    %v2341 = vxor.u32 %v2337, 2147483648
    %v2342 = vxor.u32 %v2338, 2147483648
    %v2343 = vmul.f32 %v2340, 1.442695
    %v2344 = vpow.pop %v2343
    %v2345 = vmul.f32 %v2341, 1.442695
    %v2346 = vpow.pop %v2345
    %v2347 = vmul.f32 %v2342, 1.442695
    %v2348 = vpow.pop %v2347
    %v2349 = vadd.f32 %v2344, 1.0
    %v2350 = vadd.f32 %v2346, 1.0
    %v2351 = vadd.f32 %v2348, 1.0
    %v2352 = vrcp.pop %v2349
    %v2353 = vmul.f32 1.0, %v2352
    %v2354 = vrcp.pop %v2350
    %v2355 = vmul.f32 1.0, %v2354
    %v2356 = vrcp.pop %v2351
    %v2357 = vmul.f32 1.0, %v2356
    %v2358 = vtanh.pop %v2339
    %v2359 = vmul.f32 %v2355, %v2250
    %v2360 = vmul.f32 %v2353, %v2358
    %v2361 = vadd.f32 %v2359, %v2360
    %v2362 = vtanh.pop %v2361
    %v2363 = vmul.f32 %v2357, %v2362
    %v2364 = vpack.c.bf16 %v2363, %v2363
    %2365 = vmatprep.subr.bf16.mxu0 %v2108
    %2366 = vmatpush1.bf16.msra.mxu0 %v2107
    %2367 = vmatprep.subr.bf16.mxu0 %v2104
    %2368 = vmatpush1.bf16.msra.mxu0 %v2103
    %2369 = vmatprep.subr.bf16.mxu0 %v2100
    %2370 = vmatpush1.bf16.msra.mxu0 %v2099
    %2371 = vmatprep.subr.bf16.mxu0 %v2096
    %2372 = vmatpush1.bf16.msra.mxu0 %v2095
    %2373 = vmatprep.subr.bf16.mxu0 %v2092
    %2374 = vmatpush1.bf16.msra.mxu0 %v2091
    %2375 = vmatprep.subr.bf16.mxu0 %v2088
    %2376 = vmatpush1.bf16.msra.mxu0 %v2087
    %2377 = vmatprep.subr.bf16.mxu0 %v2084
    %2378 = vmatpush1.bf16.msra.mxu0 %v2083
    %2379 = vmatprep.subr.bf16.mxu0 %v2080
    %2380 = vmatpush1.bf16.msra.mxu0 %v2079
    %2381 = vmatprep.subr.bf16.mxu0 0
    %2382 = vmatpush2.bf16.msra.mxu0 0
    %2383 = vmatprep.subr.bf16.mxu0 0
    %2384 = vmatpush2.bf16.msra.mxu0 0
    %2385 = vmatprep.subr.bf16.mxu0 0
    %2386 = vmatpush2.bf16.msra.mxu0 0
    %2387 = vmatprep.subr.bf16.mxu0 0
    %2388 = vmatpush2.bf16.msra.mxu0 0
    %2389 = vmatprep.subr.bf16.mxu0 0
    %2390 = vmatpush2.bf16.msra.mxu0 0
    %2391 = vmatprep.subr.bf16.mxu0 0
    %2392 = vmatpush2.bf16.msra.mxu0 0
    %2393 = vmatprep.subr.bf16.mxu0 0
    %2394 = vmatpush2.bf16.msra.mxu0 0
    %2395 = vmatprep.subr.bf16.mxu0 0
    %2396 = vmatpush2.bf16.msra.mxu0 0
    %2397 = vmatprep.mubr.bf16.mxu0 0
    %2398 = vmatmul.mubr.bf16.gmra.mxu0 %v2364
    %v2399 = vpop.f32.mrf.mxu0
    %v2400 = vadd.f32 0.0, %v2399
    %v2401 = vpop.f32.mrf.mxu0
    %v2402 = vadd.f32 0.0, %v2401
    %v2403 = vpop.f32.mrf.mxu0
    %v2404 = vpop.f32.mrf.mxu0
    %2405 = vdwg.mxu0
    %2406 = vmatprep.subr.bf16.mxu0 %v2110
    %2407 = vmatpush1.bf16.msra.mxu0 %v2109
    %2408 = vmatprep.subr.bf16.mxu0 %v2106
    %2409 = vmatpush1.bf16.msra.mxu0 %v2105
    %2410 = vmatprep.subr.bf16.mxu0 %v2102
    %2411 = vmatpush1.bf16.msra.mxu0 %v2101
    %2412 = vmatprep.subr.bf16.mxu0 %v2098
    %2413 = vmatpush1.bf16.msra.mxu0 %v2097
    %2414 = vmatprep.subr.bf16.mxu0 %v2094
    %2415 = vmatpush1.bf16.msra.mxu0 %v2093
    %2416 = vmatprep.subr.bf16.mxu0 %v2090
    %2417 = vmatpush1.bf16.msra.mxu0 %v2089
    %2418 = vmatprep.subr.bf16.mxu0 %v2086
    %2419 = vmatpush1.bf16.msra.mxu0 %v2085
    %2420 = vmatprep.subr.bf16.mxu0 %v2082
    %2421 = vmatpush1.bf16.msra.mxu0 %v2081
    %2422 = vmatprep.subr.bf16.mxu0 0
    %2423 = vmatpush2.bf16.msra.mxu0 0
    %2424 = vmatprep.subr.bf16.mxu0 0
    %2425 = vmatpush2.bf16.msra.mxu0 0
    %2426 = vmatprep.subr.bf16.mxu0 0
    %2427 = vmatpush2.bf16.msra.mxu0 0
    %2428 = vmatprep.subr.bf16.mxu0 0
    %2429 = vmatpush2.bf16.msra.mxu0 0
    %2430 = vmatprep.subr.bf16.mxu0 0
    %2431 = vmatpush2.bf16.msra.mxu0 0
    %2432 = vmatprep.subr.bf16.mxu0 0
    %2433 = vmatpush2.bf16.msra.mxu0 0
    %2434 = vmatprep.subr.bf16.mxu0 0
    %2435 = vmatpush2.bf16.msra.mxu0 0
    %2436 = vmatprep.subr.bf16.mxu0 0
    %2437 = vmatpush2.bf16.msra.mxu0 0
    %2438 = vmatprep.mubr.bf16.mxu0 0
    %2439 = vmatmul.mubr.bf16.gmra.mxu0 %v2364
    %v2440 = vpop.f32.mrf.mxu0
    %v2441 = vadd.f32 0.0, %v2440
    %v2442 = vpop.f32.mrf.mxu0
    %v2443 = vadd.f32 0.0, %v2442
    %v2444 = vpop.f32.mrf.mxu0
    %v2445 = vpop.f32.mrf.mxu0
    %2446 = vdwg.mxu0
    %v2447 = vadd.f32 %v1882, %v2400
    %v2448 = vadd.f32 %v1884, %v2402
    %v2449 = vadd.f32 %v1955, %v2441
    %v2450 = vadd.f32 %v1957, %v2443
    %v2451 = vxor.u32 %v2447, 2147483648
    %v2452 = vxor.u32 %v2448, 2147483648
    %v2453 = vxor.u32 %v2449, 2147483648
    %v2454 = vmul.f32 %v2451, 1.442695
    %v2455 = vpow.pop %v2454
    %v2456 = vmul.f32 %v2452, 1.442695
    %v2457 = vpow.pop %v2456
    %v2458 = vmul.f32 %v2453, 1.442695
    %v2459 = vpow.pop %v2458
    %v2460 = vadd.f32 %v2455, 1.0
    %v2461 = vadd.f32 %v2457, 1.0
    %v2462 = vadd.f32 %v2459, 1.0
    %v2463 = vrcp.pop %v2460
    %v2464 = vmul.f32 1.0, %v2463
    %v2465 = vrcp.pop %v2461
    %v2466 = vmul.f32 1.0, %v2465
    %v2467 = vrcp.pop %v2462
    %v2468 = vmul.f32 1.0, %v2467
    %v2469 = vtanh.pop %v2450
    %v2470 = vmul.f32 %v2466, %v2361
    %v2471 = vmul.f32 %v2464, %v2469
    %v2472 = vadd.f32 %v2470, %v2471
    %v2473 = vtanh.pop %v2472
    %v2474 = vmul.f32 %v2468, %v2473
    %v2475 = vpack.c.bf16 %v2474, %v2474
    %2476 = vmatprep.subr.bf16.mxu0 %v2108
    %2477 = vmatpush1.bf16.msra.mxu0 %v2107
    %2478 = vmatprep.subr.bf16.mxu0 %v2104
    %2479 = vmatpush1.bf16.msra.mxu0 %v2103
    %2480 = vmatprep.subr.bf16.mxu0 %v2100
    %2481 = vmatpush1.bf16.msra.mxu0 %v2099
    %2482 = vmatprep.subr.bf16.mxu0 %v2096
    %2483 = vmatpush1.bf16.msra.mxu0 %v2095
    %2484 = vmatprep.subr.bf16.mxu0 %v2092
    %2485 = vmatpush1.bf16.msra.mxu0 %v2091
    %2486 = vmatprep.subr.bf16.mxu0 %v2088
    %2487 = vmatpush1.bf16.msra.mxu0 %v2087
    %2488 = vmatprep.subr.bf16.mxu0 %v2084
    %2489 = vmatpush1.bf16.msra.mxu0 %v2083
    %2490 = vmatprep.subr.bf16.mxu0 %v2080
    %2491 = vmatpush1.bf16.msra.mxu0 %v2079
    %2492 = vmatprep.subr.bf16.mxu0 0
    %2493 = vmatpush2.bf16.msra.mxu0 0
    %2494 = vmatprep.subr.bf16.mxu0 0
    %2495 = vmatpush2.bf16.msra.mxu0 0
    %2496 = vmatprep.subr.bf16.mxu0 0
    %2497 = vmatpush2.bf16.msra.mxu0 0
    %2498 = vmatprep.subr.bf16.mxu0 0
    %2499 = vmatpush2.bf16.msra.mxu0 0
    %2500 = vmatprep.subr.bf16.mxu0 0
    %2501 = vmatpush2.bf16.msra.mxu0 0
    %2502 = vmatprep.subr.bf16.mxu0 0
    %2503 = vmatpush2.bf16.msra.mxu0 0
    %2504 = vmatprep.subr.bf16.mxu0 0
    %2505 = vmatpush2.bf16.msra.mxu0 0
    %2506 = vmatprep.subr.bf16.mxu0 0
    %2507 = vmatpush2.bf16.msra.mxu0 0
    %2508 = vmatprep.mubr.bf16.mxu0 0
    %2509 = vmatmul.mubr.bf16.gmra.mxu0 %v2475
    %v2510 = vpop.f32.mrf.mxu0
    %v2511 = vadd.f32 0.0, %v2510
    %v2512 = vpop.f32.mrf.mxu0
    %v2513 = vadd.f32 0.0, %v2512
    %v2514 = vpop.f32.mrf.mxu0
    %v2515 = vpop.f32.mrf.mxu0
    %2516 = vdwg.mxu0
    %2517 = vmatprep.subr.bf16.mxu0 %v2110
    %2518 = vmatpush1.bf16.msra.mxu0 %v2109
    %2519 = vmatprep.subr.bf16.mxu0 %v2106
    %2520 = vmatpush1.bf16.msra.mxu0 %v2105
    %2521 = vmatprep.subr.bf16.mxu0 %v2102
    %2522 = vmatpush1.bf16.msra.mxu0 %v2101
    %2523 = vmatprep.subr.bf16.mxu0 %v2098
    %2524 = vmatpush1.bf16.msra.mxu0 %v2097
    %2525 = vmatprep.subr.bf16.mxu0 %v2094
    %2526 = vmatpush1.bf16.msra.mxu0 %v2093
    %2527 = vmatprep.subr.bf16.mxu0 %v2090
    %2528 = vmatpush1.bf16.msra.mxu0 %v2089
    %2529 = vmatprep.subr.bf16.mxu0 %v2086
    %2530 = vmatpush1.bf16.msra.mxu0 %v2085
    %2531 = vmatprep.subr.bf16.mxu0 %v2082
    %2532 = vmatpush1.bf16.msra.mxu0 %v2081
    %2533 = vmatprep.subr.bf16.mxu0 0
    %2534 = vmatpush2.bf16.msra.mxu0 0
    %2535 = vmatprep.subr.bf16.mxu0 0
    %2536 = vmatpush2.bf16.msra.mxu0 0
    %2537 = vmatprep.subr.bf16.mxu0 0
    %2538 = vmatpush2.bf16.msra.mxu0 0
    %2539 = vmatprep.subr.bf16.mxu0 0
    %2540 = vmatpush2.bf16.msra.mxu0 0
    %2541 = vmatprep.subr.bf16.mxu0 0
    %2542 = vmatpush2.bf16.msra.mxu0 0
    %2543 = vmatprep.subr.bf16.mxu0 0
    %2544 = vmatpush2.bf16.msra.mxu0 0
    %2545 = vmatprep.subr.bf16.mxu0 0
    %2546 = vmatpush2.bf16.msra.mxu0 0
    %2547 = vmatprep.subr.bf16.mxu0 0
    %2548 = vmatpush2.bf16.msra.mxu0 0
    %2549 = vmatprep.mubr.bf16.mxu0 0
    %2550 = vmatmul.mubr.bf16.gmra.mxu0 %v2475
    %v2551 = vpop.f32.mrf.mxu0
    %v2552 = vadd.f32 0.0, %v2551
    %v2553 = vpop.f32.mrf.mxu0
    %v2554 = vadd.f32 0.0, %v2553
    %v2555 = vpop.f32.mrf.mxu0
    %v2556 = vpop.f32.mrf.mxu0
    %2557 = vdwg.mxu0
    %v2558 = vadd.f32 %v1886, %v2511
    %v2559 = vadd.f32 %v1888, %v2513
    %v2560 = vadd.f32 %v1959, %v2552
    %v2561 = vadd.f32 %v1961, %v2554
    %v2562 = vxor.u32 %v2558, 2147483648
    %v2563 = vxor.u32 %v2559, 2147483648
    %v2564 = vxor.u32 %v2560, 2147483648
    %v2565 = vmul.f32 %v2562, 1.442695
    %v2566 = vpow.pop %v2565
    %v2567 = vmul.f32 %v2563, 1.442695
    %v2568 = vpow.pop %v2567
    %v2569 = vmul.f32 %v2564, 1.442695
    %v2570 = vpow.pop %v2569
    %v2571 = vadd.f32 %v2566, 1.0
    %v2572 = vadd.f32 %v2568, 1.0
    %v2573 = vadd.f32 %v2570, 1.0
    %v2574 = vrcp.pop %v2571
    %v2575 = vmul.f32 1.0, %v2574
    %v2576 = vrcp.pop %v2572
    %v2577 = vmul.f32 1.0, %v2576
    %v2578 = vrcp.pop %v2573
    %v2579 = vmul.f32 1.0, %v2578
    %v2580 = vtanh.pop %v2561
    %v2581 = vmul.f32 %v2577, %v2472
    %v2582 = vmul.f32 %v2575, %v2580
    %v2583 = vadd.f32 %v2581, %v2582
    %v2584 = vtanh.pop %v2583
    %v2585 = vmul.f32 %v2579, %v2584
    %v2586 = vpack.c.bf16 %v2585, %v2585
    %2587 = vmatprep.subr.bf16.mxu0 %v2108
    %2588 = vmatpush1.bf16.msra.mxu0 %v2107
    %2589 = vmatprep.subr.bf16.mxu0 %v2104
    %2590 = vmatpush1.bf16.msra.mxu0 %v2103
    %2591 = vmatprep.subr.bf16.mxu0 %v2100
    %2592 = vmatpush1.bf16.msra.mxu0 %v2099
    %2593 = vmatprep.subr.bf16.mxu0 %v2096
    %2594 = vmatpush1.bf16.msra.mxu0 %v2095
    %2595 = vmatprep.subr.bf16.mxu0 %v2092
    %2596 = vmatpush1.bf16.msra.mxu0 %v2091
    %2597 = vmatprep.subr.bf16.mxu0 %v2088
    %2598 = vmatpush1.bf16.msra.mxu0 %v2087
    %2599 = vmatprep.subr.bf16.mxu0 %v2084
    %2600 = vmatpush1.bf16.msra.mxu0 %v2083
    %2601 = vmatprep.subr.bf16.mxu0 %v2080
    %2602 = vmatpush1.bf16.msra.mxu0 %v2079
    %2603 = vmatprep.subr.bf16.mxu0 0
    %2604 = vmatpush2.bf16.msra.mxu0 0
    %2605 = vmatprep.subr.bf16.mxu0 0
    %2606 = vmatpush2.bf16.msra.mxu0 0
    %2607 = vmatprep.subr.bf16.mxu0 0
    %2608 = vmatpush2.bf16.msra.mxu0 0
    %2609 = vmatprep.subr.bf16.mxu0 0
    %2610 = vmatpush2.bf16.msra.mxu0 0
    %2611 = vmatprep.subr.bf16.mxu0 0
    %2612 = vmatpush2.bf16.msra.mxu0 0
    %2613 = vmatprep.subr.bf16.mxu0 0
    %2614 = vmatpush2.bf16.msra.mxu0 0
    %2615 = vmatprep.subr.bf16.mxu0 0
    %2616 = vmatpush2.bf16.msra.mxu0 0
    %2617 = vmatprep.subr.bf16.mxu0 0
    %2618 = vmatpush2.bf16.msra.mxu0 0
    %2619 = vmatprep.mubr.bf16.mxu0 0
    %2620 = vmatmul.mubr.bf16.gmra.mxu0 %v2586
    %v2621 = vpop.f32.mrf.mxu0
    %v2622 = vadd.f32 0.0, %v2621
    %v2623 = vpop.f32.mrf.mxu0
    %v2624 = vadd.f32 0.0, %v2623
    %v2625 = vpop.f32.mrf.mxu0
    %v2626 = vpop.f32.mrf.mxu0
    %2627 = vdwg.mxu0
    %2628 = vmatprep.subr.bf16.mxu0 %v2110
    %2629 = vmatpush1.bf16.msra.mxu0 %v2109
    %2630 = vmatprep.subr.bf16.mxu0 %v2106
    %2631 = vmatpush1.bf16.msra.mxu0 %v2105
    %2632 = vmatprep.subr.bf16.mxu0 %v2102
    %2633 = vmatpush1.bf16.msra.mxu0 %v2101
    %2634 = vmatprep.subr.bf16.mxu0 %v2098
    %2635 = vmatpush1.bf16.msra.mxu0 %v2097
    %2636 = vmatprep.subr.bf16.mxu0 %v2094
    %2637 = vmatpush1.bf16.msra.mxu0 %v2093
    %2638 = vmatprep.subr.bf16.mxu0 %v2090
    %2639 = vmatpush1.bf16.msra.mxu0 %v2089
    %2640 = vmatprep.subr.bf16.mxu0 %v2086
    %2641 = vmatpush1.bf16.msra.mxu0 %v2085
    %2642 = vmatprep.subr.bf16.mxu0 %v2082
    %2643 = vmatpush1.bf16.msra.mxu0 %v2081
    %2644 = vmatprep.subr.bf16.mxu0 0
    %2645 = vmatpush2.bf16.msra.mxu0 0
    %2646 = vmatprep.subr.bf16.mxu0 0
    %2647 = vmatpush2.bf16.msra.mxu0 0
    %2648 = vmatprep.subr.bf16.mxu0 0
    %2649 = vmatpush2.bf16.msra.mxu0 0
    %2650 = vmatprep.subr.bf16.mxu0 0
    %2651 = vmatpush2.bf16.msra.mxu0 0
    %2652 = vmatprep.subr.bf16.mxu0 0
    %2653 = vmatpush2.bf16.msra.mxu0 0
    %2654 = vmatprep.subr.bf16.mxu0 0
    %2655 = vmatpush2.bf16.msra.mxu0 0
    %2656 = vmatprep.subr.bf16.mxu0 0
    %2657 = vmatpush2.bf16.msra.mxu0 0
    %2658 = vmatprep.subr.bf16.mxu0 0
    %2659 = vmatpush2.bf16.msra.mxu0 0
    %2660 = vmatprep.mubr.bf16.mxu0 0
    %2661 = vmatmul.mubr.bf16.gmra.mxu0 %v2586
    %v2662 = vpop.f32.mrf.mxu0
    %v2663 = vadd.f32 0.0, %v2662
    %v2664 = vpop.f32.mrf.mxu0
    %v2665 = vadd.f32 0.0, %v2664
    %v2666 = vpop.f32.mrf.mxu0
    %v2667 = vpop.f32.mrf.mxu0
    %2668 = vdwg.mxu0
    %v2669 = vadd.f32 %v1892, %v2622
    %v2670 = vadd.f32 %v1894, %v2624
    %v2671 = vadd.f32 %v1965, %v2663
    %v2672 = vadd.f32 %v1967, %v2665
    %v2673 = vxor.u32 %v2669, 2147483648
    %v2674 = vxor.u32 %v2670, 2147483648
    %v2675 = vxor.u32 %v2671, 2147483648
    %v2676 = vmul.f32 %v2673, 1.442695
    %v2677 = vpow.pop %v2676
    %v2678 = vmul.f32 %v2674, 1.442695
    %v2679 = vpow.pop %v2678
    %v2680 = vmul.f32 %v2675, 1.442695
    %v2681 = vpow.pop %v2680
    %v2682 = vadd.f32 %v2677, 1.0
    %v2683 = vadd.f32 %v2679, 1.0
    %v2684 = vadd.f32 %v2681, 1.0
    %v2685 = vrcp.pop %v2682
    %v2686 = vmul.f32 1.0, %v2685
    %v2687 = vrcp.pop %v2683
    %v2688 = vmul.f32 1.0, %v2687
    %v2689 = vrcp.pop %v2684
    %v2690 = vmul.f32 1.0, %v2689
    %v2691 = vtanh.pop %v2672
    %v2692 = vmul.f32 %v2688, %v2583
    %v2693 = vmul.f32 %v2686, %v2691
    %v2694 = vadd.f32 %v2692, %v2693
    %v2695 = vtanh.pop %v2694
    %v2696 = vmul.f32 %v2690, %v2695
    %v2697 = vpack.c.bf16 %v2696, %v2696
    %2698 = vmatprep.subr.bf16.mxu0 %v2108
    %2699 = vmatpush1.bf16.msra.mxu0 %v2107
    %2700 = vmatprep.subr.bf16.mxu0 %v2104
    %2701 = vmatpush1.bf16.msra.mxu0 %v2103
    %2702 = vmatprep.subr.bf16.mxu0 %v2100
    %2703 = vmatpush1.bf16.msra.mxu0 %v2099
    %2704 = vmatprep.subr.bf16.mxu0 %v2096
    %2705 = vmatpush1.bf16.msra.mxu0 %v2095
    %2706 = vmatprep.subr.bf16.mxu0 %v2092
    %2707 = vmatpush1.bf16.msra.mxu0 %v2091
    %2708 = vmatprep.subr.bf16.mxu0 %v2088
    %2709 = vmatpush1.bf16.msra.mxu0 %v2087
    %2710 = vmatprep.subr.bf16.mxu0 %v2084
    %2711 = vmatpush1.bf16.msra.mxu0 %v2083
    %2712 = vmatprep.subr.bf16.mxu0 %v2080
    %2713 = vmatpush1.bf16.msra.mxu0 %v2079
    %2714 = vmatprep.subr.bf16.mxu0 0
    %2715 = vmatpush2.bf16.msra.mxu0 0
    %2716 = vmatprep.subr.bf16.mxu0 0
    %2717 = vmatpush2.bf16.msra.mxu0 0
    %2718 = vmatprep.subr.bf16.mxu0 0
    %2719 = vmatpush2.bf16.msra.mxu0 0
    %2720 = vmatprep.subr.bf16.mxu0 0
    %2721 = vmatpush2.bf16.msra.mxu0 0
    %2722 = vmatprep.subr.bf16.mxu0 0
    %2723 = vmatpush2.bf16.msra.mxu0 0
    %2724 = vmatprep.subr.bf16.mxu0 0
    %2725 = vmatpush2.bf16.msra.mxu0 0
    %2726 = vmatprep.subr.bf16.mxu0 0
    %2727 = vmatpush2.bf16.msra.mxu0 0
    %2728 = vmatprep.subr.bf16.mxu0 0
    %2729 = vmatpush2.bf16.msra.mxu0 0
    %2730 = vmatprep.mubr.bf16.mxu0 0
    %2731 = vmatmul.mubr.bf16.gmra.mxu0 %v2697
    %v2732 = vpop.f32.mrf.mxu0
    %v2733 = vadd.f32 0.0, %v2732
    %v2734 = vpop.f32.mrf.mxu0
    %v2735 = vadd.f32 0.0, %v2734
    %v2736 = vpop.f32.mrf.mxu0
    %v2737 = vpop.f32.mrf.mxu0
    %2738 = vdwg.mxu0
    %2739 = vmatprep.subr.bf16.mxu0 %v2110
    %2740 = vmatpush1.bf16.msra.mxu0 %v2109
    %2741 = vmatprep.subr.bf16.mxu0 %v2106
    %2742 = vmatpush1.bf16.msra.mxu0 %v2105
    %2743 = vmatprep.subr.bf16.mxu0 %v2102
    %2744 = vmatpush1.bf16.msra.mxu0 %v2101
    %2745 = vmatprep.subr.bf16.mxu0 %v2098
    %2746 = vmatpush1.bf16.msra.mxu0 %v2097
    %2747 = vmatprep.subr.bf16.mxu0 %v2094
    %2748 = vmatpush1.bf16.msra.mxu0 %v2093
    %2749 = vmatprep.subr.bf16.mxu0 %v2090
    %2750 = vmatpush1.bf16.msra.mxu0 %v2089
    %2751 = vmatprep.subr.bf16.mxu0 %v2086
    %2752 = vmatpush1.bf16.msra.mxu0 %v2085
    %2753 = vmatprep.subr.bf16.mxu0 %v2082
    %2754 = vmatpush1.bf16.msra.mxu0 %v2081
    %2755 = vmatprep.subr.bf16.mxu0 0
    %2756 = vmatpush2.bf16.msra.mxu0 0
    %2757 = vmatprep.subr.bf16.mxu0 0
    %2758 = vmatpush2.bf16.msra.mxu0 0
    %2759 = vmatprep.subr.bf16.mxu0 0
    %2760 = vmatpush2.bf16.msra.mxu0 0
    %2761 = vmatprep.subr.bf16.mxu0 0
    %2762 = vmatpush2.bf16.msra.mxu0 0
    %2763 = vmatprep.subr.bf16.mxu0 0
    %2764 = vmatpush2.bf16.msra.mxu0 0
    %2765 = vmatprep.subr.bf16.mxu0 0
    %2766 = vmatpush2.bf16.msra.mxu0 0
    %2767 = vmatprep.subr.bf16.mxu0 0
    %2768 = vmatpush2.bf16.msra.mxu0 0
    %2769 = vmatprep.subr.bf16.mxu0 0
    %2770 = vmatpush2.bf16.msra.mxu0 0
    %2771 = vmatprep.mubr.bf16.mxu0 0
    %2772 = vmatmul.mubr.bf16.gmra.mxu0 %v2697
    %v2773 = vpop.f32.mrf.mxu0
    %v2774 = vadd.f32 0.0, %v2773
    %v2775 = vpop.f32.mrf.mxu0
    %v2776 = vadd.f32 0.0, %v2775
    %v2777 = vpop.f32.mrf.mxu0
    %v2778 = vpop.f32.mrf.mxu0
    %2779 = vdwg.mxu0
    %v2780 = vadd.f32 %v1896, %v2733
    %v2781 = vadd.f32 %v1898, %v2735
    %v2782 = vadd.f32 %v1969, %v2774
    %v2783 = vadd.f32 %v1971, %v2776
    %v2784 = vxor.u32 %v2780, 2147483648
    %v2785 = vxor.u32 %v2781, 2147483648
    %v2786 = vxor.u32 %v2782, 2147483648
    %v2787 = vmul.f32 %v2784, 1.442695
    %v2788 = vpow.pop %v2787
    %v2789 = vmul.f32 %v2785, 1.442695
    %v2790 = vpow.pop %v2789
    %v2791 = vmul.f32 %v2786, 1.442695
    %v2792 = vpow.pop %v2791
    %v2793 = vadd.f32 %v2788, 1.0
    %v2794 = vadd.f32 %v2790, 1.0
    %v2795 = vadd.f32 %v2792, 1.0
    %v2796 = vrcp.pop %v2793
    %v2797 = vmul.f32 1.0, %v2796
    %v2798 = vrcp.pop %v2794
    %v2799 = vmul.f32 1.0, %v2798
    %v2800 = vrcp.pop %v2795
    %v2801 = vmul.f32 1.0, %v2800
    %v2802 = vtanh.pop %v2783
    %v2803 = vmul.f32 %v2799, %v2694
    %v2804 = vmul.f32 %v2797, %v2802
    %v2805 = vadd.f32 %v2803, %v2804
    %v2806 = vtanh.pop %v2805
    %v2807 = vmul.f32 %v2801, %v2806
    %v2808 = vpack.c.bf16 %v2807, %v2807
    %2809 = vmatprep.subr.bf16.mxu0 %v2108
    %2810 = vmatpush1.bf16.msra.mxu0 %v2107
    %2811 = vmatprep.subr.bf16.mxu0 %v2104
    %2812 = vmatpush1.bf16.msra.mxu0 %v2103
    %2813 = vmatprep.subr.bf16.mxu0 %v2100
    %2814 = vmatpush1.bf16.msra.mxu0 %v2099
    %2815 = vmatprep.subr.bf16.mxu0 %v2096
    %2816 = vmatpush1.bf16.msra.mxu0 %v2095
    %2817 = vmatprep.subr.bf16.mxu0 %v2092
    %2818 = vmatpush1.bf16.msra.mxu0 %v2091
    %2819 = vmatprep.subr.bf16.mxu0 %v2088
    %2820 = vmatpush1.bf16.msra.mxu0 %v2087
    %2821 = vmatprep.subr.bf16.mxu0 %v2084
    %2822 = vmatpush1.bf16.msra.mxu0 %v2083
    %2823 = vmatprep.subr.bf16.mxu0 %v2080
    %2824 = vmatpush1.bf16.msra.mxu0 %v2079
    %2825 = vmatprep.subr.bf16.mxu0 0
    %2826 = vmatpush2.bf16.msra.mxu0 0
    %2827 = vmatprep.subr.bf16.mxu0 0
    %2828 = vmatpush2.bf16.msra.mxu0 0
    %2829 = vmatprep.subr.bf16.mxu0 0
    %2830 = vmatpush2.bf16.msra.mxu0 0
    %2831 = vmatprep.subr.bf16.mxu0 0
    %2832 = vmatpush2.bf16.msra.mxu0 0
    %2833 = vmatprep.subr.bf16.mxu0 0
    %2834 = vmatpush2.bf16.msra.mxu0 0
    %2835 = vmatprep.subr.bf16.mxu0 0
    %2836 = vmatpush2.bf16.msra.mxu0 0
    %2837 = vmatprep.subr.bf16.mxu0 0
    %2838 = vmatpush2.bf16.msra.mxu0 0
    %2839 = vmatprep.subr.bf16.mxu0 0
    %2840 = vmatpush2.bf16.msra.mxu0 0
    %2841 = vmatprep.mubr.bf16.mxu0 0
    %2842 = vmatmul.mubr.bf16.gmra.mxu0 %v2808
    %v2843 = vpop.f32.mrf.mxu0
    %v2844 = vadd.f32 0.0, %v2843
    %v2845 = vpop.f32.mrf.mxu0
    %v2846 = vadd.f32 0.0, %v2845
    %v2847 = vpop.f32.mrf.mxu0
    %v2848 = vpop.f32.mrf.mxu0
    %2849 = vdwg.mxu0
    %2850 = vmatprep.subr.bf16.mxu0 %v2110
    %2851 = vmatpush1.bf16.msra.mxu0 %v2109
    %2852 = vmatprep.subr.bf16.mxu0 %v2106
    %2853 = vmatpush1.bf16.msra.mxu0 %v2105
    %2854 = vmatprep.subr.bf16.mxu0 %v2102
    %2855 = vmatpush1.bf16.msra.mxu0 %v2101
    %2856 = vmatprep.subr.bf16.mxu0 %v2098
    %2857 = vmatpush1.bf16.msra.mxu0 %v2097
    %2858 = vmatprep.subr.bf16.mxu0 %v2094
    %2859 = vmatpush1.bf16.msra.mxu0 %v2093
    %2860 = vmatprep.subr.bf16.mxu0 %v2090
    %2861 = vmatpush1.bf16.msra.mxu0 %v2089
    %2862 = vmatprep.subr.bf16.mxu0 %v2086
    %2863 = vmatpush1.bf16.msra.mxu0 %v2085
    %2864 = vmatprep.subr.bf16.mxu0 %v2082
    %2865 = vmatpush1.bf16.msra.mxu0 %v2081
    %2866 = vmatprep.subr.bf16.mxu0 0
    %2867 = vmatpush2.bf16.msra.mxu0 0
    %2868 = vmatprep.subr.bf16.mxu0 0
    %2869 = vmatpush2.bf16.msra.mxu0 0
    %2870 = vmatprep.subr.bf16.mxu0 0
    %2871 = vmatpush2.bf16.msra.mxu0 0
    %2872 = vmatprep.subr.bf16.mxu0 0
    %2873 = vmatpush2.bf16.msra.mxu0 0
    %2874 = vmatprep.subr.bf16.mxu0 0
    %2875 = vmatpush2.bf16.msra.mxu0 0
    %2876 = vmatprep.subr.bf16.mxu0 0
    %2877 = vmatpush2.bf16.msra.mxu0 0
    %2878 = vmatprep.subr.bf16.mxu0 0
    %2879 = vmatpush2.bf16.msra.mxu0 0
    %2880 = vmatprep.subr.bf16.mxu0 0
    %2881 = vmatpush2.bf16.msra.mxu0 0
    %2882 = vmatprep.mubr.bf16.mxu0 0
    %2883 = vmatmul.mubr.bf16.gmra.mxu0 %v2808
    %v2884 = vpop.f32.mrf.mxu0
    %v2885 = vadd.f32 0.0, %v2884
    %v2886 = vpop.f32.mrf.mxu0
    %v2887 = vadd.f32 0.0, %v2886
    %v2888 = vpop.f32.mrf.mxu0
    %v2889 = vpop.f32.mrf.mxu0
    %2890 = vdwg.mxu0
    %v2891 = vadd.f32 %v1902, %v2844
    %v2892 = vadd.f32 %v1904, %v2846
    %v2893 = vadd.f32 %v1975, %v2885
    %v2894 = vadd.f32 %v1977, %v2887
    %v2895 = vxor.u32 %v2891, 2147483648
    %v2896 = vxor.u32 %v2892, 2147483648
    %v2897 = vxor.u32 %v2893, 2147483648
    %v2898 = vmul.f32 %v2895, 1.442695
    %v2899 = vpow.pop %v2898
    %v2900 = vmul.f32 %v2896, 1.442695
    %v2901 = vpow.pop %v2900
    %v2902 = vmul.f32 %v2897, 1.442695
    %v2903 = vpow.pop %v2902
    %v2904 = vadd.f32 %v2899, 1.0
    %v2905 = vadd.f32 %v2901, 1.0
    %v2906 = vadd.f32 %v2903, 1.0
    %v2907 = vrcp.pop %v2904
    %v2908 = vmul.f32 1.0, %v2907
    %v2909 = vrcp.pop %v2905
    %v2910 = vmul.f32 1.0, %v2909
    %v2911 = vrcp.pop %v2906
    %v2912 = vmul.f32 1.0, %v2911
    %v2913 = vtanh.pop %v2894
    %v2914 = vmul.f32 %v2910, %v2805
    %v2915 = vmul.f32 %v2908, %v2913
    %v2916 = vadd.f32 %v2914, %v2915
    %v2917 = vtanh.pop %v2916
    %v2918 = vmul.f32 %v2912, %v2917
    %v2919 = vpack.c.bf16 %v2918, %v2918
    %2920 = vmatprep.subr.bf16.mxu0 %v2108
    %2921 = vmatpush1.bf16.msra.mxu0 %v2107
    %2922 = vmatprep.subr.bf16.mxu0 %v2104
    %2923 = vmatpush1.bf16.msra.mxu0 %v2103
    %2924 = vmatprep.subr.bf16.mxu0 %v2100
    %2925 = vmatpush1.bf16.msra.mxu0 %v2099
    %2926 = vmatprep.subr.bf16.mxu0 %v2096
    %2927 = vmatpush1.bf16.msra.mxu0 %v2095
    %2928 = vmatprep.subr.bf16.mxu0 %v2092
    %2929 = vmatpush1.bf16.msra.mxu0 %v2091
    %2930 = vmatprep.subr.bf16.mxu0 %v2088
    %2931 = vmatpush1.bf16.msra.mxu0 %v2087
    %2932 = vmatprep.subr.bf16.mxu0 %v2084
    %2933 = vmatpush1.bf16.msra.mxu0 %v2083
    %2934 = vmatprep.subr.bf16.mxu0 %v2080
    %2935 = vmatpush1.bf16.msra.mxu0 %v2079
    %2936 = vmatprep.subr.bf16.mxu0 0
    %2937 = vmatpush2.bf16.msra.mxu0 0
    %2938 = vmatprep.subr.bf16.mxu0 0
    %2939 = vmatpush2.bf16.msra.mxu0 0
    %2940 = vmatprep.subr.bf16.mxu0 0
    %2941 = vmatpush2.bf16.msra.mxu0 0
    %2942 = vmatprep.subr.bf16.mxu0 0
    %2943 = vmatpush2.bf16.msra.mxu0 0
    %2944 = vmatprep.subr.bf16.mxu0 0
    %2945 = vmatpush2.bf16.msra.mxu0 0
    %2946 = vmatprep.subr.bf16.mxu0 0
    %2947 = vmatpush2.bf16.msra.mxu0 0
    %2948 = vmatprep.subr.bf16.mxu0 0
    %2949 = vmatpush2.bf16.msra.mxu0 0
    %2950 = vmatprep.subr.bf16.mxu0 0
    %2951 = vmatpush2.bf16.msra.mxu0 0
    %2952 = vmatprep.mubr.bf16.mxu0 0
    %2953 = vmatmul.mubr.bf16.gmra.mxu0 %v2919
    %v2954 = vpop.f32.mrf.mxu0
    %v2955 = vadd.f32 0.0, %v2954
    %v2956 = vpop.f32.mrf.mxu0
    %v2957 = vadd.f32 0.0, %v2956
    %v2958 = vpop.f32.mrf.mxu0
    %v2959 = vpop.f32.mrf.mxu0
    %2960 = vdwg.mxu0
    %2961 = vmatprep.subr.bf16.mxu0 %v2110
    %2962 = vmatpush1.bf16.msra.mxu0 %v2109
    %2963 = vmatprep.subr.bf16.mxu0 %v2106
    %2964 = vmatpush1.bf16.msra.mxu0 %v2105
    %2965 = vmatprep.subr.bf16.mxu0 %v2102
    %2966 = vmatpush1.bf16.msra.mxu0 %v2101
    %2967 = vmatprep.subr.bf16.mxu0 %v2098
    %2968 = vmatpush1.bf16.msra.mxu0 %v2097
    %2969 = vmatprep.subr.bf16.mxu0 %v2094
    %2970 = vmatpush1.bf16.msra.mxu0 %v2093
    %2971 = vmatprep.subr.bf16.mxu0 %v2090
    %2972 = vmatpush1.bf16.msra.mxu0 %v2089
    %2973 = vmatprep.subr.bf16.mxu0 %v2086
    %2974 = vmatpush1.bf16.msra.mxu0 %v2085
    %2975 = vmatprep.subr.bf16.mxu0 %v2082
    %2976 = vmatpush1.bf16.msra.mxu0 %v2081
    %2977 = vmatprep.subr.bf16.mxu0 0
    %2978 = vmatpush2.bf16.msra.mxu0 0
    %2979 = vmatprep.subr.bf16.mxu0 0
    %2980 = vmatpush2.bf16.msra.mxu0 0
    %2981 = vmatprep.subr.bf16.mxu0 0
    %2982 = vmatpush2.bf16.msra.mxu0 0
    %2983 = vmatprep.subr.bf16.mxu0 0
    %2984 = vmatpush2.bf16.msra.mxu0 0
    %2985 = vmatprep.subr.bf16.mxu0 0
    %2986 = vmatpush2.bf16.msra.mxu0 0
    %2987 = vmatprep.subr.bf16.mxu0 0
    %2988 = vmatpush2.bf16.msra.mxu0 0
    %2989 = vmatprep.subr.bf16.mxu0 0
    %2990 = vmatpush2.bf16.msra.mxu0 0
    %2991 = vmatprep.subr.bf16.mxu0 0
    %2992 = vmatpush2.bf16.msra.mxu0 0
    %2993 = vmatprep.mubr.bf16.mxu0 0
    %2994 = vmatmul.mubr.bf16.gmra.mxu0 %v2919
    %v2995 = vpop.f32.mrf.mxu0
    %v2996 = vadd.f32 0.0, %v2995
    %v2997 = vpop.f32.mrf.mxu0
    %v2998 = vadd.f32 0.0, %v2997
    %v2999 = vpop.f32.mrf.mxu0
    %v3000 = vpop.f32.mrf.mxu0
    %3001 = vdwg.mxu0
    %v3002 = vadd.f32 %v1906, %v2955
    %v3003 = vadd.f32 %v1908, %v2957
    %v3004 = vadd.f32 %v1979, %v2996
    %v3005 = vadd.f32 %v1981, %v2998
    %v3006 = vxor.u32 %v3002, 2147483648
    %v3007 = vxor.u32 %v3003, 2147483648
    %v3008 = vxor.u32 %v3004, 2147483648
    %v3009 = vmul.f32 %v3006, 1.442695
    %v3010 = vpow.pop %v3009
    %v3011 = vmul.f32 %v3007, 1.442695
    %v3012 = vpow.pop %v3011
    %v3013 = vmul.f32 %v3008, 1.442695
    %v3014 = vpow.pop %v3013
    %v3015 = vadd.f32 %v3010, 1.0
    %v3016 = vadd.f32 %v3012, 1.0
    %v3017 = vadd.f32 %v3014, 1.0
    %v3018 = vrcp.pop %v3015
    %v3019 = vmul.f32 1.0, %v3018
    %v3020 = vrcp.pop %v3016
    %v3021 = vmul.f32 1.0, %v3020
    %v3022 = vrcp.pop %v3017
    %v3023 = vmul.f32 1.0, %v3022
    %v3024 = vtanh.pop %v3005
    %v3025 = vmul.f32 %v3021, %v2916
    %v3026 = vmul.f32 %v3019, %v3024
    %v3027 = vadd.f32 %v3025, %v3026
    %v3028 = vtanh.pop %v3027
    %v3029 = vmul.f32 %v3023, %v3028
    %v3030 = vpack.c.bf16 %v3029, %v3029
    %v3031 = vld [vmem:[#allocation11] sm:$0xf]
    %v3032 = vld [vmem:[#allocation11 + $0x4] sm:$0xf]
    %v3033 = vld [vmem:[#allocation11 + $0x8] sm:$0xf]
    %v3034 = vld [vmem:[#allocation11 + $0xc] sm:$0xf]
    %v3035 = vld [vmem:[#allocation11 + $0x10] sm:$0xf]
    %v3036 = vld [vmem:[#allocation11 + $0x14] sm:$0xf]
    %v3037 = vld [vmem:[#allocation11 + $0x18] sm:$0xf]
    %v3038 = vld [vmem:[#allocation11 + $0x1c] sm:$0xf]
    %v3039 = vld [vmem:[#allocation11 + $0x20] sm:$0xf]
    %v3040 = vld [vmem:[#allocation11 + $0x24] sm:$0xf]
    %v3041 = vld [vmem:[#allocation11 + $0x28] sm:$0xf]
    %v3042 = vld [vmem:[#allocation11 + $0x2c] sm:$0xf]
    %v3043 = vld [vmem:[#allocation11 + $0x30] sm:$0xf]
    %v3044 = vld [vmem:[#allocation11 + $0x34] sm:$0xf]
    %v3045 = vld [vmem:[#allocation11 + $0x38] sm:$0xf]
    %v3046 = vld [vmem:[#allocation11 + $0x3c] sm:$0xf]
    %v3047 = vld [vmem:[%s8] sm:$0x1]
    %v3049 = vlaneseq
    %v3050 = vshrl.u32 %v3049, 7
    %v3051 = vsub.s32 0, %v3050
    %v3052 = vrot.slane %v3047, %v3051
    %v3070 = vunpack.c.l.b16 %v3031
    %v3071 = vunpack.c.l.b16 %v3032
    %v3072 = vunpack.c.l.b16 %v3033
    %v3073 = vunpack.c.l.b16 %v3034
    %v3074 = vunpack.c.l.b16 %v3035
    %v3075 = vunpack.c.l.b16 %v3036
    %v3076 = vunpack.c.l.b16 %v3037
    %v3077 = vunpack.c.l.b16 %v3038
    %v3078 = vunpack.c.l.b16 %v3039
    %v3079 = vunpack.c.l.b16 %v3040
    %v3080 = vunpack.c.l.b16 %v3041
    %v3081 = vunpack.c.l.b16 %v3042
    %v3082 = vunpack.c.l.b16 %v3043
    %v3083 = vunpack.c.l.b16 %v3044
    %v3084 = vunpack.c.l.b16 %v3045
    %v3085 = vunpack.c.l.b16 %v3046
    %v3086 = vpack.c.b16 %v3071, %v3070
    %v3087 = vpack.c.b16 %v3073, %v3072
    %v3088 = vpack.c.b16 %v3075, %v3074
    %v3089 = vpack.c.b16 %v3077, %v3076
    %v3090 = vpack.c.b16 %v3079, %v3078
    %v3091 = vpack.c.b16 %v3081, %v3080
    %v3092 = vpack.c.b16 %v3083, %v3082
    %v3093 = vpack.c.b16 %v3085, %v3084
    %3102 = vmatprep.subr.bf16.mxu0 0
    %3103 = vmatpush1.bf16.msra.mxu0 %v3093
    %3104 = vmatprep.subr.bf16.mxu0 0
    %3105 = vmatpush1.bf16.msra.mxu0 %v3092
    %3106 = vmatprep.subr.bf16.mxu0 0
    %3107 = vmatpush1.bf16.msra.mxu0 %v3091
    %3108 = vmatprep.subr.bf16.mxu0 0
    %3109 = vmatpush1.bf16.msra.mxu0 %v3090
    %3110 = vmatprep.subr.bf16.mxu0 0
    %3111 = vmatpush1.bf16.msra.mxu0 %v3089
    %3112 = vmatprep.subr.bf16.mxu0 0
    %3113 = vmatpush1.bf16.msra.mxu0 %v3088
    %3114 = vmatprep.subr.bf16.mxu0 0
    %3115 = vmatpush1.bf16.msra.mxu0 %v3087
    %3116 = vmatprep.subr.bf16.mxu0 0
    %3117 = vmatpush1.bf16.msra.mxu0 %v3086
    %3118 = vmatprep.subr.bf16.mxu0 0
    %3119 = vmatpush2.bf16.msra.mxu0 0
    %3120 = vmatprep.subr.bf16.mxu0 0
    %3121 = vmatpush2.bf16.msra.mxu0 0
    %3122 = vmatprep.subr.bf16.mxu0 0
    %3123 = vmatpush2.bf16.msra.mxu0 0
    %3124 = vmatprep.subr.bf16.mxu0 0
    %3125 = vmatpush2.bf16.msra.mxu0 0
    %3126 = vmatprep.subr.bf16.mxu0 0
    %3127 = vmatpush2.bf16.msra.mxu0 0
    %3128 = vmatprep.subr.bf16.mxu0 0
    %3129 = vmatpush2.bf16.msra.mxu0 0
    %3130 = vmatprep.subr.bf16.mxu0 0
    %3131 = vmatpush2.bf16.msra.mxu0 0
    %3132 = vmatprep.subr.bf16.mxu0 0
    %3133 = vmatpush2.bf16.msra.mxu0 0
    %3134 = vmatprep.mubr.bf16.mxu0 0
    %3135 = vmatmul.mubr.bf16.gmra.mxu0 %v3030
    %v3136 = vpop.f32.mrf.mxu0
    %v3137 = vadd.f32 %v3052, %v3136
    %v3138 = vpop.f32.mrf.mxu0
    %v3139 = vpop.f32.mrf.mxu0
    %v3140 = vpop.f32.mrf.mxu0
    %3141 = vdwg.mxu0
    %3142 = vst [vmem:[#allocation13] sm:$0xff] %v3137
    // Predicated region
    $region62: #{tpu_custom_call.1} parent=1 // pred_check
      _
    $region63: #{tpu_custom_call.1} parent=1 // pred_check_branch
      %3144 = sbr.rel (0) target = $region65
    $region64: #{tpu_custom_call.1} parent=1 // pred_region
      %s3146 = ssub.s32 128, 128
      %3147 = vsyncadd [#allocation4], %s3146
      %s3149 = sshll.u32 [#allocation13], 4
      %s3150 = int_to_ptr.vmem [resolvable:$true] %s3149
      %3152 = dma.vmem_to_hbm [thread:$0]  %s3150, 128, %s9, [#allocation4]
    $region65: #{tpu_custom_call.1} parent=1 // pred_fallthru
      _
    // Predicated region
    $region66: #{tpu_custom_call.1} parent=1 // pred_check
      _
    $region67: #{tpu_custom_call.1} parent=1 // pred_check_branch
      %3154 = sbr.rel (0) target = $region69
    $region68: #{tpu_custom_call.1} parent=1 // pred_region
      %3155 = dma.done [#allocation4], 128
    $region69: #{tpu_custom_call.1} parent=1 // pred_fallthru
      _
    %3156 = vsyncpa [#allocation3], 1
    %3157 = vsyncpa [#allocation6], 1
    %3158 = vsyncpa [#allocation9], 1
    %3159 = vsyncpa [#allocation12], 1
    %3160 = vsyncpa [#allocation4], 1

</llo_original>
